<compile_context>
chip_gen: v7x
topology: tpu7x:2x2x1
jax: 0.10.0
libtpu: 0.0.40
codegen_flags: <defaults>
</compile_context>

<pallas_src>
import functools

import jax
import jax.numpy as jnp
import numpy as np
from jax.experimental import pallas as pl
from jax.experimental.pallas import tpu as pltpu

# Scaled-down EncoderBlock: num_hiddens 512 -> 32, heads 8 -> 4, ffn_hidden 512 -> 32
NUM_HEADS = 4
LN_EPS = 1e-5          # PyTorch nn.LayerNorm default
TILE_ROWS = 128        # query rows per grid step


def encoder_block_kernel(x1_ref, wqk_ref, vwo_ref, wffn_ref, vec_ref, o_ref):
    x1 = x1_ref[...]                          # (T, C) f32
    c = x1.shape[1]
    seg = wqk_ref.shape[1] // NUM_HEADS       # = H * N2, one query head's key width

    # ---- attention: scores for ALL query heads in one bf16 MXU pass ----
    # (1/sqrt(D) is folded into wqk by the wrapper)
    s_all = jnp.dot(x1.astype(jnp.bfloat16), wqk_ref[...],
                    preferred_element_type=jnp.float32)     # (T, H*H*N2) f32

    probs = []
    for h in range(NUM_HEADS):                # static loop; 128-aligned lane segments
        s_h = s_all[:, h * seg:(h + 1) * seg]                # (T, H*N2)
        m = jnp.max(s_h, axis=-1, keepdims=True)
        e = jnp.exp(s_h - m)                                 # EUP
        r = pl.reciprocal(jnp.sum(e, axis=-1, keepdims=True), approx=True)  # EUP
        probs.append((e * r).astype(jnp.bfloat16))
    p_all = jnp.concatenate(probs, axis=1)                   # (T, H*H*N2), aligned concat

    # attention output and W_o projection in a single matmul (Wo folded into vwo)
    attn = jnp.dot(p_all, vwo_ref[...], preferred_element_type=jnp.float32)  # (T, C)

    def layer_norm(x, g, b):                  # one-pass variance: E[x^2] - mu^2
        mu = jnp.mean(x, axis=-1, keepdims=True)
        var = jnp.mean(x * x, axis=-1, keepdims=True) - mu * mu
        return (x - mu) * jax.lax.rsqrt(var + LN_EPS) * g + b

    vecs = vec_ref[...]                       # (8, C) f32
    ln1_g, ln1_b = vecs[0:1, :], vecs[1:2, :]
    b1, b2 = vecs[2:3, :], vecs[3:4, :]
    ln2_g, ln2_b = vecs[4:5, :], vecs[5:6, :]

    # AddNorm 1
    y = layer_norm(attn + x1, ln1_g, ln1_b)

    # Position-wise FFN (bias=True), weights packed row-wise: [W1 ; W2]
    wffn = wffn_ref[...]                      # (C+F, F==C) bf16
    w1 = wffn[0:c, :]
    w2 = wffn[c:, :]
    h1 = jnp.dot(y.astype(jnp.bfloat16), w1, preferred_element_type=jnp.float32) + b1
    h1 = jnp.maximum(h1, 0.0)
    f = jnp.dot(h1.astype(jnp.bfloat16), w2, preferred_element_type=jnp.float32) + b2

    # AddNorm 2
    o_ref[...] = layer_norm(y + f, ln2_g, ln2_b).astype(o_ref.dtype)


def _attention_slabs(x2, params, num_heads):
    """Fold transpose_qkv / transpose_output and the W_q / W_o projections into
    two grid-invariant lane-dense matrices (computed once per call)."""
    n2, c = x2.shape
    d = c // num_heads
    k = x2 @ params["wk"]                                    # (N2, C)
    v = x2 @ params["wv"]                                    # (N2, C)
    kh = jnp.transpose(k.reshape(n2, num_heads, d), (1, 0, 2)).reshape(num_heads * n2, d)
    vh = jnp.transpose(v.reshape(n2, num_heads, d), (1, 0, 2)).reshape(num_heads * n2, d)
    wq_h = params["wq"].reshape(c, num_heads, d)             # (C, H, D)
    wo_h = params["wo"].reshape(num_heads, d, c)             # (H, D, C)
    wqk = jnp.einsum("chd,md->chm", wq_h, kh).reshape(c, num_heads * num_heads * n2)
    wqk = wqk * jnp.float32(1.0 / np.sqrt(d))                # fold softmax scale
    vwo = jnp.einsum("md,hdc->hmc", vh, wo_h).reshape(num_heads * num_heads * n2, c)
    return wqk.astype(jnp.bfloat16), vwo.astype(jnp.bfloat16)


@jax.jit
def encoder_block(x1, x2, params):
    n1, c = x1.shape
    n2 = x2.shape[0]
    assert c % NUM_HEADS == 0
    # Row-packing W1/W2 needs equal widths (ffn_hidden == num_hiddens, true for
    # the module defaults and this scaled-down config).
    assert params["w1"].shape[1] == params["w2"].shape[1]

    wqk, vwo = _attention_slabs(x2, params, NUM_HEADS)
    wffn = jnp.concatenate([params["w1"], params["w2"]], axis=0).astype(jnp.bfloat16)
    vecs = jnp.concatenate(
        [params["ln1_g"], params["ln1_b"], params["b1"], params["b2"],
         params["ln2_g"], params["ln2_b"], jnp.zeros((2, c), jnp.float32)],
        axis=0)                                              # (8, C) f32

    pad = (-n1) % TILE_ROWS
    x1p = jnp.pad(x1, ((0, pad), (0, 0))) if pad else x1
    n1p = n1 + pad
    hh_n2 = NUM_HEADS * NUM_HEADS * n2

    out = pl.pallas_call(
        encoder_block_kernel,
        out_shape=jax.ShapeDtypeStruct((n1p, c), jnp.float32),
        grid=(n1p // TILE_ROWS,),
        in_specs=[
            pl.BlockSpec((TILE_ROWS, c), lambda i: (i, 0)),  # x1 tile (pipelined)
            pl.BlockSpec((c, hh_n2), lambda i: (0, 0)),      # wqk  (resident, fetched once)
            pl.BlockSpec((hh_n2, c), lambda i: (0, 0)),      # vwo  (resident)
            pl.BlockSpec(wffn.shape, lambda i: (0, 0)),      # packed FFN weights
            pl.BlockSpec(vecs.shape, lambda i: (0, 0)),      # ln gains/biases + FFN biases
        ],
        out_specs=pl.BlockSpec((TILE_ROWS, c), lambda i: (i, 0)),
        compiler_params=pltpu.CompilerParams(
            dimension_semantics=("parallel",),               # megacore split on v7x
            vmem_limit_bytes=32 << 20),
    )(x1p, wqk, vwo, wffn, vecs)
    return out[:n1]


def encoder_block_reference(x1, x2, p):
    """Pure-JAX (f32) reference mirroring the PyTorch EncoderBlock."""
    h = NUM_HEADS

    def split_heads(x):
        n, c = x.shape
        d = c // h
        return jnp.transpose(x.reshape(n, h, d), (1, 0, 2)).reshape(h * n, d)

    q = split_heads(x1 @ p["wq"])
    k = split_heads(x2 @ p["wk"])
    v = split_heads(x2 @ p["wv"])
    s = (q @ k.T) / np.sqrt(q.shape[-1]).astype(np.float32)
    a = jax.nn.softmax(s, axis=1)            # cross-head softmax, as in the module
    o = a @ v
    d = o.shape[-1]
    n = o.shape[0] // h
    oc = jnp.transpose(o.reshape(h, n, d), (1, 0, 2)).reshape(n, h * d)
    attn = oc @ p["wo"]

    def ln(x, g, b):
        mu = x.mean(-1, keepdims=True)
        var = ((x - mu) ** 2).mean(-1, keepdims=True)
        return (x - mu) / jnp.sqrt(var + LN_EPS) * g + b

    y = ln(attn + x1, p["ln1_g"], p["ln1_b"])
    f = jnp.maximum(y @ p["w1"] + p["b1"], 0.0) @ p["w2"] + p["b2"]
    return ln(y + f, p["ln2_g"], p["ln2_b"])


if __name__ == "__main__":
    # seq_q=512 (fills the grid / amortizes launch), seq_kv=64,
    # num_hiddens=32, ffn_hidden=32, heads=4
    N1, N2, C, F = 512, 64, 32, 32

    key = jax.random.PRNGKey(0)
    ks = jax.random.split(key, 10)
    scale = 0.05
    params = {
        "wq": scale * jax.random.normal(ks[0], (C, C), jnp.float32),
        "wk": scale * jax.random.normal(ks[1], (C, C), jnp.float32),
        "wv": scale * jax.random.normal(ks[2], (C, C), jnp.float32),
        "wo": scale * jax.random.normal(ks[3], (C, C), jnp.float32),
        "ln1_g": jnp.ones((1, C), jnp.float32),
        "ln1_b": jnp.zeros((1, C), jnp.float32),
        "w1": scale * jax.random.normal(ks[4], (C, F), jnp.float32),
        "b1": scale * jax.random.normal(ks[5], (1, F), jnp.float32),
        "w2": scale * jax.random.normal(ks[6], (F, C), jnp.float32),
        "b2": scale * jax.random.normal(ks[7], (1, C), jnp.float32),
        "ln2_g": jnp.ones((1, C), jnp.float32),
        "ln2_b": jnp.zeros((1, C), jnp.float32),
    }
    x1 = jax.random.normal(ks[8], (N1, C), jnp.float32)
    x2 = jax.random.normal(ks[9], (N2, C), jnp.float32)

    out = jax.block_until_ready(encoder_block(x1, x2, params))
    ref = jax.block_until_ready(encoder_block_reference(x1, x2, params))

    # bf16 matmul operands (f32 accumulation) vs an all-f32 reference; the
    # original module is fp16, so 1e-2 is well within its own precision.
    np.testing.assert_allclose(np.asarray(out), np.asarray(ref), rtol=1e-2, atol=1e-2)
    print("KERNEL_OK")
</pallas_src>

<mosaic_0001>
module attributes {stable_mosaic.version = 11 : i64} {
  func.func @encoder_block_kernel(%arg0: i32, %arg1: memref<128x32xf32, #tpu.memory_space<vmem>>, %arg2: memref<32x1024xbf16, #tpu.memory_space<vmem>>, %arg3: memref<1024x32xbf16, #tpu.memory_space<vmem>>, %arg4: memref<64x32xbf16, #tpu.memory_space<vmem>>, %arg5: memref<8x32xf32, #tpu.memory_space<vmem>>, %arg6: memref<128x32xf32, #tpu.memory_space<vmem>>) attributes {dimension_semantics = [#tpu.dimension_semantics<parallel>], iteration_bounds = array<i64: 4>, scalar_prefetch = 0 : i64, scratch_operands = 0 : i64, tpu.core_type = #tpu.core_type<tc>, window_params = [{transform_indices = @transform_0, window_bounds = array<i64: 128, 32>}, {pipeline_mode = #tpu.pipeline_mode<synchronous>, transform_indices = @transform_1, window_bounds = array<i64: 32, 1024>}, {pipeline_mode = #tpu.pipeline_mode<synchronous>, transform_indices = @transform_2, window_bounds = array<i64: 1024, 32>}, {pipeline_mode = #tpu.pipeline_mode<synchronous>, transform_indices = @transform_3, window_bounds = array<i64: 64, 32>}, {pipeline_mode = #tpu.pipeline_mode<synchronous>, transform_indices = @transform_4, window_bounds = array<i64: 8, 32>}, {transform_indices = @transform_5, window_bounds = array<i64: 128, 32>}]} {
    %c0 = arith.constant 0 : index
    %c0_0 = arith.constant 0 : index
    %0 = vector.load %arg1[%c0, %c0_0] : memref<128x32xf32, #tpu.memory_space<vmem>>, vector<128x32xf32>
    %1 = arith.truncf %0 : vector<128x32xf32> to vector<128x32xbf16>
    %c0_1 = arith.constant 0 : index
    %c0_2 = arith.constant 0 : index
    %2 = vector.load %arg2[%c0_1, %c0_2] : memref<32x1024xbf16, #tpu.memory_space<vmem>>, vector<32x1024xbf16>
    %cst = arith.constant dense<0.000000e+00> : vector<128x1024xf32>
    %3 = tpu.matmul %1, %2, %cst {dimension_numbers = #tpu.dot_dimension_numbers<[1], [0], [0], [1], [0, 0, 1, 1], [], []>} : vector<128x32xbf16>, vector<32x1024xbf16>, vector<128x1024xf32> -> vector<128x1024xf32>
    %4 = vector.extract_strided_slice %3 {offsets = [0, 0], sizes = [128, 256], strides = [1, 1]} : vector<128x1024xf32> to vector<128x256xf32>
    %cst_3 = arith.constant dense<0xFF800000> : vector<128xf32>
    %5 = vector.multi_reduction <maximumf>, %4, %cst_3 [1] : vector<128x256xf32> to vector<128xf32>
    %6 = vector.shape_cast %5 : vector<128xf32> to vector<128x1xf32>
    %7 = vector.broadcast %6 : vector<128x1xf32> to vector<128x256xf32>
    %8 = arith.subf %4, %7 : vector<128x256xf32>
    %9 = math.exp %8 : vector<128x256xf32>
    %cst_4 = arith.constant dense<0.000000e+00> : vector<128xf32>
    %10 = vector.multi_reduction <add>, %9, %cst_4 [1] : vector<128x256xf32> to vector<128xf32>
    %11 = vector.shape_cast %10 : vector<128xf32> to vector<128x1xf32>
    %12 = tpu.reciprocal %11 {approx = true} : vector<128x1xf32> -> vector<128x1xf32>
    %13 = vector.broadcast %12 : vector<128x1xf32> to vector<128x256xf32>
    %14 = arith.mulf %9, %13 : vector<128x256xf32>
    %15 = arith.truncf %14 : vector<128x256xf32> to vector<128x256xbf16>
    %16 = vector.extract_strided_slice %3 {offsets = [0, 256], sizes = [128, 256], strides = [1, 1]} : vector<128x1024xf32> to vector<128x256xf32>
    %cst_5 = arith.constant dense<0xFF800000> : vector<128xf32>
    %17 = vector.multi_reduction <maximumf>, %16, %cst_5 [1] : vector<128x256xf32> to vector<128xf32>
    %18 = vector.shape_cast %17 : vector<128xf32> to vector<128x1xf32>
    %19 = vector.broadcast %18 : vector<128x1xf32> to vector<128x256xf32>
    %20 = arith.subf %16, %19 : vector<128x256xf32>
    %21 = math.exp %20 : vector<128x256xf32>
    %cst_6 = arith.constant dense<0.000000e+00> : vector<128xf32>
    %22 = vector.multi_reduction <add>, %21, %cst_6 [1] : vector<128x256xf32> to vector<128xf32>
    %23 = vector.shape_cast %22 : vector<128xf32> to vector<128x1xf32>
    %24 = tpu.reciprocal %23 {approx = true} : vector<128x1xf32> -> vector<128x1xf32>
    %25 = vector.broadcast %24 : vector<128x1xf32> to vector<128x256xf32>
    %26 = arith.mulf %21, %25 : vector<128x256xf32>
    %27 = arith.truncf %26 : vector<128x256xf32> to vector<128x256xbf16>
    %28 = vector.extract_strided_slice %3 {offsets = [0, 512], sizes = [128, 256], strides = [1, 1]} : vector<128x1024xf32> to vector<128x256xf32>
    %cst_7 = arith.constant dense<0xFF800000> : vector<128xf32>
    %29 = vector.multi_reduction <maximumf>, %28, %cst_7 [1] : vector<128x256xf32> to vector<128xf32>
    %30 = vector.shape_cast %29 : vector<128xf32> to vector<128x1xf32>
    %31 = vector.broadcast %30 : vector<128x1xf32> to vector<128x256xf32>
    %32 = arith.subf %28, %31 : vector<128x256xf32>
    %33 = math.exp %32 : vector<128x256xf32>
    %cst_8 = arith.constant dense<0.000000e+00> : vector<128xf32>
    %34 = vector.multi_reduction <add>, %33, %cst_8 [1] : vector<128x256xf32> to vector<128xf32>
    %35 = vector.shape_cast %34 : vector<128xf32> to vector<128x1xf32>
    %36 = tpu.reciprocal %35 {approx = true} : vector<128x1xf32> -> vector<128x1xf32>
    %37 = vector.broadcast %36 : vector<128x1xf32> to vector<128x256xf32>
    %38 = arith.mulf %33, %37 : vector<128x256xf32>
    %39 = arith.truncf %38 : vector<128x256xf32> to vector<128x256xbf16>
    %40 = vector.extract_strided_slice %3 {offsets = [0, 768], sizes = [128, 256], strides = [1, 1]} : vector<128x1024xf32> to vector<128x256xf32>
    %cst_9 = arith.constant dense<0xFF800000> : vector<128xf32>
    %41 = vector.multi_reduction <maximumf>, %40, %cst_9 [1] : vector<128x256xf32> to vector<128xf32>
    %42 = vector.shape_cast %41 : vector<128xf32> to vector<128x1xf32>
    %43 = vector.broadcast %42 : vector<128x1xf32> to vector<128x256xf32>
    %44 = arith.subf %40, %43 : vector<128x256xf32>
    %45 = math.exp %44 : vector<128x256xf32>
    %cst_10 = arith.constant dense<0.000000e+00> : vector<128xf32>
    %46 = vector.multi_reduction <add>, %45, %cst_10 [1] : vector<128x256xf32> to vector<128xf32>
    %47 = vector.shape_cast %46 : vector<128xf32> to vector<128x1xf32>
    %48 = tpu.reciprocal %47 {approx = true} : vector<128x1xf32> -> vector<128x1xf32>
    %49 = vector.broadcast %48 : vector<128x1xf32> to vector<128x256xf32>
    %50 = arith.mulf %45, %49 : vector<128x256xf32>
    %51 = arith.truncf %50 : vector<128x256xf32> to vector<128x256xbf16>
    %52 = tpu.concatenate %15, %27, %39, %51 in 1 : vector<128x256xbf16>, vector<128x256xbf16>, vector<128x256xbf16>, vector<128x256xbf16> -> vector<128x1024xbf16>
    %c0_11 = arith.constant 0 : index
    %c0_12 = arith.constant 0 : index
    %53 = vector.load %arg3[%c0_11, %c0_12] : memref<1024x32xbf16, #tpu.memory_space<vmem>>, vector<1024x32xbf16>
    %cst_13 = arith.constant dense<0.000000e+00> : vector<128x32xf32>
    %54 = tpu.matmul %52, %53, %cst_13 {dimension_numbers = #tpu.dot_dimension_numbers<[1], [0], [0], [1], [0, 0, 1, 1], [], []>} : vector<128x1024xbf16>, vector<1024x32xbf16>, vector<128x32xf32> -> vector<128x32xf32>
    %c0_14 = arith.constant 0 : index
    %c0_15 = arith.constant 0 : index
    %55 = vector.load %arg5[%c0_14, %c0_15] : memref<8x32xf32, #tpu.memory_space<vmem>>, vector<8x32xf32>
    %56 = vector.extract_strided_slice %55 {offsets = [0, 0], sizes = [1, 32], strides = [1, 1]} : vector<8x32xf32> to vector<1x32xf32>
    %57 = vector.extract_strided_slice %55 {offsets = [1, 0], sizes = [1, 32], strides = [1, 1]} : vector<8x32xf32> to vector<1x32xf32>
    %58 = vector.extract_strided_slice %55 {offsets = [2, 0], sizes = [1, 32], strides = [1, 1]} : vector<8x32xf32> to vector<1x32xf32>
    %59 = vector.extract_strided_slice %55 {offsets = [3, 0], sizes = [1, 32], strides = [1, 1]} : vector<8x32xf32> to vector<1x32xf32>
    %60 = vector.extract_strided_slice %55 {offsets = [4, 0], sizes = [1, 32], strides = [1, 1]} : vector<8x32xf32> to vector<1x32xf32>
    %61 = vector.extract_strided_slice %55 {offsets = [5, 0], sizes = [1, 32], strides = [1, 1]} : vector<8x32xf32> to vector<1x32xf32>
    %62 = arith.addf %54, %0 : vector<128x32xf32>
    %cst_16 = arith.constant dense<0.000000e+00> : vector<128xf32>
    %63 = vector.multi_reduction <add>, %62, %cst_16 [1] : vector<128x32xf32> to vector<128xf32>
    %64 = vector.shape_cast %63 : vector<128xf32> to vector<128x1xf32>
    %cst_17 = arith.constant 3.200000e+01 : f32
    %65 = vector.broadcast %cst_17 : f32 to vector<128x1xf32>
    %66 = arith.divf %64, %65 : vector<128x1xf32>
    %67 = arith.mulf %62, %62 : vector<128x32xf32>
    %cst_18 = arith.constant dense<0.000000e+00> : vector<128xf32>
    %68 = vector.multi_reduction <add>, %67, %cst_18 [1] : vector<128x32xf32> to vector<128xf32>
    %69 = vector.shape_cast %68 : vector<128xf32> to vector<128x1xf32>
    %cst_19 = arith.constant 3.200000e+01 : f32
    %70 = vector.broadcast %cst_19 : f32 to vector<128x1xf32>
    %71 = arith.divf %69, %70 : vector<128x1xf32>
    %72 = arith.mulf %66, %66 : vector<128x1xf32>
    %73 = arith.subf %71, %72 : vector<128x1xf32>
    %74 = vector.broadcast %66 : vector<128x1xf32> to vector<128x32xf32>
    %75 = arith.subf %62, %74 : vector<128x32xf32>
    %cst_20 = arith.constant 9.99999974E-6 : f32
    %76 = vector.broadcast %cst_20 : f32 to vector<128x1xf32>
    %77 = arith.addf %73, %76 : vector<128x1xf32>
    %78 = math.rsqrt %77 : vector<128x1xf32>
    %79 = vector.broadcast %78 : vector<128x1xf32> to vector<128x32xf32>
    %80 = arith.mulf %75, %79 : vector<128x32xf32>
    %81 = vector.broadcast %56 : vector<1x32xf32> to vector<128x32xf32>
    %82 = arith.mulf %80, %81 : vector<128x32xf32>
    %83 = vector.broadcast %57 : vector<1x32xf32> to vector<128x32xf32>
    %84 = arith.addf %82, %83 : vector<128x32xf32>
    %c0_21 = arith.constant 0 : index
    %c0_22 = arith.constant 0 : index
    %85 = vector.load %arg4[%c0_21, %c0_22] : memref<64x32xbf16, #tpu.memory_space<vmem>>, vector<64x32xbf16>
    %86 = vector.extract_strided_slice %85 {offsets = [0, 0], sizes = [32, 32], strides = [1, 1]} : vector<64x32xbf16> to vector<32x32xbf16>
    %87 = vector.extract_strided_slice %85 {offsets = [32, 0], sizes = [32, 32], strides = [1, 1]} : vector<64x32xbf16> to vector<32x32xbf16>
    %88 = arith.truncf %84 : vector<128x32xf32> to vector<128x32xbf16>
    %cst_23 = arith.constant dense<0.000000e+00> : vector<128x32xf32>
    %89 = tpu.matmul %88, %86, %cst_23 {dimension_numbers = #tpu.dot_dimension_numbers<[1], [0], [0], [1], [0, 0, 1, 1], [], []>} : vector<128x32xbf16>, vector<32x32xbf16>, vector<128x32xf32> -> vector<128x32xf32>
    %90 = vector.broadcast %58 : vector<1x32xf32> to vector<128x32xf32>
    %91 = arith.addf %89, %90 : vector<128x32xf32>
    %cst_24 = arith.constant 0.000000e+00 : f32
    %92 = vector.broadcast %cst_24 : f32 to vector<128x32xf32>
    %93 = arith.maximumf %91, %92 : vector<128x32xf32>
    %94 = arith.truncf %93 : vector<128x32xf32> to vector<128x32xbf16>
    %cst_25 = arith.constant dense<0.000000e+00> : vector<128x32xf32>
    %95 = tpu.matmul %94, %87, %cst_25 {dimension_numbers = #tpu.dot_dimension_numbers<[1], [0], [0], [1], [0, 0, 1, 1], [], []>} : vector<128x32xbf16>, vector<32x32xbf16>, vector<128x32xf32> -> vector<128x32xf32>
    %96 = vector.broadcast %59 : vector<1x32xf32> to vector<128x32xf32>
    %97 = arith.addf %95, %96 : vector<128x32xf32>
    %98 = arith.addf %84, %97 : vector<128x32xf32>
    %cst_26 = arith.constant dense<0.000000e+00> : vector<128xf32>
    %99 = vector.multi_reduction <add>, %98, %cst_26 [1] : vector<128x32xf32> to vector<128xf32>
    %100 = vector.shape_cast %99 : vector<128xf32> to vector<128x1xf32>
    %cst_27 = arith.constant 3.200000e+01 : f32
    %101 = vector.broadcast %cst_27 : f32 to vector<128x1xf32>
    %102 = arith.divf %100, %101 : vector<128x1xf32>
    %103 = arith.mulf %98, %98 : vector<128x32xf32>
    %cst_28 = arith.constant dense<0.000000e+00> : vector<128xf32>
    %104 = vector.multi_reduction <add>, %103, %cst_28 [1] : vector<128x32xf32> to vector<128xf32>
    %105 = vector.shape_cast %104 : vector<128xf32> to vector<128x1xf32>
    %cst_29 = arith.constant 3.200000e+01 : f32
    %106 = vector.broadcast %cst_29 : f32 to vector<128x1xf32>
    %107 = arith.divf %105, %106 : vector<128x1xf32>
    %108 = arith.mulf %102, %102 : vector<128x1xf32>
    %109 = arith.subf %107, %108 : vector<128x1xf32>
    %110 = vector.broadcast %102 : vector<128x1xf32> to vector<128x32xf32>
    %111 = arith.subf %98, %110 : vector<128x32xf32>
    %cst_30 = arith.constant 9.99999974E-6 : f32
    %112 = vector.broadcast %cst_30 : f32 to vector<128x1xf32>
    %113 = arith.addf %109, %112 : vector<128x1xf32>
    %114 = math.rsqrt %113 : vector<128x1xf32>
    %115 = vector.broadcast %114 : vector<128x1xf32> to vector<128x32xf32>
    %116 = arith.mulf %111, %115 : vector<128x32xf32>
    %117 = vector.broadcast %60 : vector<1x32xf32> to vector<128x32xf32>
    %118 = arith.mulf %116, %117 : vector<128x32xf32>
    %119 = vector.broadcast %61 : vector<1x32xf32> to vector<128x32xf32>
    %120 = arith.addf %118, %119 : vector<128x32xf32>
    %c0_31 = arith.constant 0 : index
    %c0_32 = arith.constant 0 : index
    %121 = vector.load %arg6[%c0_31, %c0_32] : memref<128x32xf32, #tpu.memory_space<vmem>>, vector<128x32xf32>
    tpu.vector_store %arg6[%c0_31, %c0_32], %120 {strides = array<i32>} : memref<128x32xf32, #tpu.memory_space<vmem>>, vector<128x32xf32>,
    return
  }
  func.func @transform_0(%arg0: i32) -> (i32, i32) {
    %c0_i32 = arith.constant 0 : i32
    %c0_i32_0 = arith.constant 0 : i32
    return %arg0, %c0_i32 : i32, i32
  }
  func.func @transform_1(%arg0: i32) -> (i32, i32) {
    %c0_i32 = arith.constant 0 : i32
    %c0_i32_0 = arith.constant 0 : i32
    %c0_i32_1 = arith.constant 0 : i32
    return %c0_i32, %c0_i32_0 : i32, i32
  }
  func.func @transform_2(%arg0: i32) -> (i32, i32) {
    %c0_i32 = arith.constant 0 : i32
    %c0_i32_0 = arith.constant 0 : i32
    %c0_i32_1 = arith.constant 0 : i32
    return %c0_i32, %c0_i32_0 : i32, i32
  }
  func.func @transform_3(%arg0: i32) -> (i32, i32) {
    %c0_i32 = arith.constant 0 : i32
    %c0_i32_0 = arith.constant 0 : i32
    %c0_i32_1 = arith.constant 0 : i32
    return %c0_i32, %c0_i32_0 : i32, i32
  }
  func.func @transform_4(%arg0: i32) -> (i32, i32) {
    %c0_i32 = arith.constant 0 : i32
    %c0_i32_0 = arith.constant 0 : i32
    %c0_i32_1 = arith.constant 0 : i32
    return %c0_i32, %c0_i32_0 : i32, i32
  }
  func.func @transform_5(%arg0: i32) -> (i32, i32) {
    %c0_i32 = arith.constant 0 : i32
    %c0_i32_0 = arith.constant 0 : i32
    return %arg0, %c0_i32 : i32, i32
  }
}

</mosaic_0001>

<llo_original>
// kernel: encoder_block.1
$region0: #{encoder_block.1}
  #allocation0 [shape = 'u32[]', space=smem, size = 0x4, offset = 0x4, fixed_abs, tag = 'smem constant byte address 0x4 - core index']
  #allocation1 [shape = 'u32[144,128]{1,0:T(1,128)}', space=vmem, size = 0x12000, scoped, tag = 'internal scratch']
  %s0 = inlined_call_operand.vmem [shape: f32[512,32], index: 0, kind: input, shape index: {}]
  %s1 = inlined_call_operand.vmem [shape: bf16[32,1024], index: 1, kind: input, shape index: {}]
  %s2 = inlined_call_operand.vmem [shape: bf16[1024,32], index: 2, kind: input, shape index: {}]
  %s3 = inlined_call_operand.vmem [shape: bf16[64,32], index: 3, kind: input, shape index: {}]
  %s4 = inlined_call_operand.vmem [shape: f32[8,32], index: 4, kind: input, shape index: {}]
  %s5 = inlined_call_operand.vmem [shape: f32[512,32], index: 5, kind: output, shape index: {}]
  %s6 = sld [smem:[#allocation0]]
  $region53: #{encoder_block.1} parent=0
    _
  %s8 = ssub.s32 1, %s6
  %s9 = scalar_select 0, %s8, %s6
  loop: start=0, step=1, limit=6
  $region2: #{encoder_block.1} parent=0 // loop_pre_header
    _
  $region3: #{encoder_block.1} parent=0 // loop_header
    %s11 = sphi 0, %s15
    %p12 = scmp.ge.s32.totalorder %s11, 6
    %s21 = sphi 0, %s23
    %s24 = sphi 0, %s21
    %s25 = sphi 0, %s24
    %s41 = sphi 0, %s25
    %s45 = sphi 0, %s45
    %s47 = sphi 0, %s45
    %s48 = sphi 0, %s47
    %s62 = sphi 0, %s48
    %s66 = sphi 0, %s66
    %s68 = sphi 0, %s66
    %s69 = sphi 0, %s68
    %s83 = sphi 0, %s69
    %s87 = sphi 0, %s87
    %s89 = sphi 0, %s87
    %s90 = sphi 0, %s89
    %s104 = sphi 0, %s90
    %s108 = sphi 0, %s108
    %s110 = sphi 0, %s108
    %s111 = sphi 0, %s110
    %s125 = sphi 0, %s111
    %s131 = sphi 0, %s133
    %s134 = sphi 0, %s131
    %s135 = sphi 0, %s134
    %s151 = sphi 0, %s135
  $region4: #{encoder_block.1} parent=0 // loop_header_branch
    %14 = sbr.rel (%p12) target = $region8
  $region5: #{encoder_block.1} parent=0 // loop_body
    %s16 = ssub.s32 %s11, 1
    %s17 = ssub.s32 %s11, 2
    %s18 = sadd.s32 %s11, 1
    %s19 = ssub.s32 %s11, %s18
    %p20 = scmp.eq.s32.totalorder %s19, 0
    %s22 = sadd.s32 %s21, 1
    %s23 = scalar_select %p20, %s21, %s22
    %p26 = pneg %p20
    %p27 = scmp.eq.s32.totalorder %s11, 3
    %p28 = por %p26, %p27
    %p29 = scmp.ne.s32.totalorder %s21, %s24
    %p30 = scmp.eq.s32.totalorder %s11, 0
    %p31 = por %p29, %p30
    %p32 = scmp.ne.s32.totalorder %s21, %s24
    %p33 = scmp.eq.s32.totalorder %s16, 3
    %p34 = por %p32, %p33
    %p35 = scmp.ne.s32.totalorder %s24, %s25
    %p36 = scmp.eq.s32.totalorder %s16, 0
    %p37 = por %p35, %p36
    %p38 = scmp.ne.s32.totalorder %s24, %s25
    %p39 = scmp.eq.s32.totalorder %s17, 3
    %p40 = por %p38, %p39
    %p42 = scmp.ne.s32.totalorder %s25, %s41
    %p43 = scmp.eq.s32.totalorder %s17, 0
    %p44 = por %p42, %p43
    %s46 = sadd.s32 %s45, 1
    %p49 = scmp.eq.s32.totalorder %s11, 3
    %p50 = scmp.ne.s32.totalorder %s45, %s47
    %p51 = scmp.eq.s32.totalorder %s11, 0
    %p52 = por %p50, %p51
    %p53 = scmp.ne.s32.totalorder %s45, %s47
    %p54 = scmp.eq.s32.totalorder %s16, 3
    %p55 = por %p53, %p54
    %p56 = scmp.ne.s32.totalorder %s47, %s48
    %p57 = scmp.eq.s32.totalorder %s16, 0
    %p58 = por %p56, %p57
    %p59 = scmp.ne.s32.totalorder %s47, %s48
    %p60 = scmp.eq.s32.totalorder %s17, 3
    %p61 = por %p59, %p60
    %p63 = scmp.ne.s32.totalorder %s48, %s62
    %p64 = scmp.eq.s32.totalorder %s17, 0
    %p65 = por %p63, %p64
    %s67 = sadd.s32 %s66, 1
    %p70 = scmp.eq.s32.totalorder %s11, 3
    %p71 = scmp.ne.s32.totalorder %s66, %s68
    %p72 = scmp.eq.s32.totalorder %s11, 0
    %p73 = por %p71, %p72
    %p74 = scmp.ne.s32.totalorder %s66, %s68
    %p75 = scmp.eq.s32.totalorder %s16, 3
    %p76 = por %p74, %p75
    %p77 = scmp.ne.s32.totalorder %s68, %s69
    %p78 = scmp.eq.s32.totalorder %s16, 0
    %p79 = por %p77, %p78
    %p80 = scmp.ne.s32.totalorder %s68, %s69
    %p81 = scmp.eq.s32.totalorder %s17, 3
    %p82 = por %p80, %p81
    %p84 = scmp.ne.s32.totalorder %s69, %s83
    %p85 = scmp.eq.s32.totalorder %s17, 0
    %p86 = por %p84, %p85
    %s88 = sadd.s32 %s87, 1
    %p91 = scmp.eq.s32.totalorder %s11, 3
    %p92 = scmp.ne.s32.totalorder %s87, %s89
    %p93 = scmp.eq.s32.totalorder %s11, 0
    %p94 = por %p92, %p93
    %p95 = scmp.ne.s32.totalorder %s87, %s89
    %p96 = scmp.eq.s32.totalorder %s16, 3
    %p97 = por %p95, %p96
    %p98 = scmp.ne.s32.totalorder %s89, %s90
    %p99 = scmp.eq.s32.totalorder %s16, 0
    %p100 = por %p98, %p99
    %p101 = scmp.ne.s32.totalorder %s89, %s90
    %p102 = scmp.eq.s32.totalorder %s17, 3
    %p103 = por %p101, %p102
    %p105 = scmp.ne.s32.totalorder %s90, %s104
    %p106 = scmp.eq.s32.totalorder %s17, 0
    %p107 = por %p105, %p106
    %s109 = sadd.s32 %s108, 1
    %p112 = scmp.eq.s32.totalorder %s11, 3
    %p113 = scmp.ne.s32.totalorder %s108, %s110
    %p114 = scmp.eq.s32.totalorder %s11, 0
    %p115 = por %p113, %p114
    %p116 = scmp.ne.s32.totalorder %s108, %s110
    %p117 = scmp.eq.s32.totalorder %s16, 3
    %p118 = por %p116, %p117
    %p119 = scmp.ne.s32.totalorder %s110, %s111
    %p120 = scmp.eq.s32.totalorder %s16, 0
    %p121 = por %p119, %p120
    %p122 = scmp.ne.s32.totalorder %s110, %s111
    %p123 = scmp.eq.s32.totalorder %s17, 3
    %p124 = por %p122, %p123
    %p126 = scmp.ne.s32.totalorder %s111, %s125
    %p127 = scmp.eq.s32.totalorder %s17, 0
    %p128 = por %p126, %p127
    %s129 = ssub.s32 %s11, %s18
    %p130 = scmp.eq.s32.totalorder %s129, 0
    %s132 = sadd.s32 %s131, 1
    %s133 = scalar_select %p130, %s131, %s132
    %p136 = pneg %p130
    %p137 = scmp.eq.s32.totalorder %s11, 3
    %p138 = por %p136, %p137
    %p139 = scmp.ne.s32.totalorder %s131, %s134
    %p140 = scmp.eq.s32.totalorder %s11, 0
    %p141 = por %p139, %p140
    %p142 = scmp.ne.s32.totalorder %s131, %s134
    %p143 = scmp.eq.s32.totalorder %s16, 3
    %p144 = por %p142, %p143
    %p145 = scmp.ne.s32.totalorder %s134, %s135
    %p146 = scmp.eq.s32.totalorder %s16, 0
    %p147 = por %p145, %p146
    %p148 = scmp.ne.s32.totalorder %s134, %s135
    %p149 = scmp.eq.s32.totalorder %s17, 3
    %p150 = por %p148, %p149
    %p152 = scmp.ne.s32.totalorder %s135, %s151
    %p153 = scmp.eq.s32.totalorder %s17, 0
    %p154 = por %p152, %p153
    %p155 = scmp.le.s32.totalorder 1, %s11
    %p156 = scmp.lt.s32.totalorder %s11, 5
    %p157 = pnand %p155, %p156
    %p158 = pneg %p157
    // Predicated region
    $region9: #{encoder_block.1} parent=5 // pred_check
      _
    $region10: #{encoder_block.1} parent=5 // pred_check_branch
      %160 = sbr.rel (%p157) target = $region12
    $region11: #{encoder_block.1} parent=5 // pred_region
      %s161 = ssub.s32 %s11, 1
      // Predicated region
      $region13: #{encoder_block.1} parent=11 // pred_check
        %p162 = pneg %p58
      $region14: #{encoder_block.1} parent=11 // pred_check_branch
        %164 = sbr.rel (%p162) target = $region16
      $region15: #{encoder_block.1} parent=11 // pred_region
        _
      $region16: #{encoder_block.1} parent=11 // pred_fallthru
        _
      // Predicated region
      $region17: #{encoder_block.1} parent=11 // pred_check
        %p165 = pneg %p79
      $region18: #{encoder_block.1} parent=11 // pred_check_branch
        %167 = sbr.rel (%p165) target = $region20
      $region19: #{encoder_block.1} parent=11 // pred_region
        _
      $region20: #{encoder_block.1} parent=11 // pred_fallthru
        _
      // Predicated region
      $region21: #{encoder_block.1} parent=11 // pred_check
        %p168 = pneg %p100
      $region22: #{encoder_block.1} parent=11 // pred_check_branch
        %170 = sbr.rel (%p168) target = $region24
      $region23: #{encoder_block.1} parent=11 // pred_region
        _
      $region24: #{encoder_block.1} parent=11 // pred_fallthru
        _
      // Predicated region
      $region25: #{encoder_block.1} parent=11 // pred_check
        %p171 = pneg %p121
      $region26: #{encoder_block.1} parent=11 // pred_check_branch
        %173 = sbr.rel (%p171) target = $region28
      $region27: #{encoder_block.1} parent=11 // pred_region
        _
      $region28: #{encoder_block.1} parent=11 // pred_fallthru
        _
    $region12: #{encoder_block.1} parent=5 // pred_fallthru
      _
    %p174 = scmp.lt.s32.totalorder %s11, 4
    // Predicated region
    $region29: #{encoder_block.1} parent=5 // pred_check
      %p175 = pneg %p174
    $region30: #{encoder_block.1} parent=5 // pred_check_branch
      %177 = sbr.rel (%p175) target = $region32
    $region31: #{encoder_block.1} parent=5 // pred_region
      // Predicated region
      $region33: #{encoder_block.1} parent=31 // pred_check
        %p178 = pneg %p31
      $region34: #{encoder_block.1} parent=31 // pred_check_branch
        %180 = sbr.rel (%p178) target = $region36
      $region35: #{encoder_block.1} parent=31 // pred_region
        %s181 = smul.u32 16, %s11
        %p182 = scmp.lt.s32.totalorder %s181, 63
        %s183 = scalar_select %p182, %s181, 63
        %s184 = smul.addr %s183, 8
        %s185 = scalar_lea.vmem %s0, %s184
        %s186 = smul.u32 16, %s11
      $region36: #{encoder_block.1} parent=31 // pred_fallthru
        _
    $region32: #{encoder_block.1} parent=5 // pred_fallthru
      _
    %p187 = scmp.le.s32.totalorder 1, %s11
    %p188 = scmp.lt.s32.totalorder %s11, 5
    %p189 = pnand %p187, %p188
    %p190 = pneg %p189
    // Predicated region
    $region37: #{encoder_block.1} parent=5 // pred_check
      _
    $region38: #{encoder_block.1} parent=5 // pred_check_branch
      %192 = sbr.rel (%p189) target = $region40
    $region39: #{encoder_block.1} parent=5 // pred_region
      %s193 = ssub.s32 %s11, 1
      %s194 = smul.u32 16, %s16
      %p195 = scmp.lt.s32.totalorder %s194, 63
      %s196 = scalar_select %p195, %s194, 63
      %s197 = smul.addr %s196, 8
      %s198 = scalar_lea.vmem %s0, %s197
      %p199 = pneg %p37
      %p200 = pneg %p34
      %p201 = pneg %p58
      %p202 = pneg %p55
      %p203 = pneg %p79
      %p204 = pneg %p76
      %p205 = pneg %p100
      %p206 = pneg %p97
      %p207 = pneg %p121
      %p208 = pneg %p118
      %p209 = pneg %p147
      %p210 = pneg %p144
      %s211 = smul.u32 16, %s16
      %p212 = scmp.lt.s32.totalorder %s211, 63
      %s213 = scalar_select %p212, %s211, 63
      %s214 = smul.addr %s213, 8
      %s215 = scalar_lea.vmem %s5, %s214
      %s216 = smul.u32 16, %s16
      %p217 = scmp.lt.s32.totalorder %s216, 63
      %s218 = scalar_select %p217, %s216, 63
      %s219 = smul.addr %s218, 8
      %s220 = scalar_lea.vmem %s0, %s219
      %s221 = smul.u32 16, %s16
      %s222 = smul.u32 16, %s16
      %p223 = scmp.lt.s32.totalorder %s222, 63
      %s224 = scalar_select %p223, %s222, 63
      %s225 = smul.addr %s224, 8
      %s226 = scalar_lea.vmem %s5, %s225
      %s227 = smul.u32 16, %s16
      %v229 = vld [vmem:[%s220] sm:$0xff]
      %v230 = vld [vmem:[%s220 + $0x8] sm:$0xff]
      %v231 = vld [vmem:[%s220 + $0x10] sm:$0xff]
      %v232 = vld [vmem:[%s220 + $0x18] sm:$0xff]
      %v233 = vld [vmem:[%s220 + $0x20] sm:$0xff]
      %v234 = vld [vmem:[%s220 + $0x28] sm:$0xff]
      %v235 = vld [vmem:[%s220 + $0x30] sm:$0xff]
      %v236 = vld [vmem:[%s220 + $0x38] sm:$0xff]
      %v237 = vld [vmem:[%s220 + $0x40] sm:$0xff]
      %v238 = vld [vmem:[%s220 + $0x48] sm:$0xff]
      %v239 = vld [vmem:[%s220 + $0x50] sm:$0xff]
      %v240 = vld [vmem:[%s220 + $0x58] sm:$0xff]
      %v241 = vld [vmem:[%s220 + $0x60] sm:$0xff]
      %v242 = vld [vmem:[%s220 + $0x68] sm:$0xff]
      %v243 = vld [vmem:[%s220 + $0x70] sm:$0xff]
      %v244 = vld [vmem:[%s220 + $0x78] sm:$0xff]
      %v245 = vpack.c.bf16 %v230, %v229
      %v246 = vpack.c.bf16 %v232, %v231
      %v247 = vpack.c.bf16 %v234, %v233
      %v248 = vpack.c.bf16 %v236, %v235
      %v249 = vpack.c.bf16 %v238, %v237
      %v250 = vpack.c.bf16 %v240, %v239
      %v251 = vpack.c.bf16 %v242, %v241
      %v252 = vpack.c.bf16 %v244, %v243
      %v253 = vld [vmem:[%s1] sm:$0xff]
      %v254 = vld [vmem:[%s1 + $0x8] sm:$0xff]
      %v255 = vld [vmem:[%s1 + $0x10] sm:$0xff]
      %v256 = vld [vmem:[%s1 + $0x18] sm:$0xff]
      %v257 = vld [vmem:[%s1 + $0x20] sm:$0xff]
      %v258 = vld [vmem:[%s1 + $0x28] sm:$0xff]
      %v259 = vld [vmem:[%s1 + $0x30] sm:$0xff]
      %v260 = vld [vmem:[%s1 + $0x38] sm:$0xff]
      %v261 = vld [vmem:[%s1 + $0x40] sm:$0xff]
      %v262 = vld [vmem:[%s1 + $0x48] sm:$0xff]
      %v263 = vld [vmem:[%s1 + $0x50] sm:$0xff]
      %v264 = vld [vmem:[%s1 + $0x58] sm:$0xff]
      %v265 = vld [vmem:[%s1 + $0x60] sm:$0xff]
      %v266 = vld [vmem:[%s1 + $0x68] sm:$0xff]
      %v267 = vld [vmem:[%s1 + $0x70] sm:$0xff]
      %v268 = vld [vmem:[%s1 + $0x78] sm:$0xff]
      %v285 = vunpack.c.l.b16 %v253
      %v286 = vunpack.c.h.b16 %v253
      %v287 = vunpack.c.l.b16 %v254
      %v288 = vunpack.c.h.b16 %v254
      %v289 = vunpack.c.l.b16 %v255
      %v290 = vunpack.c.h.b16 %v255
      %v291 = vunpack.c.l.b16 %v256
      %v292 = vunpack.c.h.b16 %v256
      %v293 = vunpack.c.l.b16 %v257
      %v294 = vunpack.c.h.b16 %v257
      %v295 = vunpack.c.l.b16 %v258
      %v296 = vunpack.c.h.b16 %v258
      %v297 = vunpack.c.l.b16 %v259
      %v298 = vunpack.c.h.b16 %v259
      %v299 = vunpack.c.l.b16 %v260
      %v300 = vunpack.c.h.b16 %v260
      %v301 = vunpack.c.l.b16 %v261
      %v302 = vunpack.c.h.b16 %v261
      %v303 = vunpack.c.l.b16 %v262
      %v304 = vunpack.c.h.b16 %v262
      %v305 = vunpack.c.l.b16 %v263
      %v306 = vunpack.c.h.b16 %v263
      %v307 = vunpack.c.l.b16 %v264
      %v308 = vunpack.c.h.b16 %v264
      %v309 = vunpack.c.l.b16 %v265
      %v310 = vunpack.c.h.b16 %v265
      %v311 = vunpack.c.l.b16 %v266
      %v312 = vunpack.c.h.b16 %v266
      %v313 = vunpack.c.l.b16 %v267
      %v314 = vunpack.c.h.b16 %v267
      %v315 = vunpack.c.l.b16 %v268
      %v316 = vunpack.c.h.b16 %v268
      %v317 = vpack.c.b16 %v293, %v285
      %v318 = vpack.c.b16 %v294, %v286
      %v319 = vpack.c.b16 %v295, %v287
      %v320 = vpack.c.b16 %v296, %v288
      %v321 = vpack.c.b16 %v297, %v289
      %v322 = vpack.c.b16 %v298, %v290
      %v323 = vpack.c.b16 %v299, %v291
      %v324 = vpack.c.b16 %v300, %v292
      %v325 = vpack.c.b16 %v309, %v301
      %v326 = vpack.c.b16 %v310, %v302
      %v327 = vpack.c.b16 %v311, %v303
      %v328 = vpack.c.b16 %v312, %v304
      %v329 = vpack.c.b16 %v313, %v305
      %v330 = vpack.c.b16 %v314, %v306
      %v331 = vpack.c.b16 %v315, %v307
      %v332 = vpack.c.b16 %v316, %v308
      %vm349 = vcmask 261120
      %v351 = vsel %vm349, %v245, 0
      %v354 = vsel %vm349, %v246, 0
      %v357 = vsel %vm349, %v247, 0
      %v360 = vsel %vm349, %v248, 0
      %v363 = vsel %vm349, %v249, 0
      %v366 = vsel %vm349, %v250, 0
      %v369 = vsel %vm349, %v251, 0
      %v372 = vsel %vm349, %v252, 0
      %374 = vmatprep.subr.bf16.mxu0 %v318
      %375 = vmatpush1.bf16.msra.mxu0 %v317
      %376 = vmatprep.subr.bf16.mxu0 %v326
      %377 = vmatpush1.bf16.msra.mxu0 %v325
      %378 = vmatprep.subr.bf16.mxu0 0
      %379 = vmatpush1.bf16.msra.mxu0 0
      %380 = vmatprep.subr.bf16.mxu0 0
      %381 = vmatpush1.bf16.msra.mxu0 0
      %382 = vmatprep.subr.bf16.mxu0 0
      %383 = vmatpush1.bf16.msra.mxu0 0
      %384 = vmatprep.subr.bf16.mxu0 0
      %385 = vmatpush1.bf16.msra.mxu0 0
      %386 = vmatprep.subr.bf16.mxu0 0
      %387 = vmatpush1.bf16.msra.mxu0 0
      %388 = vmatprep.subr.bf16.mxu0 0
      %389 = vmatpush1.bf16.msra.mxu0 0
      %390 = vmatprep.subr.bf16.mxu0 0
      %391 = vmatpush1.bf16.msra.mxu0 0
      %392 = vmatprep.subr.bf16.mxu0 0
      %393 = vmatpush1.bf16.msra.mxu0 0
      %394 = vmatprep.subr.bf16.mxu0 0
      %395 = vmatpush1.bf16.msra.mxu0 0
      %396 = vmatprep.subr.bf16.mxu0 0
      %397 = vmatpush1.bf16.msra.mxu0 0
      %398 = vmatprep.subr.bf16.mxu0 0
      %399 = vmatpush1.bf16.msra.mxu0 0
      %400 = vmatprep.subr.bf16.mxu0 0
      %401 = vmatpush1.bf16.msra.mxu0 0
      %402 = vmatprep.subr.bf16.mxu0 0
      %403 = vmatpush1.bf16.msra.mxu0 0
      %404 = vmatprep.subr.bf16.mxu0 0
      %405 = vmatpush1.bf16.msra.mxu0 0
      %406 = vmatprep.mubr.bf16.mxu0 0
      %407 = vmatmul.mubr.bf16.gmra.mrb[0].mxu0 %v351
      %v408 = vpop.f32.mrb[0].mxu0
      %v409 = vadd.f32 0.0, %v408
      %v410 = vpop.f32.mrb[0].mxu0
      %v411 = vadd.f32 0.0, %v410
      %v412 = vpop.f32.mrb[0].mxu0
      %v413 = vadd.f32 0.0, %v412
      %v414 = vpop.f32.mrb[0].mxu0
      %v415 = vadd.f32 0.0, %v414
      %416 = vmatprep.mubr.bf16.mxu0 0
      %417 = vmatmul.mubr.bf16.gmra.mrb[0].mxu0 %v354
      %v418 = vpop.f32.mrb[0].mxu0
      %v419 = vadd.f32 0.0, %v418
      %v420 = vpop.f32.mrb[0].mxu0
      %v421 = vadd.f32 0.0, %v420
      %v422 = vpop.f32.mrb[0].mxu0
      %v423 = vadd.f32 0.0, %v422
      %v424 = vpop.f32.mrb[0].mxu0
      %v425 = vadd.f32 0.0, %v424
      %426 = vmatprep.mubr.bf16.mxu0 0
      %427 = vmatmul.mubr.bf16.gmra.mrb[0].mxu0 %v357
      %v428 = vpop.f32.mrb[0].mxu0
      %v429 = vadd.f32 0.0, %v428
      %v430 = vpop.f32.mrb[0].mxu0
      %v431 = vadd.f32 0.0, %v430
      %v432 = vpop.f32.mrb[0].mxu0
      %v433 = vadd.f32 0.0, %v432
      %v434 = vpop.f32.mrb[0].mxu0
      %v435 = vadd.f32 0.0, %v434
      %436 = vmatprep.mubr.bf16.mxu0 0
      %437 = vmatmul.mubr.bf16.gmra.mrb[0].mxu0 %v360
      %v438 = vpop.f32.mrb[0].mxu0
      %v439 = vadd.f32 0.0, %v438
      %v440 = vpop.f32.mrb[0].mxu0
      %v441 = vadd.f32 0.0, %v440
      %v442 = vpop.f32.mrb[0].mxu0
      %v443 = vadd.f32 0.0, %v442
      %v444 = vpop.f32.mrb[0].mxu0
      %v445 = vadd.f32 0.0, %v444
      %446 = vmatprep.mubr.bf16.mxu0 0
      %447 = vmatmul.mubr.bf16.gmra.mrb[0].mxu0 %v363
      %v448 = vpop.f32.mrb[0].mxu0
      %v449 = vadd.f32 0.0, %v448
      %v450 = vpop.f32.mrb[0].mxu0
      %v451 = vadd.f32 0.0, %v450
      %v452 = vpop.f32.mrb[0].mxu0
      %v453 = vadd.f32 0.0, %v452
      %v454 = vpop.f32.mrb[0].mxu0
      %v455 = vadd.f32 0.0, %v454
      %456 = vmatprep.mubr.bf16.mxu0 0
      %457 = vmatmul.mubr.bf16.gmra.mrb[0].mxu0 %v366
      %v458 = vpop.f32.mrb[0].mxu0
      %v459 = vadd.f32 0.0, %v458
      %v460 = vpop.f32.mrb[0].mxu0
      %v461 = vadd.f32 0.0, %v460
      %v462 = vpop.f32.mrb[0].mxu0
      %v463 = vadd.f32 0.0, %v462
      %v464 = vpop.f32.mrb[0].mxu0
      %v465 = vadd.f32 0.0, %v464
      %466 = vmatprep.mubr.bf16.mxu0 0
      %467 = vmatmul.mubr.bf16.gmra.mrb[0].mxu0 %v369
      %v468 = vpop.f32.mrb[0].mxu0
      %v469 = vadd.f32 0.0, %v468
      %v470 = vpop.f32.mrb[0].mxu0
      %v471 = vadd.f32 0.0, %v470
      %v472 = vpop.f32.mrb[0].mxu0
      %v473 = vadd.f32 0.0, %v472
      %v474 = vpop.f32.mrb[0].mxu0
      %v475 = vadd.f32 0.0, %v474
      %476 = vmatprep.mubr.bf16.mxu0 0
      %477 = vmatmul.mubr.bf16.gmra.mrb[0].mxu0 %v372
      %v478 = vpop.f32.mrb[0].mxu0
      %v479 = vadd.f32 0.0, %v478
      %v480 = vpop.f32.mrb[0].mxu0
      %v481 = vadd.f32 0.0, %v480
      %v482 = vpop.f32.mrb[0].mxu0
      %v483 = vadd.f32 0.0, %v482
      %v484 = vpop.f32.mrb[0].mxu0
      %v485 = vadd.f32 0.0, %v484
      %486 = vdwg.mxu0
      %487 = vmatprep.subr.bf16.mxu0 %v320
      %488 = vmatpush1.bf16.msra.mxu0 %v319
      %489 = vmatprep.subr.bf16.mxu0 %v328
      %490 = vmatpush1.bf16.msra.mxu0 %v327
      %491 = vmatprep.subr.bf16.mxu0 0
      %492 = vmatpush1.bf16.msra.mxu0 0
      %493 = vmatprep.subr.bf16.mxu0 0
      %494 = vmatpush1.bf16.msra.mxu0 0
      %495 = vmatprep.subr.bf16.mxu0 0
      %496 = vmatpush1.bf16.msra.mxu0 0
      %497 = vmatprep.subr.bf16.mxu0 0
      %498 = vmatpush1.bf16.msra.mxu0 0
      %499 = vmatprep.subr.bf16.mxu0 0
      %500 = vmatpush1.bf16.msra.mxu0 0
      %501 = vmatprep.subr.bf16.mxu0 0
      %502 = vmatpush1.bf16.msra.mxu0 0
      %503 = vmatprep.subr.bf16.mxu0 0
      %504 = vmatpush1.bf16.msra.mxu0 0
      %505 = vmatprep.subr.bf16.mxu0 0
      %506 = vmatpush1.bf16.msra.mxu0 0
      %507 = vmatprep.subr.bf16.mxu0 0
      %508 = vmatpush1.bf16.msra.mxu0 0
      %509 = vmatprep.subr.bf16.mxu0 0
      %510 = vmatpush1.bf16.msra.mxu0 0
      %511 = vmatprep.subr.bf16.mxu0 0
      %512 = vmatpush1.bf16.msra.mxu0 0
      %513 = vmatprep.subr.bf16.mxu0 0
      %514 = vmatpush1.bf16.msra.mxu0 0
      %515 = vmatprep.subr.bf16.mxu0 0
      %516 = vmatpush1.bf16.msra.mxu0 0
      %517 = vmatprep.subr.bf16.mxu0 0
      %518 = vmatpush1.bf16.msra.mxu0 0
      %519 = vmatprep.mubr.bf16.mxu0 0
      %520 = vmatmul.mubr.bf16.gmra.mrb[0].mxu0 %v351
      %v521 = vpop.f32.mrb[0].mxu0
      %v522 = vadd.f32 0.0, %v521
      %v523 = vpop.f32.mrb[0].mxu0
      %v524 = vadd.f32 0.0, %v523
      %v525 = vpop.f32.mrb[0].mxu0
      %v526 = vadd.f32 0.0, %v525
      %v527 = vpop.f32.mrb[0].mxu0
      %v528 = vadd.f32 0.0, %v527
      %529 = vmatprep.mubr.bf16.mxu0 0
      %530 = vmatmul.mubr.bf16.gmra.mrb[0].mxu0 %v354
      %v531 = vpop.f32.mrb[0].mxu0
      %v532 = vadd.f32 0.0, %v531
      %v533 = vpop.f32.mrb[0].mxu0
      %v534 = vadd.f32 0.0, %v533
      %v535 = vpop.f32.mrb[0].mxu0
      %v536 = vadd.f32 0.0, %v535
      %v537 = vpop.f32.mrb[0].mxu0
      %v538 = vadd.f32 0.0, %v537
      %539 = vmatprep.mubr.bf16.mxu0 0
      %540 = vmatmul.mubr.bf16.gmra.mrb[0].mxu0 %v357
      %v541 = vpop.f32.mrb[0].mxu0
      %v542 = vadd.f32 0.0, %v541
      %v543 = vpop.f32.mrb[0].mxu0
      %v544 = vadd.f32 0.0, %v543
      %v545 = vpop.f32.mrb[0].mxu0
      %v546 = vadd.f32 0.0, %v545
      %v547 = vpop.f32.mrb[0].mxu0
      %v548 = vadd.f32 0.0, %v547
      %549 = vmatprep.mubr.bf16.mxu0 0
      %550 = vmatmul.mubr.bf16.gmra.mrb[0].mxu0 %v360
      %v551 = vpop.f32.mrb[0].mxu0
      %v552 = vadd.f32 0.0, %v551
      %v553 = vpop.f32.mrb[0].mxu0
      %v554 = vadd.f32 0.0, %v553
      %v555 = vpop.f32.mrb[0].mxu0
      %v556 = vadd.f32 0.0, %v555
      %v557 = vpop.f32.mrb[0].mxu0
      %v558 = vadd.f32 0.0, %v557
      %559 = vmatprep.mubr.bf16.mxu0 0
      %560 = vmatmul.mubr.bf16.gmra.mrb[0].mxu0 %v363
      %v561 = vpop.f32.mrb[0].mxu0
      %v562 = vadd.f32 0.0, %v561
      %v563 = vpop.f32.mrb[0].mxu0
      %v564 = vadd.f32 0.0, %v563
      %v565 = vpop.f32.mrb[0].mxu0
      %v566 = vadd.f32 0.0, %v565
      %v567 = vpop.f32.mrb[0].mxu0
      %v568 = vadd.f32 0.0, %v567
      %569 = vmatprep.mubr.bf16.mxu0 0
      %570 = vmatmul.mubr.bf16.gmra.mrb[0].mxu0 %v366
      %v571 = vpop.f32.mrb[0].mxu0
      %v572 = vadd.f32 0.0, %v571
      %v573 = vpop.f32.mrb[0].mxu0
      %v574 = vadd.f32 0.0, %v573
      %v575 = vpop.f32.mrb[0].mxu0
      %v576 = vadd.f32 0.0, %v575
      %v577 = vpop.f32.mrb[0].mxu0
      %v578 = vadd.f32 0.0, %v577
      %579 = vmatprep.mubr.bf16.mxu0 0
      %580 = vmatmul.mubr.bf16.gmra.mrb[0].mxu0 %v369
      %v581 = vpop.f32.mrb[0].mxu0
      %v582 = vadd.f32 0.0, %v581
      %v583 = vpop.f32.mrb[0].mxu0
      %v584 = vadd.f32 0.0, %v583
      %v585 = vpop.f32.mrb[0].mxu0
      %v586 = vadd.f32 0.0, %v585
      %v587 = vpop.f32.mrb[0].mxu0
      %v588 = vadd.f32 0.0, %v587
      %589 = vmatprep.mubr.bf16.mxu0 0
      %590 = vmatmul.mubr.bf16.gmra.mrb[0].mxu0 %v372
      %v591 = vpop.f32.mrb[0].mxu0
      %v592 = vadd.f32 0.0, %v591
      %v593 = vpop.f32.mrb[0].mxu0
      %v594 = vadd.f32 0.0, %v593
      %v595 = vpop.f32.mrb[0].mxu0
      %v596 = vadd.f32 0.0, %v595
      %v597 = vpop.f32.mrb[0].mxu0
      %v598 = vadd.f32 0.0, %v597
      %599 = vdwg.mxu0
      %600 = vmatprep.subr.bf16.mxu0 %v322
      %601 = vmatpush1.bf16.msra.mxu0 %v321
      %602 = vmatprep.subr.bf16.mxu0 %v330
      %603 = vmatpush1.bf16.msra.mxu0 %v329
      %604 = vmatprep.subr.bf16.mxu0 0
      %605 = vmatpush1.bf16.msra.mxu0 0
      %606 = vmatprep.subr.bf16.mxu0 0
      %607 = vmatpush1.bf16.msra.mxu0 0
      %608 = vmatprep.subr.bf16.mxu0 0
      %609 = vmatpush1.bf16.msra.mxu0 0
      %610 = vmatprep.subr.bf16.mxu0 0
      %611 = vmatpush1.bf16.msra.mxu0 0
      %612 = vmatprep.subr.bf16.mxu0 0
      %613 = vmatpush1.bf16.msra.mxu0 0
      %614 = vmatprep.subr.bf16.mxu0 0
      %615 = vmatpush1.bf16.msra.mxu0 0
      %616 = vmatprep.subr.bf16.mxu0 0
      %617 = vmatpush1.bf16.msra.mxu0 0
      %618 = vmatprep.subr.bf16.mxu0 0
      %619 = vmatpush1.bf16.msra.mxu0 0
      %620 = vmatprep.subr.bf16.mxu0 0
      %621 = vmatpush1.bf16.msra.mxu0 0
      %622 = vmatprep.subr.bf16.mxu0 0
      %623 = vmatpush1.bf16.msra.mxu0 0
      %624 = vmatprep.subr.bf16.mxu0 0
      %625 = vmatpush1.bf16.msra.mxu0 0
      %626 = vmatprep.subr.bf16.mxu0 0
      %627 = vmatpush1.bf16.msra.mxu0 0
      %628 = vmatprep.subr.bf16.mxu0 0
      %629 = vmatpush1.bf16.msra.mxu0 0
      %630 = vmatprep.subr.bf16.mxu0 0
      %631 = vmatpush1.bf16.msra.mxu0 0
      %632 = vmatprep.mubr.bf16.mxu0 0
      %633 = vmatmul.mubr.bf16.gmra.mrb[0].mxu0 %v351
      %v634 = vpop.f32.mrb[0].mxu0
      %v635 = vadd.f32 0.0, %v634
      %v636 = vpop.f32.mrb[0].mxu0
      %v637 = vadd.f32 0.0, %v636
      %v638 = vpop.f32.mrb[0].mxu0
      %v639 = vadd.f32 0.0, %v638
      %v640 = vpop.f32.mrb[0].mxu0
      %v641 = vadd.f32 0.0, %v640
      %642 = vmatprep.mubr.bf16.mxu0 0
      %643 = vmatmul.mubr.bf16.gmra.mrb[0].mxu0 %v354
      %v644 = vpop.f32.mrb[0].mxu0
      %v645 = vadd.f32 0.0, %v644
      %v646 = vpop.f32.mrb[0].mxu0
      %v647 = vadd.f32 0.0, %v646
      %v648 = vpop.f32.mrb[0].mxu0
      %v649 = vadd.f32 0.0, %v648
      %v650 = vpop.f32.mrb[0].mxu0
      %v651 = vadd.f32 0.0, %v650
      %652 = vmatprep.mubr.bf16.mxu0 0
      %653 = vmatmul.mubr.bf16.gmra.mrb[0].mxu0 %v357
      %v654 = vpop.f32.mrb[0].mxu0
      %v655 = vadd.f32 0.0, %v654
      %v656 = vpop.f32.mrb[0].mxu0
      %v657 = vadd.f32 0.0, %v656
      %v658 = vpop.f32.mrb[0].mxu0
      %v659 = vadd.f32 0.0, %v658
      %v660 = vpop.f32.mrb[0].mxu0
      %v661 = vadd.f32 0.0, %v660
      %662 = vmatprep.mubr.bf16.mxu0 0
      %663 = vmatmul.mubr.bf16.gmra.mrb[0].mxu0 %v360
      %v664 = vpop.f32.mrb[0].mxu0
      %v665 = vadd.f32 0.0, %v664
      %v666 = vpop.f32.mrb[0].mxu0
      %v667 = vadd.f32 0.0, %v666
      %v668 = vpop.f32.mrb[0].mxu0
      %v669 = vadd.f32 0.0, %v668
      %v670 = vpop.f32.mrb[0].mxu0
      %v671 = vadd.f32 0.0, %v670
      %672 = vmatprep.mubr.bf16.mxu0 0
      %673 = vmatmul.mubr.bf16.gmra.mrb[0].mxu0 %v363
      %v674 = vpop.f32.mrb[0].mxu0
      %v675 = vadd.f32 0.0, %v674
      %v676 = vpop.f32.mrb[0].mxu0
      %v677 = vadd.f32 0.0, %v676
      %v678 = vpop.f32.mrb[0].mxu0
      %v679 = vadd.f32 0.0, %v678
      %v680 = vpop.f32.mrb[0].mxu0
      %v681 = vadd.f32 0.0, %v680
      %682 = vmatprep.mubr.bf16.mxu0 0
      %683 = vmatmul.mubr.bf16.gmra.mrb[0].mxu0 %v366
      %v684 = vpop.f32.mrb[0].mxu0
      %v685 = vadd.f32 0.0, %v684
      %v686 = vpop.f32.mrb[0].mxu0
      %v687 = vadd.f32 0.0, %v686
      %v688 = vpop.f32.mrb[0].mxu0
      %v689 = vadd.f32 0.0, %v688
      %v690 = vpop.f32.mrb[0].mxu0
      %v691 = vadd.f32 0.0, %v690
      %692 = vmatprep.mubr.bf16.mxu0 0
      %693 = vmatmul.mubr.bf16.gmra.mrb[0].mxu0 %v369
      %v694 = vpop.f32.mrb[0].mxu0
      %v695 = vadd.f32 0.0, %v694
      %v696 = vpop.f32.mrb[0].mxu0
      %v697 = vadd.f32 0.0, %v696
      %v698 = vpop.f32.mrb[0].mxu0
      %v699 = vadd.f32 0.0, %v698
      %v700 = vpop.f32.mrb[0].mxu0
      %v701 = vadd.f32 0.0, %v700
      %702 = vmatprep.mubr.bf16.mxu0 0
      %703 = vmatmul.mubr.bf16.gmra.mrb[0].mxu0 %v372
      %v704 = vpop.f32.mrb[0].mxu0
      %v705 = vadd.f32 0.0, %v704
      %v706 = vpop.f32.mrb[0].mxu0
      %v707 = vadd.f32 0.0, %v706
      %v708 = vpop.f32.mrb[0].mxu0
      %v709 = vadd.f32 0.0, %v708
      %v710 = vpop.f32.mrb[0].mxu0
      %v711 = vadd.f32 0.0, %v710
      %712 = vdwg.mxu0
      %713 = vmatprep.subr.bf16.mxu0 %v324
      %714 = vmatpush1.bf16.msra.mxu0 %v323
      %715 = vmatprep.subr.bf16.mxu0 %v332
      %716 = vmatpush1.bf16.msra.mxu0 %v331
      %717 = vmatprep.subr.bf16.mxu0 0
      %718 = vmatpush1.bf16.msra.mxu0 0
      %719 = vmatprep.subr.bf16.mxu0 0
      %720 = vmatpush1.bf16.msra.mxu0 0
      %721 = vmatprep.subr.bf16.mxu0 0
      %722 = vmatpush1.bf16.msra.mxu0 0
      %723 = vmatprep.subr.bf16.mxu0 0
      %724 = vmatpush1.bf16.msra.mxu0 0
      %725 = vmatprep.subr.bf16.mxu0 0
      %726 = vmatpush1.bf16.msra.mxu0 0
      %727 = vmatprep.subr.bf16.mxu0 0
      %728 = vmatpush1.bf16.msra.mxu0 0
      %729 = vmatprep.subr.bf16.mxu0 0
      %730 = vmatpush1.bf16.msra.mxu0 0
      %731 = vmatprep.subr.bf16.mxu0 0
      %732 = vmatpush1.bf16.msra.mxu0 0
      %733 = vmatprep.subr.bf16.mxu0 0
      %734 = vmatpush1.bf16.msra.mxu0 0
      %735 = vmatprep.subr.bf16.mxu0 0
      %736 = vmatpush1.bf16.msra.mxu0 0
      %737 = vmatprep.subr.bf16.mxu0 0
      %738 = vmatpush1.bf16.msra.mxu0 0
      %739 = vmatprep.subr.bf16.mxu0 0
      %740 = vmatpush1.bf16.msra.mxu0 0
      %741 = vmatprep.subr.bf16.mxu0 0
      %742 = vmatpush1.bf16.msra.mxu0 0
      %743 = vmatprep.subr.bf16.mxu0 0
      %744 = vmatpush1.bf16.msra.mxu0 0
      %745 = vmatprep.mubr.bf16.mxu0 0
      %746 = vmatmul.mubr.bf16.gmra.mrb[0].mxu0 %v351
      %v747 = vpop.f32.mrb[0].mxu0
      %v748 = vadd.f32 0.0, %v747
      %v749 = vpop.f32.mrb[0].mxu0
      %v750 = vadd.f32 0.0, %v749
      %v751 = vpop.f32.mrb[0].mxu0
      %v752 = vadd.f32 0.0, %v751
      %v753 = vpop.f32.mrb[0].mxu0
      %v754 = vadd.f32 0.0, %v753
      %755 = vmatprep.mubr.bf16.mxu0 0
      %756 = vmatmul.mubr.bf16.gmra.mrb[0].mxu0 %v354
      %v757 = vpop.f32.mrb[0].mxu0
      %v758 = vadd.f32 0.0, %v757
      %v759 = vpop.f32.mrb[0].mxu0
      %v760 = vadd.f32 0.0, %v759
      %v761 = vpop.f32.mrb[0].mxu0
      %v762 = vadd.f32 0.0, %v761
      %v763 = vpop.f32.mrb[0].mxu0
      %v764 = vadd.f32 0.0, %v763
      %765 = vmatprep.mubr.bf16.mxu0 0
      %766 = vmatmul.mubr.bf16.gmra.mrb[0].mxu0 %v357
      %v767 = vpop.f32.mrb[0].mxu0
      %v768 = vadd.f32 0.0, %v767
      %v769 = vpop.f32.mrb[0].mxu0
      %v770 = vadd.f32 0.0, %v769
      %v771 = vpop.f32.mrb[0].mxu0
      %v772 = vadd.f32 0.0, %v771
      %v773 = vpop.f32.mrb[0].mxu0
      %v774 = vadd.f32 0.0, %v773
      %775 = vmatprep.mubr.bf16.mxu0 0
      %776 = vmatmul.mubr.bf16.gmra.mrb[0].mxu0 %v360
      %v777 = vpop.f32.mrb[0].mxu0
      %v778 = vadd.f32 0.0, %v777
      %v779 = vpop.f32.mrb[0].mxu0
      %v780 = vadd.f32 0.0, %v779
      %v781 = vpop.f32.mrb[0].mxu0
      %v782 = vadd.f32 0.0, %v781
      %v783 = vpop.f32.mrb[0].mxu0
      %v784 = vadd.f32 0.0, %v783
      %785 = vmatprep.mubr.bf16.mxu0 0
      %786 = vmatmul.mubr.bf16.gmra.mrb[0].mxu0 %v363
      %v787 = vpop.f32.mrb[0].mxu0
      %v788 = vadd.f32 0.0, %v787
      %v789 = vpop.f32.mrb[0].mxu0
      %v790 = vadd.f32 0.0, %v789
      %v791 = vpop.f32.mrb[0].mxu0
      %v792 = vadd.f32 0.0, %v791
      %v793 = vpop.f32.mrb[0].mxu0
      %v794 = vadd.f32 0.0, %v793
      %795 = vmatprep.mubr.bf16.mxu0 0
      %796 = vmatmul.mubr.bf16.gmra.mrb[0].mxu0 %v366
      %v797 = vpop.f32.mrb[0].mxu0
      %v798 = vadd.f32 0.0, %v797
      %v799 = vpop.f32.mrb[0].mxu0
      %v800 = vadd.f32 0.0, %v799
      %v801 = vpop.f32.mrb[0].mxu0
      %v802 = vadd.f32 0.0, %v801
      %v803 = vpop.f32.mrb[0].mxu0
      %v804 = vadd.f32 0.0, %v803
      %805 = vmatprep.mubr.bf16.mxu0 0
      %806 = vmatmul.mubr.bf16.gmra.mrb[0].mxu0 %v369
      %v807 = vpop.f32.mrb[0].mxu0
      %v808 = vadd.f32 0.0, %v807
      %v809 = vpop.f32.mrb[0].mxu0
      %v810 = vadd.f32 0.0, %v809
      %v811 = vpop.f32.mrb[0].mxu0
      %v812 = vadd.f32 0.0, %v811
      %v813 = vpop.f32.mrb[0].mxu0
      %v814 = vadd.f32 0.0, %v813
      %815 = vmatprep.mubr.bf16.mxu0 0
      %816 = vmatmul.mubr.bf16.gmra.mrb[0].mxu0 %v372
      %v817 = vpop.f32.mrb[0].mxu0
      %v818 = vadd.f32 0.0, %v817
      %v819 = vpop.f32.mrb[0].mxu0
      %v820 = vadd.f32 0.0, %v819
      %v821 = vpop.f32.mrb[0].mxu0
      %v822 = vadd.f32 0.0, %v821
      %v823 = vpop.f32.mrb[0].mxu0
      %v824 = vadd.f32 0.0, %v823
      %825 = vdwg.mxu0
      %v826 = vmax.f32 %v409, %v411
      %827 = vmax.xlane.f32.xlu0 %v826
      %v828 = vpop.xlane.xlu0 %827
      %v829 = vmax.f32 %v413, %v415
      %830 = vmax.xlane.f32.xlu0 %v829
      %v831 = vpop.xlane.xlu0 %830
      %v832 = vmax.f32 %v419, %v421
      %833 = vmax.xlane.f32.xlu0 %v832
      %v834 = vpop.xlane.xlu0 %833
      %v835 = vmax.f32 %v423, %v425
      %836 = vmax.xlane.f32.xlu0 %v835
      %v837 = vpop.xlane.xlu0 %836
      %v838 = vmax.f32 %v429, %v431
      %839 = vmax.xlane.f32.xlu0 %v838
      %v840 = vpop.xlane.xlu0 %839
      %v841 = vmax.f32 %v433, %v435
      %842 = vmax.xlane.f32.xlu0 %v841
      %v843 = vpop.xlane.xlu0 %842
      %v844 = vmax.f32 %v439, %v441
      %845 = vmax.xlane.f32.xlu0 %v844
      %v846 = vpop.xlane.xlu0 %845
      %v847 = vmax.f32 %v443, %v445
      %848 = vmax.xlane.f32.xlu0 %v847
      %v849 = vpop.xlane.xlu0 %848
      %v850 = vmax.f32 %v449, %v451
      %851 = vmax.xlane.f32.xlu0 %v850
      %v852 = vpop.xlane.xlu0 %851
      %v853 = vmax.f32 %v453, %v455
      %854 = vmax.xlane.f32.xlu0 %v853
      %v855 = vpop.xlane.xlu0 %854
      %v856 = vmax.f32 %v459, %v461
      %857 = vmax.xlane.f32.xlu0 %v856
      %v858 = vpop.xlane.xlu0 %857
      %v859 = vmax.f32 %v463, %v465
      %860 = vmax.xlane.f32.xlu0 %v859
      %v861 = vpop.xlane.xlu0 %860
      %v862 = vmax.f32 %v469, %v471
      %863 = vmax.xlane.f32.xlu0 %v862
      %v864 = vpop.xlane.xlu0 %863
      %v865 = vmax.f32 %v473, %v475
      %866 = vmax.xlane.f32.xlu0 %v865
      %v867 = vpop.xlane.xlu0 %866
      %v868 = vmax.f32 %v479, %v481
      %869 = vmax.xlane.f32.xlu0 %v868
      %v870 = vpop.xlane.xlu0 %869
      %v871 = vmax.f32 %v483, %v485
      %872 = vmax.xlane.f32.xlu0 %v871
      %v873 = vpop.xlane.xlu0 %872
      %v874 = vsub.f32 %v409, %v828
      %v875 = vsub.f32 %v411, %v828
      %v876 = vsub.f32 %v413, %v831
      %v877 = vsub.f32 %v415, %v831
      %v878 = vsub.f32 %v419, %v834
      %v879 = vsub.f32 %v421, %v834
      %v880 = vsub.f32 %v423, %v837
      %v881 = vsub.f32 %v425, %v837
      %v882 = vsub.f32 %v429, %v840
      %v883 = vsub.f32 %v431, %v840
      %v884 = vsub.f32 %v433, %v843
      %v885 = vsub.f32 %v435, %v843
      %v886 = vsub.f32 %v439, %v846
      %v887 = vsub.f32 %v441, %v846
      %v888 = vsub.f32 %v443, %v849
      %v889 = vsub.f32 %v445, %v849
      %v890 = vsub.f32 %v449, %v852
      %v891 = vsub.f32 %v451, %v852
      %v892 = vsub.f32 %v453, %v855
      %v893 = vsub.f32 %v455, %v855
      %v894 = vsub.f32 %v459, %v858
      %v895 = vsub.f32 %v461, %v858
      %v896 = vsub.f32 %v463, %v861
      %v897 = vsub.f32 %v465, %v861
      %v898 = vsub.f32 %v469, %v864
      %v899 = vsub.f32 %v471, %v864
      %v900 = vsub.f32 %v473, %v867
      %v901 = vsub.f32 %v475, %v867
      %v902 = vsub.f32 %v479, %v870
      %v903 = vsub.f32 %v481, %v870
      %v904 = vsub.f32 %v483, %v873
      %v905 = vsub.f32 %v485, %v873
      %v906 = vmul.f32 %v874, 1.442695
      %v907 = vpow.pop %v906
      %v908 = vmul.f32 %v875, 1.442695
      %v909 = vpow.pop %v908
      %v910 = vmul.f32 %v876, 1.442695
      %v911 = vpow.pop %v910
      %v912 = vmul.f32 %v877, 1.442695
      %v913 = vpow.pop %v912
      %v914 = vmul.f32 %v878, 1.442695
      %v915 = vpow.pop %v914
      %v916 = vmul.f32 %v879, 1.442695
      %v917 = vpow.pop %v916
      %v918 = vmul.f32 %v880, 1.442695
      %v919 = vpow.pop %v918
      %v920 = vmul.f32 %v881, 1.442695
      %v921 = vpow.pop %v920
      %v922 = vmul.f32 %v882, 1.442695
      %v923 = vpow.pop %v922
      %v924 = vmul.f32 %v883, 1.442695
      %v925 = vpow.pop %v924
      %v926 = vmul.f32 %v884, 1.442695
      %v927 = vpow.pop %v926
      %v928 = vmul.f32 %v885, 1.442695
      %v929 = vpow.pop %v928
      %v930 = vmul.f32 %v886, 1.442695
      %v931 = vpow.pop %v930
      %v932 = vmul.f32 %v887, 1.442695
      %v933 = vpow.pop %v932
      %v934 = vmul.f32 %v888, 1.442695
      %v935 = vpow.pop %v934
      %v936 = vmul.f32 %v889, 1.442695
      %v937 = vpow.pop %v936
      %v938 = vmul.f32 %v890, 1.442695
      %v939 = vpow.pop %v938
      %v940 = vmul.f32 %v891, 1.442695
      %v941 = vpow.pop %v940
      %v942 = vmul.f32 %v892, 1.442695
      %v943 = vpow.pop %v942
      %v944 = vmul.f32 %v893, 1.442695
      %v945 = vpow.pop %v944
      %v946 = vmul.f32 %v894, 1.442695
      %v947 = vpow.pop %v946
      %v948 = vmul.f32 %v895, 1.442695
      %v949 = vpow.pop %v948
      %v950 = vmul.f32 %v896, 1.442695
      %v951 = vpow.pop %v950
      %v952 = vmul.f32 %v897, 1.442695
      %v953 = vpow.pop %v952
      %v954 = vmul.f32 %v898, 1.442695
      %v955 = vpow.pop %v954
      %v956 = vmul.f32 %v899, 1.442695
      %v957 = vpow.pop %v956
      %v958 = vmul.f32 %v900, 1.442695
      %v959 = vpow.pop %v958
      %v960 = vmul.f32 %v901, 1.442695
      %v961 = vpow.pop %v960
      %v962 = vmul.f32 %v902, 1.442695
      %v963 = vpow.pop %v962
      %v964 = vmul.f32 %v903, 1.442695
      %v965 = vpow.pop %v964
      %v966 = vmul.f32 %v904, 1.442695
      %v967 = vpow.pop %v966
      %v968 = vmul.f32 %v905, 1.442695
      %v969 = vpow.pop %v968
      %v970 = vadd.f32 %v907, %v909
      %971 = vadd.xlane.f32.xlu0 %v970
      %v972 = vpop.xlane.xlu0 %971
      %v973 = vadd.f32 %v911, %v913
      %974 = vadd.xlane.f32.xlu0 %v973
      %v975 = vpop.xlane.xlu0 %974
      %v976 = vadd.f32 %v915, %v917
      %977 = vadd.xlane.f32.xlu0 %v976
      %v978 = vpop.xlane.xlu0 %977
      %v979 = vadd.f32 %v919, %v921
      %980 = vadd.xlane.f32.xlu0 %v979
      %v981 = vpop.xlane.xlu0 %980
      %v982 = vadd.f32 %v923, %v925
      %983 = vadd.xlane.f32.xlu0 %v982
      %v984 = vpop.xlane.xlu0 %983
      %v985 = vadd.f32 %v927, %v929
      %986 = vadd.xlane.f32.xlu0 %v985
      %v987 = vpop.xlane.xlu0 %986
      %v988 = vadd.f32 %v931, %v933
      %989 = vadd.xlane.f32.xlu0 %v988
      %v990 = vpop.xlane.xlu0 %989
      %v991 = vadd.f32 %v935, %v937
      %992 = vadd.xlane.f32.xlu0 %v991
      %v993 = vpop.xlane.xlu0 %992
      %v994 = vadd.f32 %v939, %v941
      %995 = vadd.xlane.f32.xlu0 %v994
      %v996 = vpop.xlane.xlu0 %995
      %v997 = vadd.f32 %v943, %v945
      %998 = vadd.xlane.f32.xlu0 %v997
      %v999 = vpop.xlane.xlu0 %998
      %v1000 = vadd.f32 %v947, %v949
      %1001 = vadd.xlane.f32.xlu0 %v1000
      %v1002 = vpop.xlane.xlu0 %1001
      %v1003 = vadd.f32 %v951, %v953
      %1004 = vadd.xlane.f32.xlu0 %v1003
      %v1005 = vpop.xlane.xlu0 %1004
      %v1006 = vadd.f32 %v955, %v957
      %1007 = vadd.xlane.f32.xlu0 %v1006
      %v1008 = vpop.xlane.xlu0 %1007
      %v1009 = vadd.f32 %v959, %v961
      %1010 = vadd.xlane.f32.xlu0 %v1009
      %v1011 = vpop.xlane.xlu0 %1010
      %v1012 = vadd.f32 %v963, %v965
      %1013 = vadd.xlane.f32.xlu0 %v1012
      %v1014 = vpop.xlane.xlu0 %1013
      %v1015 = vadd.f32 %v967, %v969
      %1016 = vadd.xlane.f32.xlu0 %v1015
      %v1017 = vpop.xlane.xlu0 %1016
      %v1018 = vrcp.pop %v972
      %v1019 = vrcp.pop %v975
      %v1020 = vrcp.pop %v978
      %v1021 = vrcp.pop %v981
      %v1022 = vrcp.pop %v984
      %v1023 = vrcp.pop %v987
      %v1024 = vrcp.pop %v990
      %v1025 = vrcp.pop %v993
      %v1026 = vrcp.pop %v996
      %v1027 = vrcp.pop %v999
      %v1028 = vrcp.pop %v1002
      %v1029 = vrcp.pop %v1005
      %v1030 = vrcp.pop %v1008
      %v1031 = vrcp.pop %v1011
      %v1032 = vrcp.pop %v1014
      %v1033 = vrcp.pop %v1017
      %v1034 = vmul.f32 %v907, %v1018
      %v1035 = vmul.f32 %v909, %v1018
      %v1036 = vmul.f32 %v911, %v1019
      %v1037 = vmul.f32 %v913, %v1019
      %v1038 = vmul.f32 %v915, %v1020
      %v1039 = vmul.f32 %v917, %v1020
      %v1040 = vmul.f32 %v919, %v1021
      %v1041 = vmul.f32 %v921, %v1021
      %v1042 = vmul.f32 %v923, %v1022
      %v1043 = vmul.f32 %v925, %v1022
      %v1044 = vmul.f32 %v927, %v1023
      %v1045 = vmul.f32 %v929, %v1023
      %v1046 = vmul.f32 %v931, %v1024
      %v1047 = vmul.f32 %v933, %v1024
      %v1048 = vmul.f32 %v935, %v1025
      %v1049 = vmul.f32 %v937, %v1025
      %v1050 = vmul.f32 %v939, %v1026
      %v1051 = vmul.f32 %v941, %v1026
      %v1052 = vmul.f32 %v943, %v1027
      %v1053 = vmul.f32 %v945, %v1027
      %v1054 = vmul.f32 %v947, %v1028
      %v1055 = vmul.f32 %v949, %v1028
      %v1056 = vmul.f32 %v951, %v1029
      %v1057 = vmul.f32 %v953, %v1029
      %v1058 = vmul.f32 %v955, %v1030
      %v1059 = vmul.f32 %v957, %v1030
      %v1060 = vmul.f32 %v959, %v1031
      %v1061 = vmul.f32 %v961, %v1031
      %v1062 = vmul.f32 %v963, %v1032
      %v1063 = vmul.f32 %v965, %v1032
      %v1064 = vmul.f32 %v967, %v1033
      %v1065 = vmul.f32 %v969, %v1033
      %v1066 = vpack.c.bf16 %v1036, %v1034
      %v1067 = vpack.c.bf16 %v1037, %v1035
      %v1068 = vpack.c.bf16 %v1040, %v1038
      %v1069 = vpack.c.bf16 %v1041, %v1039
      %v1070 = vpack.c.bf16 %v1044, %v1042
      %v1071 = vpack.c.bf16 %v1045, %v1043
      %v1072 = vpack.c.bf16 %v1048, %v1046
      %v1073 = vpack.c.bf16 %v1049, %v1047
      %v1074 = vpack.c.bf16 %v1052, %v1050
      %v1075 = vpack.c.bf16 %v1053, %v1051
      %v1076 = vpack.c.bf16 %v1056, %v1054
      %v1077 = vpack.c.bf16 %v1057, %v1055
      %v1078 = vpack.c.bf16 %v1060, %v1058
      %v1079 = vpack.c.bf16 %v1061, %v1059
      %v1080 = vpack.c.bf16 %v1064, %v1062
      %v1081 = vpack.c.bf16 %v1065, %v1063
      %v1082 = vmax.f32 %v522, %v524
      %1083 = vmax.xlane.f32.xlu0 %v1082
      %v1084 = vpop.xlane.xlu0 %1083
      %v1085 = vmax.f32 %v526, %v528
      %1086 = vmax.xlane.f32.xlu0 %v1085
      %v1087 = vpop.xlane.xlu0 %1086
      %v1088 = vmax.f32 %v532, %v534
      %1089 = vmax.xlane.f32.xlu0 %v1088
      %v1090 = vpop.xlane.xlu0 %1089
      %v1091 = vmax.f32 %v536, %v538
      %1092 = vmax.xlane.f32.xlu0 %v1091
      %v1093 = vpop.xlane.xlu0 %1092
      %v1094 = vmax.f32 %v542, %v544
      %1095 = vmax.xlane.f32.xlu0 %v1094
      %v1096 = vpop.xlane.xlu0 %1095
      %v1097 = vmax.f32 %v546, %v548
      %1098 = vmax.xlane.f32.xlu0 %v1097
      %v1099 = vpop.xlane.xlu0 %1098
      %v1100 = vmax.f32 %v552, %v554
      %1101 = vmax.xlane.f32.xlu0 %v1100
      %v1102 = vpop.xlane.xlu0 %1101
      %v1103 = vmax.f32 %v556, %v558
      %1104 = vmax.xlane.f32.xlu0 %v1103
      %v1105 = vpop.xlane.xlu0 %1104
      %v1106 = vmax.f32 %v562, %v564
      %1107 = vmax.xlane.f32.xlu0 %v1106
      %v1108 = vpop.xlane.xlu0 %1107
      %v1109 = vmax.f32 %v566, %v568
      %1110 = vmax.xlane.f32.xlu0 %v1109
      %v1111 = vpop.xlane.xlu0 %1110
      %v1112 = vmax.f32 %v572, %v574
      %1113 = vmax.xlane.f32.xlu0 %v1112
      %v1114 = vpop.xlane.xlu0 %1113
      %v1115 = vmax.f32 %v576, %v578
      %1116 = vmax.xlane.f32.xlu0 %v1115
      %v1117 = vpop.xlane.xlu0 %1116
      %v1118 = vmax.f32 %v582, %v584
      %1119 = vmax.xlane.f32.xlu0 %v1118
      %v1120 = vpop.xlane.xlu0 %1119
      %v1121 = vmax.f32 %v586, %v588
      %1122 = vmax.xlane.f32.xlu0 %v1121
      %v1123 = vpop.xlane.xlu0 %1122
      %v1124 = vmax.f32 %v592, %v594
      %1125 = vmax.xlane.f32.xlu0 %v1124
      %v1126 = vpop.xlane.xlu0 %1125
      %v1127 = vmax.f32 %v596, %v598
      %1128 = vmax.xlane.f32.xlu0 %v1127
      %v1129 = vpop.xlane.xlu0 %1128
      %v1130 = vsub.f32 %v522, %v1084
      %v1131 = vsub.f32 %v524, %v1084
      %v1132 = vsub.f32 %v526, %v1087
      %v1133 = vsub.f32 %v528, %v1087
      %v1134 = vsub.f32 %v532, %v1090
      %v1135 = vsub.f32 %v534, %v1090
      %v1136 = vsub.f32 %v536, %v1093
      %v1137 = vsub.f32 %v538, %v1093
      %v1138 = vsub.f32 %v542, %v1096
      %v1139 = vsub.f32 %v544, %v1096
      %v1140 = vsub.f32 %v546, %v1099
      %v1141 = vsub.f32 %v548, %v1099
      %v1142 = vsub.f32 %v552, %v1102
      %v1143 = vsub.f32 %v554, %v1102
      %v1144 = vsub.f32 %v556, %v1105
      %v1145 = vsub.f32 %v558, %v1105
      %v1146 = vsub.f32 %v562, %v1108
      %v1147 = vsub.f32 %v564, %v1108
      %v1148 = vsub.f32 %v566, %v1111
      %v1149 = vsub.f32 %v568, %v1111
      %v1150 = vsub.f32 %v572, %v1114
      %v1151 = vsub.f32 %v574, %v1114
      %v1152 = vsub.f32 %v576, %v1117
      %v1153 = vsub.f32 %v578, %v1117
      %v1154 = vsub.f32 %v582, %v1120
      %v1155 = vsub.f32 %v584, %v1120
      %v1156 = vsub.f32 %v586, %v1123
      %v1157 = vsub.f32 %v588, %v1123
      %v1158 = vsub.f32 %v592, %v1126
      %v1159 = vsub.f32 %v594, %v1126
      %v1160 = vsub.f32 %v596, %v1129
      %v1161 = vsub.f32 %v598, %v1129
      %v1162 = vmul.f32 %v1130, 1.442695
      %v1163 = vpow.pop %v1162
      %v1164 = vmul.f32 %v1131, 1.442695
      %v1165 = vpow.pop %v1164
      %v1166 = vmul.f32 %v1132, 1.442695
      %v1167 = vpow.pop %v1166
      %v1168 = vmul.f32 %v1133, 1.442695
      %v1169 = vpow.pop %v1168
      %v1170 = vmul.f32 %v1134, 1.442695
      %v1171 = vpow.pop %v1170
      %v1172 = vmul.f32 %v1135, 1.442695
      %v1173 = vpow.pop %v1172
      %v1174 = vmul.f32 %v1136, 1.442695
      %v1175 = vpow.pop %v1174
      %v1176 = vmul.f32 %v1137, 1.442695
      %v1177 = vpow.pop %v1176
      %v1178 = vmul.f32 %v1138, 1.442695
      %v1179 = vpow.pop %v1178
      %v1180 = vmul.f32 %v1139, 1.442695
      %v1181 = vpow.pop %v1180
      %v1182 = vmul.f32 %v1140, 1.442695
      %v1183 = vpow.pop %v1182
      %v1184 = vmul.f32 %v1141, 1.442695
      %v1185 = vpow.pop %v1184
      %v1186 = vmul.f32 %v1142, 1.442695
      %v1187 = vpow.pop %v1186
      %v1188 = vmul.f32 %v1143, 1.442695
      %v1189 = vpow.pop %v1188
      %v1190 = vmul.f32 %v1144, 1.442695
      %v1191 = vpow.pop %v1190
      %v1192 = vmul.f32 %v1145, 1.442695
      %v1193 = vpow.pop %v1192
      %v1194 = vmul.f32 %v1146, 1.442695
      %v1195 = vpow.pop %v1194
      %v1196 = vmul.f32 %v1147, 1.442695
      %v1197 = vpow.pop %v1196
      %v1198 = vmul.f32 %v1148, 1.442695
      %v1199 = vpow.pop %v1198
      %v1200 = vmul.f32 %v1149, 1.442695
      %v1201 = vpow.pop %v1200
      %v1202 = vmul.f32 %v1150, 1.442695
      %v1203 = vpow.pop %v1202
      %v1204 = vmul.f32 %v1151, 1.442695
      %v1205 = vpow.pop %v1204
      %v1206 = vmul.f32 %v1152, 1.442695
      %v1207 = vpow.pop %v1206
      %v1208 = vmul.f32 %v1153, 1.442695
      %v1209 = vpow.pop %v1208
      %v1210 = vmul.f32 %v1154, 1.442695
      %v1211 = vpow.pop %v1210
      %v1212 = vmul.f32 %v1155, 1.442695
      %v1213 = vpow.pop %v1212
      %v1214 = vmul.f32 %v1156, 1.442695
      %v1215 = vpow.pop %v1214
      %v1216 = vmul.f32 %v1157, 1.442695
      %v1217 = vpow.pop %v1216
      %v1218 = vmul.f32 %v1158, 1.442695
      %v1219 = vpow.pop %v1218
      %v1220 = vmul.f32 %v1159, 1.442695
      %v1221 = vpow.pop %v1220
      %v1222 = vmul.f32 %v1160, 1.442695
      %v1223 = vpow.pop %v1222
      %v1224 = vmul.f32 %v1161, 1.442695
      %v1225 = vpow.pop %v1224
      %v1226 = vadd.f32 %v1163, %v1165
      %1227 = vadd.xlane.f32.xlu0 %v1226
      %v1228 = vpop.xlane.xlu0 %1227
      %v1229 = vadd.f32 %v1167, %v1169
      %1230 = vadd.xlane.f32.xlu0 %v1229
      %v1231 = vpop.xlane.xlu0 %1230
      %v1232 = vadd.f32 %v1171, %v1173
      %1233 = vadd.xlane.f32.xlu0 %v1232
      %v1234 = vpop.xlane.xlu0 %1233
      %v1235 = vadd.f32 %v1175, %v1177
      %1236 = vadd.xlane.f32.xlu0 %v1235
      %v1237 = vpop.xlane.xlu0 %1236
      %v1238 = vadd.f32 %v1179, %v1181
      %1239 = vadd.xlane.f32.xlu0 %v1238
      %v1240 = vpop.xlane.xlu0 %1239
      %v1241 = vadd.f32 %v1183, %v1185
      %1242 = vadd.xlane.f32.xlu0 %v1241
      %v1243 = vpop.xlane.xlu0 %1242
      %v1244 = vadd.f32 %v1187, %v1189
      %1245 = vadd.xlane.f32.xlu0 %v1244
      %v1246 = vpop.xlane.xlu0 %1245
      %v1247 = vadd.f32 %v1191, %v1193
      %1248 = vadd.xlane.f32.xlu0 %v1247
      %v1249 = vpop.xlane.xlu0 %1248
      %v1250 = vadd.f32 %v1195, %v1197
      %1251 = vadd.xlane.f32.xlu0 %v1250
      %v1252 = vpop.xlane.xlu0 %1251
      %v1253 = vadd.f32 %v1199, %v1201
      %1254 = vadd.xlane.f32.xlu0 %v1253
      %v1255 = vpop.xlane.xlu0 %1254
      %v1256 = vadd.f32 %v1203, %v1205
      %1257 = vadd.xlane.f32.xlu0 %v1256
      %v1258 = vpop.xlane.xlu0 %1257
      %v1259 = vadd.f32 %v1207, %v1209
      %1260 = vadd.xlane.f32.xlu0 %v1259
      %v1261 = vpop.xlane.xlu0 %1260
      %v1262 = vadd.f32 %v1211, %v1213
      %1263 = vadd.xlane.f32.xlu0 %v1262
      %v1264 = vpop.xlane.xlu0 %1263
      %v1265 = vadd.f32 %v1215, %v1217
      %1266 = vadd.xlane.f32.xlu0 %v1265
      %v1267 = vpop.xlane.xlu0 %1266
      %v1268 = vadd.f32 %v1219, %v1221
      %1269 = vadd.xlane.f32.xlu0 %v1268
      %v1270 = vpop.xlane.xlu0 %1269
      %v1271 = vadd.f32 %v1223, %v1225
      %1272 = vadd.xlane.f32.xlu0 %v1271
      %v1273 = vpop.xlane.xlu0 %1272
      %v1274 = vrcp.pop %v1228
      %v1275 = vrcp.pop %v1231
      %v1276 = vrcp.pop %v1234
      %v1277 = vrcp.pop %v1237
      %v1278 = vrcp.pop %v1240
      %v1279 = vrcp.pop %v1243
      %v1280 = vrcp.pop %v1246
      %v1281 = vrcp.pop %v1249
      %v1282 = vrcp.pop %v1252
      %v1283 = vrcp.pop %v1255
      %v1284 = vrcp.pop %v1258
      %v1285 = vrcp.pop %v1261
      %v1286 = vrcp.pop %v1264
      %v1287 = vrcp.pop %v1267
      %v1288 = vrcp.pop %v1270
      %v1289 = vrcp.pop %v1273
      %v1290 = vmul.f32 %v1163, %v1274
      %v1291 = vmul.f32 %v1165, %v1274
      %v1292 = vmul.f32 %v1167, %v1275
      %v1293 = vmul.f32 %v1169, %v1275
      %v1294 = vmul.f32 %v1171, %v1276
      %v1295 = vmul.f32 %v1173, %v1276
      %v1296 = vmul.f32 %v1175, %v1277
      %v1297 = vmul.f32 %v1177, %v1277
      %v1298 = vmul.f32 %v1179, %v1278
      %v1299 = vmul.f32 %v1181, %v1278
      %v1300 = vmul.f32 %v1183, %v1279
      %v1301 = vmul.f32 %v1185, %v1279
      %v1302 = vmul.f32 %v1187, %v1280
      %v1303 = vmul.f32 %v1189, %v1280
      %v1304 = vmul.f32 %v1191, %v1281
      %v1305 = vmul.f32 %v1193, %v1281
      %v1306 = vmul.f32 %v1195, %v1282
      %v1307 = vmul.f32 %v1197, %v1282
      %v1308 = vmul.f32 %v1199, %v1283
      %v1309 = vmul.f32 %v1201, %v1283
      %v1310 = vmul.f32 %v1203, %v1284
      %v1311 = vmul.f32 %v1205, %v1284
      %v1312 = vmul.f32 %v1207, %v1285
      %v1313 = vmul.f32 %v1209, %v1285
      %v1314 = vmul.f32 %v1211, %v1286
      %v1315 = vmul.f32 %v1213, %v1286
      %v1316 = vmul.f32 %v1215, %v1287
      %v1317 = vmul.f32 %v1217, %v1287
      %v1318 = vmul.f32 %v1219, %v1288
      %v1319 = vmul.f32 %v1221, %v1288
      %v1320 = vmul.f32 %v1223, %v1289
      %v1321 = vmul.f32 %v1225, %v1289
      %v1322 = vpack.c.bf16 %v1292, %v1290
      %v1323 = vpack.c.bf16 %v1293, %v1291
      %v1324 = vpack.c.bf16 %v1296, %v1294
      %v1325 = vpack.c.bf16 %v1297, %v1295
      %v1326 = vpack.c.bf16 %v1300, %v1298
      %v1327 = vpack.c.bf16 %v1301, %v1299
      %v1328 = vpack.c.bf16 %v1304, %v1302
      %v1329 = vpack.c.bf16 %v1305, %v1303
      %v1330 = vpack.c.bf16 %v1308, %v1306
      %v1331 = vpack.c.bf16 %v1309, %v1307
      %v1332 = vpack.c.bf16 %v1312, %v1310
      %v1333 = vpack.c.bf16 %v1313, %v1311
      %v1334 = vpack.c.bf16 %v1316, %v1314
      %v1335 = vpack.c.bf16 %v1317, %v1315
      %v1336 = vpack.c.bf16 %v1320, %v1318
      %v1337 = vpack.c.bf16 %v1321, %v1319
      %v1338 = vmax.f32 %v635, %v637
      %1339 = vmax.xlane.f32.xlu0 %v1338
      %v1340 = vpop.xlane.xlu0 %1339
      %v1341 = vmax.f32 %v639, %v641
      %1342 = vmax.xlane.f32.xlu0 %v1341
      %v1343 = vpop.xlane.xlu0 %1342
      %v1344 = vmax.f32 %v645, %v647
      %1345 = vmax.xlane.f32.xlu0 %v1344
      %v1346 = vpop.xlane.xlu0 %1345
      %v1347 = vmax.f32 %v649, %v651
      %1348 = vmax.xlane.f32.xlu0 %v1347
      %v1349 = vpop.xlane.xlu0 %1348
      %v1350 = vmax.f32 %v655, %v657
      %1351 = vmax.xlane.f32.xlu0 %v1350
      %v1352 = vpop.xlane.xlu0 %1351
      %v1353 = vmax.f32 %v659, %v661
      %1354 = vmax.xlane.f32.xlu0 %v1353
      %v1355 = vpop.xlane.xlu0 %1354
      %v1356 = vmax.f32 %v665, %v667
      %1357 = vmax.xlane.f32.xlu0 %v1356
      %v1358 = vpop.xlane.xlu0 %1357
      %v1359 = vmax.f32 %v669, %v671
      %1360 = vmax.xlane.f32.xlu0 %v1359
      %v1361 = vpop.xlane.xlu0 %1360
      %v1362 = vmax.f32 %v675, %v677
      %1363 = vmax.xlane.f32.xlu0 %v1362
      %v1364 = vpop.xlane.xlu0 %1363
      %v1365 = vmax.f32 %v679, %v681
      %1366 = vmax.xlane.f32.xlu0 %v1365
      %v1367 = vpop.xlane.xlu0 %1366
      %v1368 = vmax.f32 %v685, %v687
      %1369 = vmax.xlane.f32.xlu0 %v1368
      %v1370 = vpop.xlane.xlu0 %1369
      %v1371 = vmax.f32 %v689, %v691
      %1372 = vmax.xlane.f32.xlu0 %v1371
      %v1373 = vpop.xlane.xlu0 %1372
      %v1374 = vmax.f32 %v695, %v697
      %1375 = vmax.xlane.f32.xlu0 %v1374
      %v1376 = vpop.xlane.xlu0 %1375
      %v1377 = vmax.f32 %v699, %v701
      %1378 = vmax.xlane.f32.xlu0 %v1377
      %v1379 = vpop.xlane.xlu0 %1378
      %v1380 = vmax.f32 %v705, %v707
      %1381 = vmax.xlane.f32.xlu0 %v1380
      %v1382 = vpop.xlane.xlu0 %1381
      %v1383 = vmax.f32 %v709, %v711
      %1384 = vmax.xlane.f32.xlu0 %v1383
      %v1385 = vpop.xlane.xlu0 %1384
      %v1386 = vsub.f32 %v635, %v1340
      %v1387 = vsub.f32 %v637, %v1340
      %v1388 = vsub.f32 %v639, %v1343
      %v1389 = vsub.f32 %v641, %v1343
      %v1390 = vsub.f32 %v645, %v1346
      %v1391 = vsub.f32 %v647, %v1346
      %v1392 = vsub.f32 %v649, %v1349
      %v1393 = vsub.f32 %v651, %v1349
      %v1394 = vsub.f32 %v655, %v1352
      %v1395 = vsub.f32 %v657, %v1352
      %v1396 = vsub.f32 %v659, %v1355
      %v1397 = vsub.f32 %v661, %v1355
      %v1398 = vsub.f32 %v665, %v1358
      %v1399 = vsub.f32 %v667, %v1358
      %v1400 = vsub.f32 %v669, %v1361
      %v1401 = vsub.f32 %v671, %v1361
      %v1402 = vsub.f32 %v675, %v1364
      %v1403 = vsub.f32 %v677, %v1364
      %v1404 = vsub.f32 %v679, %v1367
      %v1405 = vsub.f32 %v681, %v1367
      %v1406 = vsub.f32 %v685, %v1370
      %v1407 = vsub.f32 %v687, %v1370
      %v1408 = vsub.f32 %v689, %v1373
      %v1409 = vsub.f32 %v691, %v1373
      %v1410 = vsub.f32 %v695, %v1376
      %v1411 = vsub.f32 %v697, %v1376
      %v1412 = vsub.f32 %v699, %v1379
      %v1413 = vsub.f32 %v701, %v1379
      %v1414 = vsub.f32 %v705, %v1382
      %v1415 = vsub.f32 %v707, %v1382
      %v1416 = vsub.f32 %v709, %v1385
      %v1417 = vsub.f32 %v711, %v1385
      %v1418 = vmul.f32 %v1386, 1.442695
      %v1419 = vpow.pop %v1418
      %v1420 = vmul.f32 %v1387, 1.442695
      %v1421 = vpow.pop %v1420
      %v1422 = vmul.f32 %v1388, 1.442695
      %v1423 = vpow.pop %v1422
      %v1424 = vmul.f32 %v1389, 1.442695
      %v1425 = vpow.pop %v1424
      %v1426 = vmul.f32 %v1390, 1.442695
      %v1427 = vpow.pop %v1426
      %v1428 = vmul.f32 %v1391, 1.442695
      %v1429 = vpow.pop %v1428
      %v1430 = vmul.f32 %v1392, 1.442695
      %v1431 = vpow.pop %v1430
      %v1432 = vmul.f32 %v1393, 1.442695
      %v1433 = vpow.pop %v1432
      %v1434 = vmul.f32 %v1394, 1.442695
      %v1435 = vpow.pop %v1434
      %v1436 = vmul.f32 %v1395, 1.442695
      %v1437 = vpow.pop %v1436
      %v1438 = vmul.f32 %v1396, 1.442695
      %v1439 = vpow.pop %v1438
      %v1440 = vmul.f32 %v1397, 1.442695
      %v1441 = vpow.pop %v1440
      %v1442 = vmul.f32 %v1398, 1.442695
      %v1443 = vpow.pop %v1442
      %v1444 = vmul.f32 %v1399, 1.442695
      %v1445 = vpow.pop %v1444
      %v1446 = vmul.f32 %v1400, 1.442695
      %v1447 = vpow.pop %v1446
      %v1448 = vmul.f32 %v1401, 1.442695
      %v1449 = vpow.pop %v1448
      %v1450 = vmul.f32 %v1402, 1.442695
      %v1451 = vpow.pop %v1450
      %v1452 = vmul.f32 %v1403, 1.442695
      %v1453 = vpow.pop %v1452
      %v1454 = vmul.f32 %v1404, 1.442695
      %v1455 = vpow.pop %v1454
      %v1456 = vmul.f32 %v1405, 1.442695
      %v1457 = vpow.pop %v1456
      %v1458 = vmul.f32 %v1406, 1.442695
      %v1459 = vpow.pop %v1458
      %v1460 = vmul.f32 %v1407, 1.442695
      %v1461 = vpow.pop %v1460
      %v1462 = vmul.f32 %v1408, 1.442695
      %v1463 = vpow.pop %v1462
      %v1464 = vmul.f32 %v1409, 1.442695
      %v1465 = vpow.pop %v1464
      %v1466 = vmul.f32 %v1410, 1.442695
      %v1467 = vpow.pop %v1466
      %v1468 = vmul.f32 %v1411, 1.442695
      %v1469 = vpow.pop %v1468
      %v1470 = vmul.f32 %v1412, 1.442695
      %v1471 = vpow.pop %v1470
      %v1472 = vmul.f32 %v1413, 1.442695
      %v1473 = vpow.pop %v1472
      %v1474 = vmul.f32 %v1414, 1.442695
      %v1475 = vpow.pop %v1474
      %v1476 = vmul.f32 %v1415, 1.442695
      %v1477 = vpow.pop %v1476
      %v1478 = vmul.f32 %v1416, 1.442695
      %v1479 = vpow.pop %v1478
      %v1480 = vmul.f32 %v1417, 1.442695
      %v1481 = vpow.pop %v1480
      %v1482 = vadd.f32 %v1419, %v1421
      %1483 = vadd.xlane.f32.xlu0 %v1482
      %v1484 = vpop.xlane.xlu0 %1483
      %v1485 = vadd.f32 %v1423, %v1425
      %1486 = vadd.xlane.f32.xlu0 %v1485
      %v1487 = vpop.xlane.xlu0 %1486
      %v1488 = vadd.f32 %v1427, %v1429
      %1489 = vadd.xlane.f32.xlu0 %v1488
      %v1490 = vpop.xlane.xlu0 %1489
      %v1491 = vadd.f32 %v1431, %v1433
      %1492 = vadd.xlane.f32.xlu0 %v1491
      %v1493 = vpop.xlane.xlu0 %1492
      %v1494 = vadd.f32 %v1435, %v1437
      %1495 = vadd.xlane.f32.xlu0 %v1494
      %v1496 = vpop.xlane.xlu0 %1495
      %v1497 = vadd.f32 %v1439, %v1441
      %1498 = vadd.xlane.f32.xlu0 %v1497
      %v1499 = vpop.xlane.xlu0 %1498
      %v1500 = vadd.f32 %v1443, %v1445
      %1501 = vadd.xlane.f32.xlu0 %v1500
      %v1502 = vpop.xlane.xlu0 %1501
      %v1503 = vadd.f32 %v1447, %v1449
      %1504 = vadd.xlane.f32.xlu0 %v1503
      %v1505 = vpop.xlane.xlu0 %1504
      %v1506 = vadd.f32 %v1451, %v1453
      %1507 = vadd.xlane.f32.xlu0 %v1506
      %v1508 = vpop.xlane.xlu0 %1507
      %v1509 = vadd.f32 %v1455, %v1457
      %1510 = vadd.xlane.f32.xlu0 %v1509
      %v1511 = vpop.xlane.xlu0 %1510
      %v1512 = vadd.f32 %v1459, %v1461
      %1513 = vadd.xlane.f32.xlu0 %v1512
      %v1514 = vpop.xlane.xlu0 %1513
      %v1515 = vadd.f32 %v1463, %v1465
      %1516 = vadd.xlane.f32.xlu0 %v1515
      %v1517 = vpop.xlane.xlu0 %1516
      %v1518 = vadd.f32 %v1467, %v1469
      %1519 = vadd.xlane.f32.xlu0 %v1518
      %v1520 = vpop.xlane.xlu0 %1519
      %v1521 = vadd.f32 %v1471, %v1473
      %1522 = vadd.xlane.f32.xlu0 %v1521
      %v1523 = vpop.xlane.xlu0 %1522
      %v1524 = vadd.f32 %v1475, %v1477
      %1525 = vadd.xlane.f32.xlu0 %v1524
      %v1526 = vpop.xlane.xlu0 %1525
      %v1527 = vadd.f32 %v1479, %v1481
      %1528 = vadd.xlane.f32.xlu0 %v1527
      %v1529 = vpop.xlane.xlu0 %1528
      %v1530 = vrcp.pop %v1484
      %v1531 = vrcp.pop %v1487
      %v1532 = vrcp.pop %v1490
      %v1533 = vrcp.pop %v1493
      %v1534 = vrcp.pop %v1496
      %v1535 = vrcp.pop %v1499
      %v1536 = vrcp.pop %v1502
      %v1537 = vrcp.pop %v1505
      %v1538 = vrcp.pop %v1508
      %v1539 = vrcp.pop %v1511
      %v1540 = vrcp.pop %v1514
      %v1541 = vrcp.pop %v1517
      %v1542 = vrcp.pop %v1520
      %v1543 = vrcp.pop %v1523
      %v1544 = vrcp.pop %v1526
      %v1545 = vrcp.pop %v1529
      %v1546 = vmul.f32 %v1419, %v1530
      %v1547 = vmul.f32 %v1421, %v1530
      %v1548 = vmul.f32 %v1423, %v1531
      %v1549 = vmul.f32 %v1425, %v1531
      %v1550 = vmul.f32 %v1427, %v1532
      %v1551 = vmul.f32 %v1429, %v1532
      %v1552 = vmul.f32 %v1431, %v1533
      %v1553 = vmul.f32 %v1433, %v1533
      %v1554 = vmul.f32 %v1435, %v1534
      %v1555 = vmul.f32 %v1437, %v1534
      %v1556 = vmul.f32 %v1439, %v1535
      %v1557 = vmul.f32 %v1441, %v1535
      %v1558 = vmul.f32 %v1443, %v1536
      %v1559 = vmul.f32 %v1445, %v1536
      %v1560 = vmul.f32 %v1447, %v1537
      %v1561 = vmul.f32 %v1449, %v1537
      %v1562 = vmul.f32 %v1451, %v1538
      %v1563 = vmul.f32 %v1453, %v1538
      %v1564 = vmul.f32 %v1455, %v1539
      %v1565 = vmul.f32 %v1457, %v1539
      %v1566 = vmul.f32 %v1459, %v1540
      %v1567 = vmul.f32 %v1461, %v1540
      %v1568 = vmul.f32 %v1463, %v1541
      %v1569 = vmul.f32 %v1465, %v1541
      %v1570 = vmul.f32 %v1467, %v1542
      %v1571 = vmul.f32 %v1469, %v1542
      %v1572 = vmul.f32 %v1471, %v1543
      %v1573 = vmul.f32 %v1473, %v1543
      %v1574 = vmul.f32 %v1475, %v1544
      %v1575 = vmul.f32 %v1477, %v1544
      %v1576 = vmul.f32 %v1479, %v1545
      %v1577 = vmul.f32 %v1481, %v1545
      %v1578 = vpack.c.bf16 %v1548, %v1546
      %v1579 = vpack.c.bf16 %v1549, %v1547
      %v1580 = vpack.c.bf16 %v1552, %v1550
      %v1581 = vpack.c.bf16 %v1553, %v1551
      %v1582 = vpack.c.bf16 %v1556, %v1554
      %v1583 = vpack.c.bf16 %v1557, %v1555
      %v1584 = vpack.c.bf16 %v1560, %v1558
      %v1585 = vpack.c.bf16 %v1561, %v1559
      %v1586 = vpack.c.bf16 %v1564, %v1562
      %v1587 = vpack.c.bf16 %v1565, %v1563
      %v1588 = vpack.c.bf16 %v1568, %v1566
      %v1589 = vpack.c.bf16 %v1569, %v1567
      %v1590 = vpack.c.bf16 %v1572, %v1570
      %v1591 = vpack.c.bf16 %v1573, %v1571
      %v1592 = vpack.c.bf16 %v1576, %v1574
      %v1593 = vpack.c.bf16 %v1577, %v1575
      %v1594 = vmax.f32 %v748, %v750
      %1595 = vmax.xlane.f32.xlu0 %v1594
      %v1596 = vpop.xlane.xlu0 %1595
      %v1597 = vmax.f32 %v752, %v754
      %1598 = vmax.xlane.f32.xlu0 %v1597
      %v1599 = vpop.xlane.xlu0 %1598
      %v1600 = vmax.f32 %v758, %v760
      %1601 = vmax.xlane.f32.xlu0 %v1600
      %v1602 = vpop.xlane.xlu0 %1601
      %v1603 = vmax.f32 %v762, %v764
      %1604 = vmax.xlane.f32.xlu0 %v1603
      %v1605 = vpop.xlane.xlu0 %1604
      %v1606 = vmax.f32 %v768, %v770
      %1607 = vmax.xlane.f32.xlu0 %v1606
      %v1608 = vpop.xlane.xlu0 %1607
      %v1609 = vmax.f32 %v772, %v774
      %1610 = vmax.xlane.f32.xlu0 %v1609
      %v1611 = vpop.xlane.xlu0 %1610
      %v1612 = vmax.f32 %v778, %v780
      %1613 = vmax.xlane.f32.xlu0 %v1612
      %v1614 = vpop.xlane.xlu0 %1613
      %v1615 = vmax.f32 %v782, %v784
      %1616 = vmax.xlane.f32.xlu0 %v1615
      %v1617 = vpop.xlane.xlu0 %1616
      %v1618 = vmax.f32 %v788, %v790
      %1619 = vmax.xlane.f32.xlu0 %v1618
      %v1620 = vpop.xlane.xlu0 %1619
      %v1621 = vmax.f32 %v792, %v794
      %1622 = vmax.xlane.f32.xlu0 %v1621
      %v1623 = vpop.xlane.xlu0 %1622
      %v1624 = vmax.f32 %v798, %v800
      %1625 = vmax.xlane.f32.xlu0 %v1624
      %v1626 = vpop.xlane.xlu0 %1625
      %v1627 = vmax.f32 %v802, %v804
      %1628 = vmax.xlane.f32.xlu0 %v1627
      %v1629 = vpop.xlane.xlu0 %1628
      %v1630 = vmax.f32 %v808, %v810
      %1631 = vmax.xlane.f32.xlu0 %v1630
      %v1632 = vpop.xlane.xlu0 %1631
      %v1633 = vmax.f32 %v812, %v814
      %1634 = vmax.xlane.f32.xlu0 %v1633
      %v1635 = vpop.xlane.xlu0 %1634
      %v1636 = vmax.f32 %v818, %v820
      %1637 = vmax.xlane.f32.xlu0 %v1636
      %v1638 = vpop.xlane.xlu0 %1637
      %v1639 = vmax.f32 %v822, %v824
      %1640 = vmax.xlane.f32.xlu0 %v1639
      %v1641 = vpop.xlane.xlu0 %1640
      %v1642 = vsub.f32 %v748, %v1596
      %v1643 = vsub.f32 %v750, %v1596
      %v1644 = vsub.f32 %v752, %v1599
      %v1645 = vsub.f32 %v754, %v1599
      %v1646 = vsub.f32 %v758, %v1602
      %v1647 = vsub.f32 %v760, %v1602
      %v1648 = vsub.f32 %v762, %v1605
      %v1649 = vsub.f32 %v764, %v1605
      %v1650 = vsub.f32 %v768, %v1608
      %v1651 = vsub.f32 %v770, %v1608
      %v1652 = vsub.f32 %v772, %v1611
      %v1653 = vsub.f32 %v774, %v1611
      %v1654 = vsub.f32 %v778, %v1614
      %v1655 = vsub.f32 %v780, %v1614
      %v1656 = vsub.f32 %v782, %v1617
      %v1657 = vsub.f32 %v784, %v1617
      %v1658 = vsub.f32 %v788, %v1620
      %v1659 = vsub.f32 %v790, %v1620
      %v1660 = vsub.f32 %v792, %v1623
      %v1661 = vsub.f32 %v794, %v1623
      %v1662 = vsub.f32 %v798, %v1626
      %v1663 = vsub.f32 %v800, %v1626
      %v1664 = vsub.f32 %v802, %v1629
      %v1665 = vsub.f32 %v804, %v1629
      %v1666 = vsub.f32 %v808, %v1632
      %v1667 = vsub.f32 %v810, %v1632
      %v1668 = vsub.f32 %v812, %v1635
      %v1669 = vsub.f32 %v814, %v1635
      %v1670 = vsub.f32 %v818, %v1638
      %v1671 = vsub.f32 %v820, %v1638
      %v1672 = vsub.f32 %v822, %v1641
      %v1673 = vsub.f32 %v824, %v1641
      %v1674 = vmul.f32 %v1642, 1.442695
      %v1675 = vpow.pop %v1674
      %v1676 = vmul.f32 %v1643, 1.442695
      %v1677 = vpow.pop %v1676
      %v1678 = vmul.f32 %v1644, 1.442695
      %v1679 = vpow.pop %v1678
      %v1680 = vmul.f32 %v1645, 1.442695
      %v1681 = vpow.pop %v1680
      %v1682 = vmul.f32 %v1646, 1.442695
      %v1683 = vpow.pop %v1682
      %v1684 = vmul.f32 %v1647, 1.442695
      %v1685 = vpow.pop %v1684
      %v1686 = vmul.f32 %v1648, 1.442695
      %v1687 = vpow.pop %v1686
      %v1688 = vmul.f32 %v1649, 1.442695
      %v1689 = vpow.pop %v1688
      %v1690 = vmul.f32 %v1650, 1.442695
      %v1691 = vpow.pop %v1690
      %v1692 = vmul.f32 %v1651, 1.442695
      %v1693 = vpow.pop %v1692
      %v1694 = vmul.f32 %v1652, 1.442695
      %v1695 = vpow.pop %v1694
      %v1696 = vmul.f32 %v1653, 1.442695
      %v1697 = vpow.pop %v1696
      %v1698 = vmul.f32 %v1654, 1.442695
      %v1699 = vpow.pop %v1698
      %v1700 = vmul.f32 %v1655, 1.442695
      %v1701 = vpow.pop %v1700
      %v1702 = vmul.f32 %v1656, 1.442695
      %v1703 = vpow.pop %v1702
      %v1704 = vmul.f32 %v1657, 1.442695
      %v1705 = vpow.pop %v1704
      %v1706 = vmul.f32 %v1658, 1.442695
      %v1707 = vpow.pop %v1706
      %v1708 = vmul.f32 %v1659, 1.442695
      %v1709 = vpow.pop %v1708
      %v1710 = vmul.f32 %v1660, 1.442695
      %v1711 = vpow.pop %v1710
      %v1712 = vmul.f32 %v1661, 1.442695
      %v1713 = vpow.pop %v1712
      %v1714 = vmul.f32 %v1662, 1.442695
      %v1715 = vpow.pop %v1714
      %v1716 = vmul.f32 %v1663, 1.442695
      %v1717 = vpow.pop %v1716
      %v1718 = vmul.f32 %v1664, 1.442695
      %v1719 = vpow.pop %v1718
      %v1720 = vmul.f32 %v1665, 1.442695
      %v1721 = vpow.pop %v1720
      %v1722 = vmul.f32 %v1666, 1.442695
      %v1723 = vpow.pop %v1722
      %v1724 = vmul.f32 %v1667, 1.442695
      %v1725 = vpow.pop %v1724
      %v1726 = vmul.f32 %v1668, 1.442695
      %v1727 = vpow.pop %v1726
      %v1728 = vmul.f32 %v1669, 1.442695
      %v1729 = vpow.pop %v1728
      %v1730 = vmul.f32 %v1670, 1.442695
      %v1731 = vpow.pop %v1730
      %v1732 = vmul.f32 %v1671, 1.442695
      %v1733 = vpow.pop %v1732
      %v1734 = vmul.f32 %v1672, 1.442695
      %v1735 = vpow.pop %v1734
      %v1736 = vmul.f32 %v1673, 1.442695
      %v1737 = vpow.pop %v1736
      %v1738 = vadd.f32 %v1675, %v1677
      %1739 = vadd.xlane.f32.xlu0 %v1738
      %v1740 = vpop.xlane.xlu0 %1739
      %v1741 = vadd.f32 %v1679, %v1681
      %1742 = vadd.xlane.f32.xlu0 %v1741
      %v1743 = vpop.xlane.xlu0 %1742
      %v1744 = vadd.f32 %v1683, %v1685
      %1745 = vadd.xlane.f32.xlu0 %v1744
      %v1746 = vpop.xlane.xlu0 %1745
      %v1747 = vadd.f32 %v1687, %v1689
      %1748 = vadd.xlane.f32.xlu0 %v1747
      %v1749 = vpop.xlane.xlu0 %1748
      %v1750 = vadd.f32 %v1691, %v1693
      %1751 = vadd.xlane.f32.xlu0 %v1750
      %v1752 = vpop.xlane.xlu0 %1751
      %v1753 = vadd.f32 %v1695, %v1697
      %1754 = vadd.xlane.f32.xlu0 %v1753
      %v1755 = vpop.xlane.xlu0 %1754
      %v1756 = vadd.f32 %v1699, %v1701
      %1757 = vadd.xlane.f32.xlu0 %v1756
      %v1758 = vpop.xlane.xlu0 %1757
      %v1759 = vadd.f32 %v1703, %v1705
      %1760 = vadd.xlane.f32.xlu0 %v1759
      %v1761 = vpop.xlane.xlu0 %1760
      %v1762 = vadd.f32 %v1707, %v1709
      %1763 = vadd.xlane.f32.xlu0 %v1762
      %v1764 = vpop.xlane.xlu0 %1763
      %v1765 = vadd.f32 %v1711, %v1713
      %1766 = vadd.xlane.f32.xlu0 %v1765
      %v1767 = vpop.xlane.xlu0 %1766
      %v1768 = vadd.f32 %v1715, %v1717
      %1769 = vadd.xlane.f32.xlu0 %v1768
      %v1770 = vpop.xlane.xlu0 %1769
      %v1771 = vadd.f32 %v1719, %v1721
      %1772 = vadd.xlane.f32.xlu0 %v1771
      %v1773 = vpop.xlane.xlu0 %1772
      %v1774 = vadd.f32 %v1723, %v1725
      %1775 = vadd.xlane.f32.xlu0 %v1774
      %v1776 = vpop.xlane.xlu0 %1775
      %v1777 = vadd.f32 %v1727, %v1729
      %1778 = vadd.xlane.f32.xlu0 %v1777
      %v1779 = vpop.xlane.xlu0 %1778
      %v1780 = vadd.f32 %v1731, %v1733
      %1781 = vadd.xlane.f32.xlu0 %v1780
      %v1782 = vpop.xlane.xlu0 %1781
      %v1783 = vadd.f32 %v1735, %v1737
      %1784 = vadd.xlane.f32.xlu0 %v1783
      %v1785 = vpop.xlane.xlu0 %1784
      %v1786 = vrcp.pop %v1740
      %v1787 = vrcp.pop %v1743
      %v1788 = vrcp.pop %v1746
      %v1789 = vrcp.pop %v1749
      %v1790 = vrcp.pop %v1752
      %v1791 = vrcp.pop %v1755
      %v1792 = vrcp.pop %v1758
      %v1793 = vrcp.pop %v1761
      %v1794 = vrcp.pop %v1764
      %v1795 = vrcp.pop %v1767
      %v1796 = vrcp.pop %v1770
      %v1797 = vrcp.pop %v1773
      %v1798 = vrcp.pop %v1776
      %v1799 = vrcp.pop %v1779
      %v1800 = vrcp.pop %v1782
      %v1801 = vrcp.pop %v1785
      %v1802 = vmul.f32 %v1675, %v1786
      %v1803 = vmul.f32 %v1677, %v1786
      %v1804 = vmul.f32 %v1679, %v1787
      %v1805 = vmul.f32 %v1681, %v1787
      %v1806 = vmul.f32 %v1683, %v1788
      %v1807 = vmul.f32 %v1685, %v1788
      %v1808 = vmul.f32 %v1687, %v1789
      %v1809 = vmul.f32 %v1689, %v1789
      %v1810 = vmul.f32 %v1691, %v1790
      %v1811 = vmul.f32 %v1693, %v1790
      %v1812 = vmul.f32 %v1695, %v1791
      %v1813 = vmul.f32 %v1697, %v1791
      %v1814 = vmul.f32 %v1699, %v1792
      %v1815 = vmul.f32 %v1701, %v1792
      %v1816 = vmul.f32 %v1703, %v1793
      %v1817 = vmul.f32 %v1705, %v1793
      %v1818 = vmul.f32 %v1707, %v1794
      %v1819 = vmul.f32 %v1709, %v1794
      %v1820 = vmul.f32 %v1711, %v1795
      %v1821 = vmul.f32 %v1713, %v1795
      %v1822 = vmul.f32 %v1715, %v1796
      %v1823 = vmul.f32 %v1717, %v1796
      %v1824 = vmul.f32 %v1719, %v1797
      %v1825 = vmul.f32 %v1721, %v1797
      %v1826 = vmul.f32 %v1723, %v1798
      %v1827 = vmul.f32 %v1725, %v1798
      %v1828 = vmul.f32 %v1727, %v1799
      %v1829 = vmul.f32 %v1729, %v1799
      %v1830 = vmul.f32 %v1731, %v1800
      %v1831 = vmul.f32 %v1733, %v1800
      %v1832 = vmul.f32 %v1735, %v1801
      %v1833 = vmul.f32 %v1737, %v1801
      %v1834 = vpack.c.bf16 %v1804, %v1802
      %v1835 = vpack.c.bf16 %v1805, %v1803
      %v1836 = vpack.c.bf16 %v1808, %v1806
      %v1837 = vpack.c.bf16 %v1809, %v1807
      %v1838 = vpack.c.bf16 %v1812, %v1810
      %v1839 = vpack.c.bf16 %v1813, %v1811
      %v1840 = vpack.c.bf16 %v1816, %v1814
      %v1841 = vpack.c.bf16 %v1817, %v1815
      %v1842 = vpack.c.bf16 %v1820, %v1818
      %v1843 = vpack.c.bf16 %v1821, %v1819
      %v1844 = vpack.c.bf16 %v1824, %v1822
      %v1845 = vpack.c.bf16 %v1825, %v1823
      %v1846 = vpack.c.bf16 %v1828, %v1826
      %v1847 = vpack.c.bf16 %v1829, %v1827
      %v1848 = vpack.c.bf16 %v1832, %v1830
      %v1849 = vpack.c.bf16 %v1833, %v1831
      %v1850 = vld [vmem:[%s2] sm:$0xf]
      %v1851 = vld [vmem:[%s2 + $0x4] sm:$0xf]
      %v1852 = vld [vmem:[%s2 + $0x8] sm:$0xf]
      %v1853 = vld [vmem:[%s2 + $0xc] sm:$0xf]
      %v1854 = vld [vmem:[%s2 + $0x10] sm:$0xf]
      %v1855 = vld [vmem:[%s2 + $0x14] sm:$0xf]
      %v1856 = vld [vmem:[%s2 + $0x18] sm:$0xf]
      %v1857 = vld [vmem:[%s2 + $0x1c] sm:$0xf]
      %v1858 = vld [vmem:[%s2 + $0x20] sm:$0xf]
      %v1859 = vld [vmem:[%s2 + $0x24] sm:$0xf]
      %v1860 = vld [vmem:[%s2 + $0x28] sm:$0xf]
      %v1861 = vld [vmem:[%s2 + $0x2c] sm:$0xf]
      %v1862 = vld [vmem:[%s2 + $0x30] sm:$0xf]
      %v1863 = vld [vmem:[%s2 + $0x34] sm:$0xf]
      %v1864 = vld [vmem:[%s2 + $0x38] sm:$0xf]
      %v1865 = vld [vmem:[%s2 + $0x3c] sm:$0xf]
      %v1866 = vld [vmem:[%s2 + $0x40] sm:$0xf]
      %v1867 = vld [vmem:[%s2 + $0x44] sm:$0xf]
      %v1868 = vld [vmem:[%s2 + $0x48] sm:$0xf]
      %v1869 = vld [vmem:[%s2 + $0x4c] sm:$0xf]
      %v1870 = vld [vmem:[%s2 + $0x50] sm:$0xf]
      %v1871 = vld [vmem:[%s2 + $0x54] sm:$0xf]
      %v1872 = vld [vmem:[%s2 + $0x58] sm:$0xf]
      %v1873 = vld [vmem:[%s2 + $0x5c] sm:$0xf]
      %v1874 = vld [vmem:[%s2 + $0x60] sm:$0xf]
      %v1875 = vld [vmem:[%s2 + $0x64] sm:$0xf]
      %v1876 = vld [vmem:[%s2 + $0x68] sm:$0xf]
      %v1877 = vld [vmem:[%s2 + $0x6c] sm:$0xf]
      %v1878 = vld [vmem:[%s2 + $0x70] sm:$0xf]
      %v1879 = vld [vmem:[%s2 + $0x74] sm:$0xf]
      %v1880 = vld [vmem:[%s2 + $0x78] sm:$0xf]
      %v1881 = vld [vmem:[%s2 + $0x7c] sm:$0xf]
      %v1882 = vld [vmem:[%s2 + $0x80] sm:$0xf]
      %v1883 = vld [vmem:[%s2 + $0x84] sm:$0xf]
      %v1884 = vld [vmem:[%s2 + $0x88] sm:$0xf]
      %v1885 = vld [vmem:[%s2 + $0x8c] sm:$0xf]
      %v1886 = vld [vmem:[%s2 + $0x90] sm:$0xf]
      %v1887 = vld [vmem:[%s2 + $0x94] sm:$0xf]
      %v1888 = vld [vmem:[%s2 + $0x98] sm:$0xf]
      %v1889 = vld [vmem:[%s2 + $0x9c] sm:$0xf]
      %v1890 = vld [vmem:[%s2 + $0xa0] sm:$0xf]
      %v1891 = vld [vmem:[%s2 + $0xa4] sm:$0xf]
      %v1892 = vld [vmem:[%s2 + $0xa8] sm:$0xf]
      %v1893 = vld [vmem:[%s2 + $0xac] sm:$0xf]
      %v1894 = vld [vmem:[%s2 + $0xb0] sm:$0xf]
      %v1895 = vld [vmem:[%s2 + $0xb4] sm:$0xf]
      %v1896 = vld [vmem:[%s2 + $0xb8] sm:$0xf]
      %v1897 = vld [vmem:[%s2 + $0xbc] sm:$0xf]
      %v1898 = vld [vmem:[%s2 + $0xc0] sm:$0xf]
      %v1899 = vld [vmem:[%s2 + $0xc4] sm:$0xf]
      %v1900 = vld [vmem:[%s2 + $0xc8] sm:$0xf]
      %v1901 = vld [vmem:[%s2 + $0xcc] sm:$0xf]
      %v1902 = vld [vmem:[%s2 + $0xd0] sm:$0xf]
      %v1903 = vld [vmem:[%s2 + $0xd4] sm:$0xf]
      %v1904 = vld [vmem:[%s2 + $0xd8] sm:$0xf]
      %v1905 = vld [vmem:[%s2 + $0xdc] sm:$0xf]
      %v1906 = vld [vmem:[%s2 + $0xe0] sm:$0xf]
      %v1907 = vld [vmem:[%s2 + $0xe4] sm:$0xf]
      %v1908 = vld [vmem:[%s2 + $0xe8] sm:$0xf]
      %v1909 = vld [vmem:[%s2 + $0xec] sm:$0xf]
      %v1910 = vld [vmem:[%s2 + $0xf0] sm:$0xf]
      %v1911 = vld [vmem:[%s2 + $0xf4] sm:$0xf]
      %v1912 = vld [vmem:[%s2 + $0xf8] sm:$0xf]
      %v1913 = vld [vmem:[%s2 + $0xfc] sm:$0xf]
      %v1914 = vld [vmem:[%s2 + $0x100] sm:$0xf]
      %v1915 = vld [vmem:[%s2 + $0x104] sm:$0xf]
      %v1916 = vld [vmem:[%s2 + $0x108] sm:$0xf]
      %v1917 = vld [vmem:[%s2 + $0x10c] sm:$0xf]
      %v1918 = vld [vmem:[%s2 + $0x110] sm:$0xf]
      %v1919 = vld [vmem:[%s2 + $0x114] sm:$0xf]
      %v1920 = vld [vmem:[%s2 + $0x118] sm:$0xf]
      %v1921 = vld [vmem:[%s2 + $0x11c] sm:$0xf]
      %v1922 = vld [vmem:[%s2 + $0x120] sm:$0xf]
      %v1923 = vld [vmem:[%s2 + $0x124] sm:$0xf]
      %v1924 = vld [vmem:[%s2 + $0x128] sm:$0xf]
      %v1925 = vld [vmem:[%s2 + $0x12c] sm:$0xf]
      %v1926 = vld [vmem:[%s2 + $0x130] sm:$0xf]
      %v1927 = vld [vmem:[%s2 + $0x134] sm:$0xf]
      %v1928 = vld [vmem:[%s2 + $0x138] sm:$0xf]
      %v1929 = vld [vmem:[%s2 + $0x13c] sm:$0xf]
      %v1930 = vld [vmem:[%s2 + $0x140] sm:$0xf]
      %v1931 = vld [vmem:[%s2 + $0x144] sm:$0xf]
      %v1932 = vld [vmem:[%s2 + $0x148] sm:$0xf]
      %v1933 = vld [vmem:[%s2 + $0x14c] sm:$0xf]
      %v1934 = vld [vmem:[%s2 + $0x150] sm:$0xf]
      %v1935 = vld [vmem:[%s2 + $0x154] sm:$0xf]
      %v1936 = vld [vmem:[%s2 + $0x158] sm:$0xf]
      %v1937 = vld [vmem:[%s2 + $0x15c] sm:$0xf]
      %v1938 = vld [vmem:[%s2 + $0x160] sm:$0xf]
      %v1939 = vld [vmem:[%s2 + $0x164] sm:$0xf]
      %v1940 = vld [vmem:[%s2 + $0x168] sm:$0xf]
      %v1941 = vld [vmem:[%s2 + $0x16c] sm:$0xf]
      %v1942 = vld [vmem:[%s2 + $0x170] sm:$0xf]
      %v1943 = vld [vmem:[%s2 + $0x174] sm:$0xf]
      %v1944 = vld [vmem:[%s2 + $0x178] sm:$0xf]
      %v1945 = vld [vmem:[%s2 + $0x17c] sm:$0xf]
      %v1946 = vld [vmem:[%s2 + $0x180] sm:$0xf]
      %v1947 = vld [vmem:[%s2 + $0x184] sm:$0xf]
      %v1948 = vld [vmem:[%s2 + $0x188] sm:$0xf]
      %v1949 = vld [vmem:[%s2 + $0x18c] sm:$0xf]
      %v1950 = vld [vmem:[%s2 + $0x190] sm:$0xf]
      %v1951 = vld [vmem:[%s2 + $0x194] sm:$0xf]
      %v1952 = vld [vmem:[%s2 + $0x198] sm:$0xf]
      %v1953 = vld [vmem:[%s2 + $0x19c] sm:$0xf]
      %v1954 = vld [vmem:[%s2 + $0x1a0] sm:$0xf]
      %v1955 = vld [vmem:[%s2 + $0x1a4] sm:$0xf]
      %v1956 = vld [vmem:[%s2 + $0x1a8] sm:$0xf]
      %v1957 = vld [vmem:[%s2 + $0x1ac] sm:$0xf]
      %v1958 = vld [vmem:[%s2 + $0x1b0] sm:$0xf]
      %v1959 = vld [vmem:[%s2 + $0x1b4] sm:$0xf]
      %v1960 = vld [vmem:[%s2 + $0x1b8] sm:$0xf]
      %v1961 = vld [vmem:[%s2 + $0x1bc] sm:$0xf]
      %v1962 = vld [vmem:[%s2 + $0x1c0] sm:$0xf]
      %v1963 = vld [vmem:[%s2 + $0x1c4] sm:$0xf]
      %v1964 = vld [vmem:[%s2 + $0x1c8] sm:$0xf]
      %v1965 = vld [vmem:[%s2 + $0x1cc] sm:$0xf]
      %v1966 = vld [vmem:[%s2 + $0x1d0] sm:$0xf]
      %v1967 = vld [vmem:[%s2 + $0x1d4] sm:$0xf]
      %v1968 = vld [vmem:[%s2 + $0x1d8] sm:$0xf]
      %v1969 = vld [vmem:[%s2 + $0x1dc] sm:$0xf]
      %v1970 = vld [vmem:[%s2 + $0x1e0] sm:$0xf]
      %v1971 = vld [vmem:[%s2 + $0x1e4] sm:$0xf]
      %v1972 = vld [vmem:[%s2 + $0x1e8] sm:$0xf]
      %v1973 = vld [vmem:[%s2 + $0x1ec] sm:$0xf]
      %v1974 = vld [vmem:[%s2 + $0x1f0] sm:$0xf]
      %v1975 = vld [vmem:[%s2 + $0x1f4] sm:$0xf]
      %v1976 = vld [vmem:[%s2 + $0x1f8] sm:$0xf]
      %v1977 = vld [vmem:[%s2 + $0x1fc] sm:$0xf]
      %v1978 = vld [vmem:[%s4] sm:$0xff]
      %v2107 = vunpack.c.l.b16 %v1850
      %v2108 = vunpack.c.l.b16 %v1851
      %v2109 = vunpack.c.l.b16 %v1852
      %v2110 = vunpack.c.l.b16 %v1853
      %v2111 = vunpack.c.l.b16 %v1854
      %v2112 = vunpack.c.l.b16 %v1855
      %v2113 = vunpack.c.l.b16 %v1856
      %v2114 = vunpack.c.l.b16 %v1857
      %v2115 = vunpack.c.l.b16 %v1858
      %v2116 = vunpack.c.l.b16 %v1859
      %v2117 = vunpack.c.l.b16 %v1860
      %v2118 = vunpack.c.l.b16 %v1861
      %v2119 = vunpack.c.l.b16 %v1862
      %v2120 = vunpack.c.l.b16 %v1863
      %v2121 = vunpack.c.l.b16 %v1864
      %v2122 = vunpack.c.l.b16 %v1865
      %v2123 = vunpack.c.l.b16 %v1866
      %v2124 = vunpack.c.l.b16 %v1867
      %v2125 = vunpack.c.l.b16 %v1868
      %v2126 = vunpack.c.l.b16 %v1869
      %v2127 = vunpack.c.l.b16 %v1870
      %v2128 = vunpack.c.l.b16 %v1871
      %v2129 = vunpack.c.l.b16 %v1872
      %v2130 = vunpack.c.l.b16 %v1873
      %v2131 = vunpack.c.l.b16 %v1874
      %v2132 = vunpack.c.l.b16 %v1875
      %v2133 = vunpack.c.l.b16 %v1876
      %v2134 = vunpack.c.l.b16 %v1877
      %v2135 = vunpack.c.l.b16 %v1878
      %v2136 = vunpack.c.l.b16 %v1879
      %v2137 = vunpack.c.l.b16 %v1880
      %v2138 = vunpack.c.l.b16 %v1881
      %v2139 = vunpack.c.l.b16 %v1882
      %v2140 = vunpack.c.l.b16 %v1883
      %v2141 = vunpack.c.l.b16 %v1884
      %v2142 = vunpack.c.l.b16 %v1885
      %v2143 = vunpack.c.l.b16 %v1886
      %v2144 = vunpack.c.l.b16 %v1887
      %v2145 = vunpack.c.l.b16 %v1888
      %v2146 = vunpack.c.l.b16 %v1889
      %v2147 = vunpack.c.l.b16 %v1890
      %v2148 = vunpack.c.l.b16 %v1891
      %v2149 = vunpack.c.l.b16 %v1892
      %v2150 = vunpack.c.l.b16 %v1893
      %v2151 = vunpack.c.l.b16 %v1894
      %v2152 = vunpack.c.l.b16 %v1895
      %v2153 = vunpack.c.l.b16 %v1896
      %v2154 = vunpack.c.l.b16 %v1897
      %v2155 = vunpack.c.l.b16 %v1898
      %v2156 = vunpack.c.l.b16 %v1899
      %v2157 = vunpack.c.l.b16 %v1900
      %v2158 = vunpack.c.l.b16 %v1901
      %v2159 = vunpack.c.l.b16 %v1902
      %v2160 = vunpack.c.l.b16 %v1903
      %v2161 = vunpack.c.l.b16 %v1904
      %v2162 = vunpack.c.l.b16 %v1905
      %v2163 = vunpack.c.l.b16 %v1906
      %v2164 = vunpack.c.l.b16 %v1907
      %v2165 = vunpack.c.l.b16 %v1908
      %v2166 = vunpack.c.l.b16 %v1909
      %v2167 = vunpack.c.l.b16 %v1910
      %v2168 = vunpack.c.l.b16 %v1911
      %v2169 = vunpack.c.l.b16 %v1912
      %v2170 = vunpack.c.l.b16 %v1913
      %v2171 = vunpack.c.l.b16 %v1914
      %v2172 = vunpack.c.l.b16 %v1915
      %v2173 = vunpack.c.l.b16 %v1916
      %v2174 = vunpack.c.l.b16 %v1917
      %v2175 = vunpack.c.l.b16 %v1918
      %v2176 = vunpack.c.l.b16 %v1919
      %v2177 = vunpack.c.l.b16 %v1920
      %v2178 = vunpack.c.l.b16 %v1921
      %v2179 = vunpack.c.l.b16 %v1922
      %v2180 = vunpack.c.l.b16 %v1923
      %v2181 = vunpack.c.l.b16 %v1924
      %v2182 = vunpack.c.l.b16 %v1925
      %v2183 = vunpack.c.l.b16 %v1926
      %v2184 = vunpack.c.l.b16 %v1927
      %v2185 = vunpack.c.l.b16 %v1928
      %v2186 = vunpack.c.l.b16 %v1929
      %v2187 = vunpack.c.l.b16 %v1930
      %v2188 = vunpack.c.l.b16 %v1931
      %v2189 = vunpack.c.l.b16 %v1932
      %v2190 = vunpack.c.l.b16 %v1933
      %v2191 = vunpack.c.l.b16 %v1934
      %v2192 = vunpack.c.l.b16 %v1935
      %v2193 = vunpack.c.l.b16 %v1936
      %v2194 = vunpack.c.l.b16 %v1937
      %v2195 = vunpack.c.l.b16 %v1938
      %v2196 = vunpack.c.l.b16 %v1939
      %v2197 = vunpack.c.l.b16 %v1940
      %v2198 = vunpack.c.l.b16 %v1941
      %v2199 = vunpack.c.l.b16 %v1942
      %v2200 = vunpack.c.l.b16 %v1943
      %v2201 = vunpack.c.l.b16 %v1944
      %v2202 = vunpack.c.l.b16 %v1945
      %v2203 = vunpack.c.l.b16 %v1946
      %v2204 = vunpack.c.l.b16 %v1947
      %v2205 = vunpack.c.l.b16 %v1948
      %v2206 = vunpack.c.l.b16 %v1949
      %v2207 = vunpack.c.l.b16 %v1950
      %v2208 = vunpack.c.l.b16 %v1951
      %v2209 = vunpack.c.l.b16 %v1952
      %v2210 = vunpack.c.l.b16 %v1953
      %v2211 = vunpack.c.l.b16 %v1954
      %v2212 = vunpack.c.l.b16 %v1955
      %v2213 = vunpack.c.l.b16 %v1956
      %v2214 = vunpack.c.l.b16 %v1957
      %v2215 = vunpack.c.l.b16 %v1958
      %v2216 = vunpack.c.l.b16 %v1959
      %v2217 = vunpack.c.l.b16 %v1960
      %v2218 = vunpack.c.l.b16 %v1961
      %v2219 = vunpack.c.l.b16 %v1962
      %v2220 = vunpack.c.l.b16 %v1963
      %v2221 = vunpack.c.l.b16 %v1964
      %v2222 = vunpack.c.l.b16 %v1965
      %v2223 = vunpack.c.l.b16 %v1966
      %v2224 = vunpack.c.l.b16 %v1967
      %v2225 = vunpack.c.l.b16 %v1968
      %v2226 = vunpack.c.l.b16 %v1969
      %v2227 = vunpack.c.l.b16 %v1970
      %v2228 = vunpack.c.l.b16 %v1971
      %v2229 = vunpack.c.l.b16 %v1972
      %v2230 = vunpack.c.l.b16 %v1973
      %v2231 = vunpack.c.l.b16 %v1974
      %v2232 = vunpack.c.l.b16 %v1975
      %v2233 = vunpack.c.l.b16 %v1976
      %v2234 = vunpack.c.l.b16 %v1977
      %v2235 = vpack.c.b16 %v2108, %v2107
      %v2236 = vpack.c.b16 %v2110, %v2109
      %v2237 = vpack.c.b16 %v2112, %v2111
      %v2238 = vpack.c.b16 %v2114, %v2113
      %v2239 = vpack.c.b16 %v2116, %v2115
      %v2240 = vpack.c.b16 %v2118, %v2117
      %v2241 = vpack.c.b16 %v2120, %v2119
      %v2242 = vpack.c.b16 %v2122, %v2121
      %v2243 = vpack.c.b16 %v2124, %v2123
      %v2244 = vpack.c.b16 %v2126, %v2125
      %v2245 = vpack.c.b16 %v2128, %v2127
      %v2246 = vpack.c.b16 %v2130, %v2129
      %v2247 = vpack.c.b16 %v2132, %v2131
      %v2248 = vpack.c.b16 %v2134, %v2133
      %v2249 = vpack.c.b16 %v2136, %v2135
      %v2250 = vpack.c.b16 %v2138, %v2137
      %v2251 = vpack.c.b16 %v2140, %v2139
      %v2252 = vpack.c.b16 %v2142, %v2141
      %v2253 = vpack.c.b16 %v2144, %v2143
      %v2254 = vpack.c.b16 %v2146, %v2145
      %v2255 = vpack.c.b16 %v2148, %v2147
      %v2256 = vpack.c.b16 %v2150, %v2149
      %v2257 = vpack.c.b16 %v2152, %v2151
      %v2258 = vpack.c.b16 %v2154, %v2153
      %v2259 = vpack.c.b16 %v2156, %v2155
      %v2260 = vpack.c.b16 %v2158, %v2157
      %v2261 = vpack.c.b16 %v2160, %v2159
      %v2262 = vpack.c.b16 %v2162, %v2161
      %v2263 = vpack.c.b16 %v2164, %v2163
      %v2264 = vpack.c.b16 %v2166, %v2165
      %v2265 = vpack.c.b16 %v2168, %v2167
      %v2266 = vpack.c.b16 %v2170, %v2169
      %v2267 = vpack.c.b16 %v2172, %v2171
      %v2268 = vpack.c.b16 %v2174, %v2173
      %v2269 = vpack.c.b16 %v2176, %v2175
      %v2270 = vpack.c.b16 %v2178, %v2177
      %v2271 = vpack.c.b16 %v2180, %v2179
      %v2272 = vpack.c.b16 %v2182, %v2181
      %v2273 = vpack.c.b16 %v2184, %v2183
      %v2274 = vpack.c.b16 %v2186, %v2185
      %v2275 = vpack.c.b16 %v2188, %v2187
      %v2276 = vpack.c.b16 %v2190, %v2189
      %v2277 = vpack.c.b16 %v2192, %v2191
      %v2278 = vpack.c.b16 %v2194, %v2193
      %v2279 = vpack.c.b16 %v2196, %v2195
      %v2280 = vpack.c.b16 %v2198, %v2197
      %v2281 = vpack.c.b16 %v2200, %v2199
      %v2282 = vpack.c.b16 %v2202, %v2201
      %v2283 = vpack.c.b16 %v2204, %v2203
      %v2284 = vpack.c.b16 %v2206, %v2205
      %v2285 = vpack.c.b16 %v2208, %v2207
      %v2286 = vpack.c.b16 %v2210, %v2209
      %v2287 = vpack.c.b16 %v2212, %v2211
      %v2288 = vpack.c.b16 %v2214, %v2213
      %v2289 = vpack.c.b16 %v2216, %v2215
      %v2290 = vpack.c.b16 %v2218, %v2217
      %v2291 = vpack.c.b16 %v2220, %v2219
      %v2292 = vpack.c.b16 %v2222, %v2221
      %v2293 = vpack.c.b16 %v2224, %v2223
      %v2294 = vpack.c.b16 %v2226, %v2225
      %v2295 = vpack.c.b16 %v2228, %v2227
      %v2296 = vpack.c.b16 %v2230, %v2229
      %v2297 = vpack.c.b16 %v2232, %v2231
      %v2298 = vpack.c.b16 %v2234, %v2233
      %2363 = vmatprep.subr.bf16.mxu0 0
      %2364 = vmatpush1.bf16.msra.mxu0 %v2235
      %2365 = vmatprep.subr.bf16.mxu0 0
      %2366 = vmatpush1.bf16.msra.mxu0 %v2236
      %2367 = vmatprep.subr.bf16.mxu0 0
      %2368 = vmatpush1.bf16.msra.mxu0 %v2237
      %2369 = vmatprep.subr.bf16.mxu0 0
      %2370 = vmatpush1.bf16.msra.mxu0 %v2238
      %2371 = vmatprep.subr.bf16.mxu0 0
      %2372 = vmatpush1.bf16.msra.mxu0 %v2239
      %2373 = vmatprep.subr.bf16.mxu0 0
      %2374 = vmatpush1.bf16.msra.mxu0 %v2240
      %2375 = vmatprep.subr.bf16.mxu0 0
      %2376 = vmatpush1.bf16.msra.mxu0 %v2241
      %2377 = vmatprep.subr.bf16.mxu0 0
      %2378 = vmatpush1.bf16.msra.mxu0 %v2242
      %2379 = vmatprep.subr.bf16.mxu0 0
      %2380 = vmatpush1.bf16.msra.mxu0 %v2243
      %2381 = vmatprep.subr.bf16.mxu0 0
      %2382 = vmatpush1.bf16.msra.mxu0 %v2244
      %2383 = vmatprep.subr.bf16.mxu0 0
      %2384 = vmatpush1.bf16.msra.mxu0 %v2245
      %2385 = vmatprep.subr.bf16.mxu0 0
      %2386 = vmatpush1.bf16.msra.mxu0 %v2246
      %2387 = vmatprep.subr.bf16.mxu0 0
      %2388 = vmatpush1.bf16.msra.mxu0 %v2247
      %2389 = vmatprep.subr.bf16.mxu0 0
      %2390 = vmatpush1.bf16.msra.mxu0 %v2248
      %2391 = vmatprep.subr.bf16.mxu0 0
      %2392 = vmatpush1.bf16.msra.mxu0 %v2249
      %2393 = vmatprep.subr.bf16.mxu0 0
      %2394 = vmatpush1.bf16.msra.mxu0 %v2250
      %2395 = vmatprep.mubr.bf16.mxu0 %v1067
      %2396 = vmatmul.mubr.bf16.gmra.mrb[0].mxu0 %v1066
      %v2397 = vpop.f32.mrb[0].mxu0
      %v2398 = vadd.f32 %v229, %v2397
      %v2399 = vpop.f32.mrb[0].mxu0
      %v2400 = vpop.f32.mrb[0].mxu0
      %v2401 = vadd.f32 %v230, %v2400
      %v2402 = vpop.f32.mrb[0].mxu0
      %2403 = vmatprep.mubr.bf16.mxu0 %v1069
      %2404 = vmatmul.mubr.bf16.gmra.mrb[0].mxu0 %v1068
      %v2405 = vpop.f32.mrb[0].mxu0
      %v2406 = vadd.f32 %v231, %v2405
      %v2407 = vpop.f32.mrb[0].mxu0
      %v2408 = vpop.f32.mrb[0].mxu0
      %v2409 = vadd.f32 %v232, %v2408
      %v2410 = vpop.f32.mrb[0].mxu0
      %2411 = vmatprep.mubr.bf16.mxu0 %v1071
      %2412 = vmatmul.mubr.bf16.gmra.mrb[0].mxu0 %v1070
      %v2413 = vpop.f32.mrb[0].mxu0
      %v2414 = vadd.f32 %v233, %v2413
      %v2415 = vpop.f32.mrb[0].mxu0
      %v2416 = vpop.f32.mrb[0].mxu0
      %v2417 = vadd.f32 %v234, %v2416
      %v2418 = vpop.f32.mrb[0].mxu0
      %2419 = vmatprep.mubr.bf16.mxu0 %v1073
      %2420 = vmatmul.mubr.bf16.gmra.mrb[0].mxu0 %v1072
      %v2421 = vpop.f32.mrb[0].mxu0
      %v2422 = vadd.f32 %v235, %v2421
      %v2423 = vpop.f32.mrb[0].mxu0
      %v2424 = vpop.f32.mrb[0].mxu0
      %v2425 = vadd.f32 %v236, %v2424
      %v2426 = vpop.f32.mrb[0].mxu0
      %2427 = vmatprep.mubr.bf16.mxu0 %v1075
      %2428 = vmatmul.mubr.bf16.gmra.mrb[0].mxu0 %v1074
      %v2429 = vpop.f32.mrb[0].mxu0
      %v2430 = vadd.f32 %v237, %v2429
      %v2431 = vpop.f32.mrb[0].mxu0
      %v2432 = vpop.f32.mrb[0].mxu0
      %v2433 = vadd.f32 %v238, %v2432
      %v2434 = vpop.f32.mrb[0].mxu0
      %2435 = vmatprep.mubr.bf16.mxu0 %v1077
      %2436 = vmatmul.mubr.bf16.gmra.mrb[0].mxu0 %v1076
      %v2437 = vpop.f32.mrb[0].mxu0
      %v2438 = vadd.f32 %v239, %v2437
      %v2439 = vpop.f32.mrb[0].mxu0
      %v2440 = vpop.f32.mrb[0].mxu0
      %v2441 = vadd.f32 %v240, %v2440
      %v2442 = vpop.f32.mrb[0].mxu0
      %2443 = vmatprep.mubr.bf16.mxu0 %v1079
      %2444 = vmatmul.mubr.bf16.gmra.mrb[0].mxu0 %v1078
      %v2445 = vpop.f32.mrb[0].mxu0
      %v2446 = vadd.f32 %v241, %v2445
      %v2447 = vpop.f32.mrb[0].mxu0
      %v2448 = vpop.f32.mrb[0].mxu0
      %v2449 = vadd.f32 %v242, %v2448
      %v2450 = vpop.f32.mrb[0].mxu0
      %2451 = vmatprep.mubr.bf16.mxu0 %v1081
      %2452 = vmatmul.mubr.bf16.gmra.mrb[0].mxu0 %v1080
      %v2453 = vpop.f32.mrb[0].mxu0
      %v2454 = vadd.f32 %v243, %v2453
      %v2455 = vpop.f32.mrb[0].mxu0
      %v2456 = vpop.f32.mrb[0].mxu0
      %v2457 = vadd.f32 %v244, %v2456
      %v2458 = vpop.f32.mrb[0].mxu0
      %2459 = vdwg.mxu0
      %2460 = vmatprep.subr.bf16.mxu0 0
      %2461 = vmatpush1.bf16.msra.mxu0 %v2251
      %2462 = vmatprep.subr.bf16.mxu0 0
      %2463 = vmatpush1.bf16.msra.mxu0 %v2252
      %2464 = vmatprep.subr.bf16.mxu0 0
      %2465 = vmatpush1.bf16.msra.mxu0 %v2253
      %2466 = vmatprep.subr.bf16.mxu0 0
      %2467 = vmatpush1.bf16.msra.mxu0 %v2254
      %2468 = vmatprep.subr.bf16.mxu0 0
      %2469 = vmatpush1.bf16.msra.mxu0 %v2255
      %2470 = vmatprep.subr.bf16.mxu0 0
      %2471 = vmatpush1.bf16.msra.mxu0 %v2256
      %2472 = vmatprep.subr.bf16.mxu0 0
      %2473 = vmatpush1.bf16.msra.mxu0 %v2257
      %2474 = vmatprep.subr.bf16.mxu0 0
      %2475 = vmatpush1.bf16.msra.mxu0 %v2258
      %2476 = vmatprep.subr.bf16.mxu0 0
      %2477 = vmatpush1.bf16.msra.mxu0 %v2259
      %2478 = vmatprep.subr.bf16.mxu0 0
      %2479 = vmatpush1.bf16.msra.mxu0 %v2260
      %2480 = vmatprep.subr.bf16.mxu0 0
      %2481 = vmatpush1.bf16.msra.mxu0 %v2261
      %2482 = vmatprep.subr.bf16.mxu0 0
      %2483 = vmatpush1.bf16.msra.mxu0 %v2262
      %2484 = vmatprep.subr.bf16.mxu0 0
      %2485 = vmatpush1.bf16.msra.mxu0 %v2263
      %2486 = vmatprep.subr.bf16.mxu0 0
      %2487 = vmatpush1.bf16.msra.mxu0 %v2264
      %2488 = vmatprep.subr.bf16.mxu0 0
      %2489 = vmatpush1.bf16.msra.mxu0 %v2265
      %2490 = vmatprep.subr.bf16.mxu0 0
      %2491 = vmatpush1.bf16.msra.mxu0 %v2266
      %2492 = vmatprep.mubr.bf16.mxu0 %v1323
      %2493 = vmatmul.mubr.bf16.gmra.mrb[0].mxu0 %v1322
      %v2494 = vpop.f32.mrb[0].mxu0
      %v2495 = vadd.f32 %v2398, %v2494
      %v2496 = vpop.f32.mrb[0].mxu0
      %v2497 = vpop.f32.mrb[0].mxu0
      %v2498 = vadd.f32 %v2401, %v2497
      %v2499 = vpop.f32.mrb[0].mxu0
      %2500 = vmatprep.mubr.bf16.mxu0 %v1325
      %2501 = vmatmul.mubr.bf16.gmra.mrb[0].mxu0 %v1324
      %v2502 = vpop.f32.mrb[0].mxu0
      %v2503 = vadd.f32 %v2406, %v2502
      %v2504 = vpop.f32.mrb[0].mxu0
      %v2505 = vpop.f32.mrb[0].mxu0
      %v2506 = vadd.f32 %v2409, %v2505
      %v2507 = vpop.f32.mrb[0].mxu0
      %2508 = vmatprep.mubr.bf16.mxu0 %v1327
      %2509 = vmatmul.mubr.bf16.gmra.mrb[0].mxu0 %v1326
      %v2510 = vpop.f32.mrb[0].mxu0
      %v2511 = vadd.f32 %v2414, %v2510
      %v2512 = vpop.f32.mrb[0].mxu0
      %v2513 = vpop.f32.mrb[0].mxu0
      %v2514 = vadd.f32 %v2417, %v2513
      %v2515 = vpop.f32.mrb[0].mxu0
      %2516 = vmatprep.mubr.bf16.mxu0 %v1329
      %2517 = vmatmul.mubr.bf16.gmra.mrb[0].mxu0 %v1328
      %v2518 = vpop.f32.mrb[0].mxu0
      %v2519 = vadd.f32 %v2422, %v2518
      %v2520 = vpop.f32.mrb[0].mxu0
      %v2521 = vpop.f32.mrb[0].mxu0
      %v2522 = vadd.f32 %v2425, %v2521
      %v2523 = vpop.f32.mrb[0].mxu0
      %2524 = vmatprep.mubr.bf16.mxu0 %v1331
      %2525 = vmatmul.mubr.bf16.gmra.mrb[0].mxu0 %v1330
      %v2526 = vpop.f32.mrb[0].mxu0
      %v2527 = vadd.f32 %v2430, %v2526
      %v2528 = vpop.f32.mrb[0].mxu0
      %v2529 = vpop.f32.mrb[0].mxu0
      %v2530 = vadd.f32 %v2433, %v2529
      %v2531 = vpop.f32.mrb[0].mxu0
      %2532 = vmatprep.mubr.bf16.mxu0 %v1333
      %2533 = vmatmul.mubr.bf16.gmra.mrb[0].mxu0 %v1332
      %v2534 = vpop.f32.mrb[0].mxu0
      %v2535 = vadd.f32 %v2438, %v2534
      %v2536 = vpop.f32.mrb[0].mxu0
      %v2537 = vpop.f32.mrb[0].mxu0
      %v2538 = vadd.f32 %v2441, %v2537
      %v2539 = vpop.f32.mrb[0].mxu0
      %2540 = vmatprep.mubr.bf16.mxu0 %v1335
      %2541 = vmatmul.mubr.bf16.gmra.mrb[0].mxu0 %v1334
      %v2542 = vpop.f32.mrb[0].mxu0
      %v2543 = vadd.f32 %v2446, %v2542
      %v2544 = vpop.f32.mrb[0].mxu0
      %v2545 = vpop.f32.mrb[0].mxu0
      %v2546 = vadd.f32 %v2449, %v2545
      %v2547 = vpop.f32.mrb[0].mxu0
      %2548 = vmatprep.mubr.bf16.mxu0 %v1337
      %2549 = vmatmul.mubr.bf16.gmra.mrb[0].mxu0 %v1336
      %v2550 = vpop.f32.mrb[0].mxu0
      %v2551 = vadd.f32 %v2454, %v2550
      %v2552 = vpop.f32.mrb[0].mxu0
      %v2553 = vpop.f32.mrb[0].mxu0
      %v2554 = vadd.f32 %v2457, %v2553
      %v2555 = vpop.f32.mrb[0].mxu0
      %2556 = vdwg.mxu0
      %2557 = vmatprep.subr.bf16.mxu0 0
      %2558 = vmatpush1.bf16.msra.mxu0 %v2267
      %2559 = vmatprep.subr.bf16.mxu0 0
      %2560 = vmatpush1.bf16.msra.mxu0 %v2268
      %2561 = vmatprep.subr.bf16.mxu0 0
      %2562 = vmatpush1.bf16.msra.mxu0 %v2269
      %2563 = vmatprep.subr.bf16.mxu0 0
      %2564 = vmatpush1.bf16.msra.mxu0 %v2270
      %2565 = vmatprep.subr.bf16.mxu0 0
      %2566 = vmatpush1.bf16.msra.mxu0 %v2271
      %2567 = vmatprep.subr.bf16.mxu0 0
      %2568 = vmatpush1.bf16.msra.mxu0 %v2272
      %2569 = vmatprep.subr.bf16.mxu0 0
      %2570 = vmatpush1.bf16.msra.mxu0 %v2273
      %2571 = vmatprep.subr.bf16.mxu0 0
      %2572 = vmatpush1.bf16.msra.mxu0 %v2274
      %2573 = vmatprep.subr.bf16.mxu0 0
      %2574 = vmatpush1.bf16.msra.mxu0 %v2275
      %2575 = vmatprep.subr.bf16.mxu0 0
      %2576 = vmatpush1.bf16.msra.mxu0 %v2276
      %2577 = vmatprep.subr.bf16.mxu0 0
      %2578 = vmatpush1.bf16.msra.mxu0 %v2277
      %2579 = vmatprep.subr.bf16.mxu0 0
      %2580 = vmatpush1.bf16.msra.mxu0 %v2278
      %2581 = vmatprep.subr.bf16.mxu0 0
      %2582 = vmatpush1.bf16.msra.mxu0 %v2279
      %2583 = vmatprep.subr.bf16.mxu0 0
      %2584 = vmatpush1.bf16.msra.mxu0 %v2280
      %2585 = vmatprep.subr.bf16.mxu0 0
      %2586 = vmatpush1.bf16.msra.mxu0 %v2281
      %2587 = vmatprep.subr.bf16.mxu0 0
      %2588 = vmatpush1.bf16.msra.mxu0 %v2282
      %2589 = vmatprep.mubr.bf16.mxu0 %v1579
      %2590 = vmatmul.mubr.bf16.gmra.mrb[0].mxu0 %v1578
      %v2591 = vpop.f32.mrb[0].mxu0
      %v2592 = vadd.f32 %v2495, %v2591
      %v2593 = vpop.f32.mrb[0].mxu0
      %v2594 = vpop.f32.mrb[0].mxu0
      %v2595 = vadd.f32 %v2498, %v2594
      %v2596 = vpop.f32.mrb[0].mxu0
      %2597 = vmatprep.mubr.bf16.mxu0 %v1581
      %2598 = vmatmul.mubr.bf16.gmra.mrb[0].mxu0 %v1580
      %v2599 = vpop.f32.mrb[0].mxu0
      %v2600 = vadd.f32 %v2503, %v2599
      %v2601 = vpop.f32.mrb[0].mxu0
      %v2602 = vpop.f32.mrb[0].mxu0
      %v2603 = vadd.f32 %v2506, %v2602
      %v2604 = vpop.f32.mrb[0].mxu0
      %2605 = vmatprep.mubr.bf16.mxu0 %v1583
      %2606 = vmatmul.mubr.bf16.gmra.mrb[0].mxu0 %v1582
      %v2607 = vpop.f32.mrb[0].mxu0
      %v2608 = vadd.f32 %v2511, %v2607
      %v2609 = vpop.f32.mrb[0].mxu0
      %v2610 = vpop.f32.mrb[0].mxu0
      %v2611 = vadd.f32 %v2514, %v2610
      %v2612 = vpop.f32.mrb[0].mxu0
      %2613 = vmatprep.mubr.bf16.mxu0 %v1585
      %2614 = vmatmul.mubr.bf16.gmra.mrb[0].mxu0 %v1584
      %v2615 = vpop.f32.mrb[0].mxu0
      %v2616 = vadd.f32 %v2519, %v2615
      %v2617 = vpop.f32.mrb[0].mxu0
      %v2618 = vpop.f32.mrb[0].mxu0
      %v2619 = vadd.f32 %v2522, %v2618
      %v2620 = vpop.f32.mrb[0].mxu0
      %2621 = vmatprep.mubr.bf16.mxu0 %v1587
      %2622 = vmatmul.mubr.bf16.gmra.mrb[0].mxu0 %v1586
      %v2623 = vpop.f32.mrb[0].mxu0
      %v2624 = vadd.f32 %v2527, %v2623
      %v2625 = vpop.f32.mrb[0].mxu0
      %v2626 = vpop.f32.mrb[0].mxu0
      %v2627 = vadd.f32 %v2530, %v2626
      %v2628 = vpop.f32.mrb[0].mxu0
      %2629 = vmatprep.mubr.bf16.mxu0 %v1589
      %2630 = vmatmul.mubr.bf16.gmra.mrb[0].mxu0 %v1588
      %v2631 = vpop.f32.mrb[0].mxu0
      %v2632 = vadd.f32 %v2535, %v2631
      %v2633 = vpop.f32.mrb[0].mxu0
      %v2634 = vpop.f32.mrb[0].mxu0
      %v2635 = vadd.f32 %v2538, %v2634
      %v2636 = vpop.f32.mrb[0].mxu0
      %2637 = vmatprep.mubr.bf16.mxu0 %v1591
      %2638 = vmatmul.mubr.bf16.gmra.mrb[0].mxu0 %v1590
      %v2639 = vpop.f32.mrb[0].mxu0
      %v2640 = vadd.f32 %v2543, %v2639
      %v2641 = vpop.f32.mrb[0].mxu0
      %v2642 = vpop.f32.mrb[0].mxu0
      %v2643 = vadd.f32 %v2546, %v2642
      %v2644 = vpop.f32.mrb[0].mxu0
      %2645 = vmatprep.mubr.bf16.mxu0 %v1593
      %2646 = vmatmul.mubr.bf16.gmra.mrb[0].mxu0 %v1592
      %v2647 = vpop.f32.mrb[0].mxu0
      %v2648 = vadd.f32 %v2551, %v2647
      %v2649 = vpop.f32.mrb[0].mxu0
      %v2650 = vpop.f32.mrb[0].mxu0
      %v2651 = vadd.f32 %v2554, %v2650
      %v2652 = vpop.f32.mrb[0].mxu0
      %2653 = vdwg.mxu0
      %2654 = vmatprep.subr.bf16.mxu0 0
      %2655 = vmatpush1.bf16.msra.mxu0 %v2283
      %2656 = vmatprep.subr.bf16.mxu0 0
      %2657 = vmatpush1.bf16.msra.mxu0 %v2284
      %2658 = vmatprep.subr.bf16.mxu0 0
      %2659 = vmatpush1.bf16.msra.mxu0 %v2285
      %2660 = vmatprep.subr.bf16.mxu0 0
      %2661 = vmatpush1.bf16.msra.mxu0 %v2286
      %2662 = vmatprep.subr.bf16.mxu0 0
      %2663 = vmatpush1.bf16.msra.mxu0 %v2287
      %2664 = vmatprep.subr.bf16.mxu0 0
      %2665 = vmatpush1.bf16.msra.mxu0 %v2288
      %2666 = vmatprep.subr.bf16.mxu0 0
      %2667 = vmatpush1.bf16.msra.mxu0 %v2289
      %2668 = vmatprep.subr.bf16.mxu0 0
      %2669 = vmatpush1.bf16.msra.mxu0 %v2290
      %2670 = vmatprep.subr.bf16.mxu0 0
      %2671 = vmatpush1.bf16.msra.mxu0 %v2291
      %2672 = vmatprep.subr.bf16.mxu0 0
      %2673 = vmatpush1.bf16.msra.mxu0 %v2292
      %2674 = vmatprep.subr.bf16.mxu0 0
      %2675 = vmatpush1.bf16.msra.mxu0 %v2293
      %2676 = vmatprep.subr.bf16.mxu0 0
      %2677 = vmatpush1.bf16.msra.mxu0 %v2294
      %2678 = vmatprep.subr.bf16.mxu0 0
      %2679 = vmatpush1.bf16.msra.mxu0 %v2295
      %2680 = vmatprep.subr.bf16.mxu0 0
      %2681 = vmatpush1.bf16.msra.mxu0 %v2296
      %2682 = vmatprep.subr.bf16.mxu0 0
      %2683 = vmatpush1.bf16.msra.mxu0 %v2297
      %2684 = vmatprep.subr.bf16.mxu0 0
      %2685 = vmatpush1.bf16.msra.mxu0 %v2298
      %2686 = vmatprep.mubr.bf16.mxu0 %v1835
      %2687 = vmatmul.mubr.bf16.gmra.mrb[0].mxu0 %v1834
      %v2688 = vpop.f32.mrb[0].mxu0
      %v2689 = vadd.f32 %v2592, %v2688
      %v2690 = vpop.f32.mrb[0].mxu0
      %v2691 = vpop.f32.mrb[0].mxu0
      %v2692 = vadd.f32 %v2595, %v2691
      %v2693 = vpop.f32.mrb[0].mxu0
      %2694 = vmatprep.mubr.bf16.mxu0 %v1837
      %2695 = vmatmul.mubr.bf16.gmra.mrb[0].mxu0 %v1836
      %v2696 = vpop.f32.mrb[0].mxu0
      %v2697 = vadd.f32 %v2600, %v2696
      %v2698 = vpop.f32.mrb[0].mxu0
      %v2699 = vpop.f32.mrb[0].mxu0
      %v2700 = vadd.f32 %v2603, %v2699
      %v2701 = vpop.f32.mrb[0].mxu0
      %2702 = vmatprep.mubr.bf16.mxu0 %v1839
      %2703 = vmatmul.mubr.bf16.gmra.mrb[0].mxu0 %v1838
      %v2704 = vpop.f32.mrb[0].mxu0
      %v2705 = vadd.f32 %v2608, %v2704
      %v2706 = vpop.f32.mrb[0].mxu0
      %v2707 = vpop.f32.mrb[0].mxu0
      %v2708 = vadd.f32 %v2611, %v2707
      %v2709 = vpop.f32.mrb[0].mxu0
      %2710 = vmatprep.mubr.bf16.mxu0 %v1841
      %2711 = vmatmul.mubr.bf16.gmra.mrb[0].mxu0 %v1840
      %v2712 = vpop.f32.mrb[0].mxu0
      %v2713 = vadd.f32 %v2616, %v2712
      %v2714 = vpop.f32.mrb[0].mxu0
      %v2715 = vpop.f32.mrb[0].mxu0
      %v2716 = vadd.f32 %v2619, %v2715
      %v2717 = vpop.f32.mrb[0].mxu0
      %2718 = vmatprep.mubr.bf16.mxu0 %v1843
      %2719 = vmatmul.mubr.bf16.gmra.mrb[0].mxu0 %v1842
      %v2720 = vpop.f32.mrb[0].mxu0
      %v2721 = vadd.f32 %v2624, %v2720
      %v2722 = vpop.f32.mrb[0].mxu0
      %v2723 = vpop.f32.mrb[0].mxu0
      %v2724 = vadd.f32 %v2627, %v2723
      %v2725 = vpop.f32.mrb[0].mxu0
      %2726 = vmatprep.mubr.bf16.mxu0 %v1845
      %2727 = vmatmul.mubr.bf16.gmra.mrb[0].mxu0 %v1844
      %v2728 = vpop.f32.mrb[0].mxu0
      %v2729 = vadd.f32 %v2632, %v2728
      %v2730 = vpop.f32.mrb[0].mxu0
      %v2731 = vpop.f32.mrb[0].mxu0
      %v2732 = vadd.f32 %v2635, %v2731
      %v2733 = vpop.f32.mrb[0].mxu0
      %2734 = vmatprep.mubr.bf16.mxu0 %v1847
      %2735 = vmatmul.mubr.bf16.gmra.mrb[0].mxu0 %v1846
      %v2736 = vpop.f32.mrb[0].mxu0
      %v2737 = vadd.f32 %v2640, %v2736
      %v2738 = vpop.f32.mrb[0].mxu0
      %v2739 = vpop.f32.mrb[0].mxu0
      %v2740 = vadd.f32 %v2643, %v2739
      %v2741 = vpop.f32.mrb[0].mxu0
      %2742 = vmatprep.mubr.bf16.mxu0 %v1849
      %2743 = vmatmul.mubr.bf16.gmra.mrb[0].mxu0 %v1848
      %v2744 = vpop.f32.mrb[0].mxu0
      %v2745 = vadd.f32 %v2648, %v2744
      %v2746 = vpop.f32.mrb[0].mxu0
      %v2747 = vpop.f32.mrb[0].mxu0
      %v2748 = vadd.f32 %v2651, %v2747
      %v2749 = vpop.f32.mrb[0].mxu0
      %2750 = vdwg.mxu0
      %v2751 = vsel %vm349, %v2689, 0.0
      %2752 = vadd.xlane.f32.xlu0 %v2751
      %v2753 = vpop.xlane.xlu0 %2752
      %v2754 = vsel %vm349, %v2692, 0.0
      %2755 = vadd.xlane.f32.xlu0 %v2754
      %v2756 = vpop.xlane.xlu0 %2755
      %v2757 = vsel %vm349, %v2697, 0.0
      %2758 = vadd.xlane.f32.xlu0 %v2757
      %v2759 = vpop.xlane.xlu0 %2758
      %v2760 = vsel %vm349, %v2700, 0.0
      %2761 = vadd.xlane.f32.xlu0 %v2760
      %v2762 = vpop.xlane.xlu0 %2761
      %v2763 = vsel %vm349, %v2705, 0.0
      %2764 = vadd.xlane.f32.xlu0 %v2763
      %v2765 = vpop.xlane.xlu0 %2764
      %v2766 = vsel %vm349, %v2708, 0.0
      %2767 = vadd.xlane.f32.xlu0 %v2766
      %v2768 = vpop.xlane.xlu0 %2767
      %v2769 = vsel %vm349, %v2713, 0.0
      %2770 = vadd.xlane.f32.xlu0 %v2769
      %v2771 = vpop.xlane.xlu0 %2770
      %v2772 = vsel %vm349, %v2716, 0.0
      %2773 = vadd.xlane.f32.xlu0 %v2772
      %v2774 = vpop.xlane.xlu0 %2773
      %v2775 = vsel %vm349, %v2721, 0.0
      %2776 = vadd.xlane.f32.xlu0 %v2775
      %v2777 = vpop.xlane.xlu0 %2776
      %v2778 = vsel %vm349, %v2724, 0.0
      %2779 = vadd.xlane.f32.xlu0 %v2778
      %v2780 = vpop.xlane.xlu0 %2779
      %v2781 = vsel %vm349, %v2729, 0.0
      %2782 = vadd.xlane.f32.xlu0 %v2781
      %v2783 = vpop.xlane.xlu0 %2782
      %v2784 = vsel %vm349, %v2732, 0.0
      %2785 = vadd.xlane.f32.xlu0 %v2784
      %v2786 = vpop.xlane.xlu0 %2785
      %v2787 = vsel %vm349, %v2737, 0.0
      %2788 = vadd.xlane.f32.xlu0 %v2787
      %v2789 = vpop.xlane.xlu0 %2788
      %v2790 = vsel %vm349, %v2740, 0.0
      %2791 = vadd.xlane.f32.xlu0 %v2790
      %v2792 = vpop.xlane.xlu0 %2791
      %v2793 = vsel %vm349, %v2745, 0.0
      %2794 = vadd.xlane.f32.xlu0 %v2793
      %v2795 = vpop.xlane.xlu0 %2794
      %v2796 = vsel %vm349, %v2748, 0.0
      %2797 = vadd.xlane.f32.xlu0 %v2796
      %v2798 = vpop.xlane.xlu0 %2797
      %v2799 = vrcp.pop 32.0
      %v2800 = vmul.f32 %v2753, %v2799
      %v2801 = vmul.f32 %v2756, %v2799
      %v2802 = vmul.f32 %v2759, %v2799
      %v2803 = vmul.f32 %v2762, %v2799
      %v2804 = vmul.f32 %v2765, %v2799
      %v2805 = vmul.f32 %v2768, %v2799
      %v2806 = vmul.f32 %v2771, %v2799
      %v2807 = vmul.f32 %v2774, %v2799
      %v2808 = vmul.f32 %v2777, %v2799
      %v2809 = vmul.f32 %v2780, %v2799
      %v2810 = vmul.f32 %v2783, %v2799
      %v2811 = vmul.f32 %v2786, %v2799
      %v2812 = vmul.f32 %v2789, %v2799
      %v2813 = vmul.f32 %v2792, %v2799
      %v2814 = vmul.f32 %v2795, %v2799
      %v2815 = vmul.f32 %v2798, %v2799
      %v2816 = vmul.f32 %v2689, %v2689
      %v2817 = vmul.f32 %v2692, %v2692
      %v2818 = vmul.f32 %v2697, %v2697
      %v2819 = vmul.f32 %v2700, %v2700
      %v2820 = vmul.f32 %v2705, %v2705
      %v2821 = vmul.f32 %v2708, %v2708
      %v2822 = vmul.f32 %v2713, %v2713
      %v2823 = vmul.f32 %v2716, %v2716
      %v2824 = vmul.f32 %v2721, %v2721
      %v2825 = vmul.f32 %v2724, %v2724
      %v2826 = vmul.f32 %v2729, %v2729
      %v2827 = vmul.f32 %v2732, %v2732
      %v2828 = vmul.f32 %v2737, %v2737
      %v2829 = vmul.f32 %v2740, %v2740
      %v2830 = vmul.f32 %v2745, %v2745
      %v2831 = vmul.f32 %v2748, %v2748
      %v2832 = vsel %vm349, %v2816, 0.0
      %2833 = vadd.xlane.f32.xlu0 %v2832
      %v2834 = vpop.xlane.xlu0 %2833
      %v2835 = vsel %vm349, %v2817, 0.0
      %2836 = vadd.xlane.f32.xlu0 %v2835
      %v2837 = vpop.xlane.xlu0 %2836
      %v2838 = vsel %vm349, %v2818, 0.0
      %2839 = vadd.xlane.f32.xlu0 %v2838
      %v2840 = vpop.xlane.xlu0 %2839
      %v2841 = vsel %vm349, %v2819, 0.0
      %2842 = vadd.xlane.f32.xlu0 %v2841
      %v2843 = vpop.xlane.xlu0 %2842
      %v2844 = vsel %vm349, %v2820, 0.0
      %2845 = vadd.xlane.f32.xlu0 %v2844
      %v2846 = vpop.xlane.xlu0 %2845
      %v2847 = vsel %vm349, %v2821, 0.0
      %2848 = vadd.xlane.f32.xlu0 %v2847
      %v2849 = vpop.xlane.xlu0 %2848
      %v2850 = vsel %vm349, %v2822, 0.0
      %2851 = vadd.xlane.f32.xlu0 %v2850
      %v2852 = vpop.xlane.xlu0 %2851
      %v2853 = vsel %vm349, %v2823, 0.0
      %2854 = vadd.xlane.f32.xlu0 %v2853
      %v2855 = vpop.xlane.xlu0 %2854
      %v2856 = vsel %vm349, %v2824, 0.0
      %2857 = vadd.xlane.f32.xlu0 %v2856
      %v2858 = vpop.xlane.xlu0 %2857
      %v2859 = vsel %vm349, %v2825, 0.0
      %2860 = vadd.xlane.f32.xlu0 %v2859
      %v2861 = vpop.xlane.xlu0 %2860
      %v2862 = vsel %vm349, %v2826, 0.0
      %2863 = vadd.xlane.f32.xlu0 %v2862
      %v2864 = vpop.xlane.xlu0 %2863
      %v2865 = vsel %vm349, %v2827, 0.0
      %2866 = vadd.xlane.f32.xlu0 %v2865
      %v2867 = vpop.xlane.xlu0 %2866
      %v2868 = vsel %vm349, %v2828, 0.0
      %2869 = vadd.xlane.f32.xlu0 %v2868
      %v2870 = vpop.xlane.xlu0 %2869
      %v2871 = vsel %vm349, %v2829, 0.0
      %2872 = vadd.xlane.f32.xlu0 %v2871
      %v2873 = vpop.xlane.xlu0 %2872
      %v2874 = vsel %vm349, %v2830, 0.0
      %2875 = vadd.xlane.f32.xlu0 %v2874
      %v2876 = vpop.xlane.xlu0 %2875
      %v2877 = vsel %vm349, %v2831, 0.0
      %2878 = vadd.xlane.f32.xlu0 %v2877
      %v2879 = vpop.xlane.xlu0 %2878
      %v2880 = vmul.f32 %v2834, %v2799
      %v2881 = vmul.f32 %v2837, %v2799
      %v2882 = vmul.f32 %v2840, %v2799
      %v2883 = vmul.f32 %v2843, %v2799
      %v2884 = vmul.f32 %v2846, %v2799
      %v2885 = vmul.f32 %v2849, %v2799
      %v2886 = vmul.f32 %v2852, %v2799
      %v2887 = vmul.f32 %v2855, %v2799
      %v2888 = vmul.f32 %v2858, %v2799
      %v2889 = vmul.f32 %v2861, %v2799
      %v2890 = vmul.f32 %v2864, %v2799
      %v2891 = vmul.f32 %v2867, %v2799
      %v2892 = vmul.f32 %v2870, %v2799
      %v2893 = vmul.f32 %v2873, %v2799
      %v2894 = vmul.f32 %v2876, %v2799
      %v2895 = vmul.f32 %v2879, %v2799
      %v2896 = vmul.f32 %v2800, %v2800
      %v2897 = vmul.f32 %v2801, %v2801
      %v2898 = vmul.f32 %v2802, %v2802
      %v2899 = vmul.f32 %v2803, %v2803
      %v2900 = vmul.f32 %v2804, %v2804
      %v2901 = vmul.f32 %v2805, %v2805
      %v2902 = vmul.f32 %v2806, %v2806
      %v2903 = vmul.f32 %v2807, %v2807
      %v2904 = vmul.f32 %v2808, %v2808
      %v2905 = vmul.f32 %v2809, %v2809
      %v2906 = vmul.f32 %v2810, %v2810
      %v2907 = vmul.f32 %v2811, %v2811
      %v2908 = vmul.f32 %v2812, %v2812
      %v2909 = vmul.f32 %v2813, %v2813
      %v2910 = vmul.f32 %v2814, %v2814
      %v2911 = vmul.f32 %v2815, %v2815
      %v2912 = vsub.f32 %v2880, %v2896
      %v2913 = vsub.f32 %v2881, %v2897
      %v2914 = vsub.f32 %v2882, %v2898
      %v2915 = vsub.f32 %v2883, %v2899
      %v2916 = vsub.f32 %v2884, %v2900
      %v2917 = vsub.f32 %v2885, %v2901
      %v2918 = vsub.f32 %v2886, %v2902
      %v2919 = vsub.f32 %v2887, %v2903
      %v2920 = vsub.f32 %v2888, %v2904
      %v2921 = vsub.f32 %v2889, %v2905
      %v2922 = vsub.f32 %v2890, %v2906
      %v2923 = vsub.f32 %v2891, %v2907
      %v2924 = vsub.f32 %v2892, %v2908
      %v2925 = vsub.f32 %v2893, %v2909
      %v2926 = vsub.f32 %v2894, %v2910
      %v2927 = vsub.f32 %v2895, %v2911
      %v2928 = vsub.f32 %v2689, %v2800
      %v2929 = vsub.f32 %v2692, %v2801
      %v2930 = vsub.f32 %v2697, %v2802
      %v2931 = vsub.f32 %v2700, %v2803
      %v2932 = vsub.f32 %v2705, %v2804
      %v2933 = vsub.f32 %v2708, %v2805
      %v2934 = vsub.f32 %v2713, %v2806
      %v2935 = vsub.f32 %v2716, %v2807
      %v2936 = vsub.f32 %v2721, %v2808
      %v2937 = vsub.f32 %v2724, %v2809
      %v2938 = vsub.f32 %v2729, %v2810
      %v2939 = vsub.f32 %v2732, %v2811
      %v2940 = vsub.f32 %v2737, %v2812
      %v2941 = vsub.f32 %v2740, %v2813
      %v2942 = vsub.f32 %v2745, %v2814
      %v2943 = vsub.f32 %v2748, %v2815
      %v2944 = vadd.f32 %v2912, 1e-05
      %v2945 = vadd.f32 %v2913, 1e-05
      %v2946 = vadd.f32 %v2914, 1e-05
      %v2947 = vadd.f32 %v2915, 1e-05
      %v2948 = vadd.f32 %v2916, 1e-05
      %v2949 = vadd.f32 %v2917, 1e-05
      %v2950 = vadd.f32 %v2918, 1e-05
      %v2951 = vadd.f32 %v2919, 1e-05
      %v2952 = vadd.f32 %v2920, 1e-05
      %v2953 = vadd.f32 %v2921, 1e-05
      %v2954 = vadd.f32 %v2922, 1e-05
      %v2955 = vadd.f32 %v2923, 1e-05
      %v2956 = vadd.f32 %v2924, 1e-05
      %v2957 = vadd.f32 %v2925, 1e-05
      %v2958 = vadd.f32 %v2926, 1e-05
      %v2959 = vadd.f32 %v2927, 1e-05
      %v2960 = vrsqrt.pop %v2944
      %v2961 = vrsqrt.pop %v2945
      %v2962 = vrsqrt.pop %v2946
      %v2963 = vrsqrt.pop %v2947
      %v2964 = vrsqrt.pop %v2948
      %v2965 = vrsqrt.pop %v2949
      %v2966 = vrsqrt.pop %v2950
      %v2967 = vrsqrt.pop %v2951
      %v2968 = vrsqrt.pop %v2952
      %v2969 = vrsqrt.pop %v2953
      %v2970 = vrsqrt.pop %v2954
      %v2971 = vrsqrt.pop %v2955
      %v2972 = vrsqrt.pop %v2956
      %v2973 = vrsqrt.pop %v2957
      %v2974 = vrsqrt.pop %v2958
      %v2975 = vrsqrt.pop %v2959
      %v2976 = vmul.f32 %v2928, %v2960
      %v2977 = vmul.f32 %v2929, %v2961
      %v2978 = vmul.f32 %v2930, %v2962
      %v2979 = vmul.f32 %v2931, %v2963
      %v2980 = vmul.f32 %v2932, %v2964
      %v2981 = vmul.f32 %v2933, %v2965
      %v2982 = vmul.f32 %v2934, %v2966
      %v2983 = vmul.f32 %v2935, %v2967
      %v2984 = vmul.f32 %v2936, %v2968
      %v2985 = vmul.f32 %v2937, %v2969
      %v2986 = vmul.f32 %v2938, %v2970
      %v2987 = vmul.f32 %v2939, %v2971
      %v2988 = vmul.f32 %v2940, %v2972
      %v2989 = vmul.f32 %v2941, %v2973
      %v2990 = vmul.f32 %v2942, %v2974
      %v2991 = vmul.f32 %v2943, %v2975
      %v2992 = vlaneseq
      %v2993 = vshrl.u32 %v2992, 7
      %v2994 = vsub.s32 0, %v2993
      %v2995 = vrot.slane %v1978, %v2994
      %v2996 = vmul.f32 %v2976, %v2995
      %v2997 = vmul.f32 %v2977, %v2995
      %v2998 = vmul.f32 %v2978, %v2995
      %v2999 = vmul.f32 %v2979, %v2995
      %v3000 = vmul.f32 %v2980, %v2995
      %v3001 = vmul.f32 %v2981, %v2995
      %v3002 = vmul.f32 %v2982, %v2995
      %v3003 = vmul.f32 %v2983, %v2995
      %v3004 = vmul.f32 %v2984, %v2995
      %v3005 = vmul.f32 %v2985, %v2995
      %v3006 = vmul.f32 %v2986, %v2995
      %v3007 = vmul.f32 %v2987, %v2995
      %v3008 = vmul.f32 %v2988, %v2995
      %v3009 = vmul.f32 %v2989, %v2995
      %v3010 = vmul.f32 %v2990, %v2995
      %v3011 = vmul.f32 %v2991, %v2995
      %v3012 = vlaneseq
      %v3013 = vshrl.u32 %v3012, 7
      %v3014 = vsub.s32 1, %v3013
      %v3015 = vrot.slane %v1978, %v3014
      %v3016 = vadd.f32 %v2996, %v3015
      %v3017 = vadd.f32 %v2997, %v3015
      %v3018 = vadd.f32 %v2998, %v3015
      %v3019 = vadd.f32 %v2999, %v3015
      %v3020 = vadd.f32 %v3000, %v3015
      %v3021 = vadd.f32 %v3001, %v3015
      %v3022 = vadd.f32 %v3002, %v3015
      %v3023 = vadd.f32 %v3003, %v3015
      %v3024 = vadd.f32 %v3004, %v3015
      %v3025 = vadd.f32 %v3005, %v3015
      %v3026 = vadd.f32 %v3006, %v3015
      %v3027 = vadd.f32 %v3007, %v3015
      %v3028 = vadd.f32 %v3008, %v3015
      %v3029 = vadd.f32 %v3009, %v3015
      %v3030 = vadd.f32 %v3010, %v3015
      %v3031 = vadd.f32 %v3011, %v3015
      %v3032 = vld [vmem:[%s3] sm:$0xf]
      %v3033 = vld [vmem:[%s3 + $0x4] sm:$0xf]
      %v3034 = vld [vmem:[%s3 + $0x8] sm:$0xf]
      %v3035 = vld [vmem:[%s3 + $0xc] sm:$0xf]
      %v3036 = vld [vmem:[%s3 + $0x10] sm:$0xf]
      %v3037 = vld [vmem:[%s3 + $0x14] sm:$0xf]
      %v3038 = vld [vmem:[%s3 + $0x18] sm:$0xf]
      %v3039 = vld [vmem:[%s3 + $0x1c] sm:$0xf]
      %v3040 = vpack.c.bf16 %v3017, %v3016
      %v3041 = vpack.c.bf16 %v3019, %v3018
      %v3042 = vpack.c.bf16 %v3021, %v3020
      %v3043 = vpack.c.bf16 %v3023, %v3022
      %v3044 = vpack.c.bf16 %v3025, %v3024
      %v3045 = vpack.c.bf16 %v3027, %v3026
      %v3046 = vpack.c.bf16 %v3029, %v3028
      %v3047 = vpack.c.bf16 %v3031, %v3030
      %v3048 = vlaneseq
      %v3049 = vshrl.u32 %v3048, 7
      %v3050 = vsub.s32 2, %v3049
      %v3051 = vrot.slane %v1978, %v3050
      %v3056 = vunpack.c.l.b16 %v3032
      %v3057 = vunpack.c.l.b16 %v3033
      %v3058 = vunpack.c.l.b16 %v3034
      %v3059 = vunpack.c.l.b16 %v3035
      %v3060 = vpack.c.b16 %v3057, %v3056
      %v3061 = vpack.c.b16 %v3059, %v3058
      %v3065 = vsel %vm349, %v3040, 0
      %v3068 = vsel %vm349, %v3041, 0
      %v3071 = vsel %vm349, %v3042, 0
      %v3074 = vsel %vm349, %v3043, 0
      %v3077 = vsel %vm349, %v3044, 0
      %v3080 = vsel %vm349, %v3045, 0
      %v3083 = vsel %vm349, %v3046, 0
      %v3086 = vsel %vm349, %v3047, 0
      %3088 = vmatprep.subr.bf16.mxu0 0
      %3089 = vmatpush1.bf16.msra.mxu0 %v3060
      %3090 = vmatprep.subr.bf16.mxu0 0
      %3091 = vmatpush1.bf16.msra.mxu0 %v3061
      %3092 = vmatprep.subr.bf16.mxu0 0
      %3093 = vmatpush1.bf16.msra.mxu0 0
      %3094 = vmatprep.subr.bf16.mxu0 0
      %3095 = vmatpush1.bf16.msra.mxu0 0
      %3096 = vmatprep.subr.bf16.mxu0 0
      %3097 = vmatpush1.bf16.msra.mxu0 0
      %3098 = vmatprep.subr.bf16.mxu0 0
      %3099 = vmatpush1.bf16.msra.mxu0 0
      %3100 = vmatprep.subr.bf16.mxu0 0
      %3101 = vmatpush1.bf16.msra.mxu0 0
      %3102 = vmatprep.subr.bf16.mxu0 0
      %3103 = vmatpush1.bf16.msra.mxu0 0
      %3104 = vmatprep.subr.bf16.mxu0 0
      %3105 = vmatpush1.bf16.msra.mxu0 0
      %3106 = vmatprep.subr.bf16.mxu0 0
      %3107 = vmatpush1.bf16.msra.mxu0 0
      %3108 = vmatprep.subr.bf16.mxu0 0
      %3109 = vmatpush1.bf16.msra.mxu0 0
      %3110 = vmatprep.subr.bf16.mxu0 0
      %3111 = vmatpush1.bf16.msra.mxu0 0
      %3112 = vmatprep.subr.bf16.mxu0 0
      %3113 = vmatpush1.bf16.msra.mxu0 0
      %3114 = vmatprep.subr.bf16.mxu0 0
      %3115 = vmatpush1.bf16.msra.mxu0 0
      %3116 = vmatprep.subr.bf16.mxu0 0
      %3117 = vmatpush1.bf16.msra.mxu0 0
      %3118 = vmatprep.subr.bf16.mxu0 0
      %3119 = vmatpush1.bf16.msra.mxu0 0
      %3120 = vmatprep.mubr.bf16.mxu0 0
      %3121 = vmatmul.mubr.bf16.gmra.mrb[0].mxu0 %v3065
      %v3122 = vpop.f32.mrb[0].mxu0
      %v3123 = vadd.f32 %v3051, %v3122
      %v3124 = vpop.f32.mrb[0].mxu0
      %v3125 = vpop.f32.mrb[0].mxu0
      %v3126 = vadd.f32 %v3051, %v3125
      %v3127 = vpop.f32.mrb[0].mxu0
      %3128 = vmatprep.mubr.bf16.mxu0 0
      %3129 = vmatmul.mubr.bf16.gmra.mrb[0].mxu0 %v3068
      %v3130 = vpop.f32.mrb[0].mxu0
      %v3131 = vadd.f32 %v3051, %v3130
      %v3132 = vpop.f32.mrb[0].mxu0
      %v3133 = vpop.f32.mrb[0].mxu0
      %v3134 = vadd.f32 %v3051, %v3133
      %v3135 = vpop.f32.mrb[0].mxu0
      %3136 = vmatprep.mubr.bf16.mxu0 0
      %3137 = vmatmul.mubr.bf16.gmra.mrb[0].mxu0 %v3071
      %v3138 = vpop.f32.mrb[0].mxu0
      %v3139 = vadd.f32 %v3051, %v3138
      %v3140 = vpop.f32.mrb[0].mxu0
      %v3141 = vpop.f32.mrb[0].mxu0
      %v3142 = vadd.f32 %v3051, %v3141
      %v3143 = vpop.f32.mrb[0].mxu0
      %3144 = vmatprep.mubr.bf16.mxu0 0
      %3145 = vmatmul.mubr.bf16.gmra.mrb[0].mxu0 %v3074
      %v3146 = vpop.f32.mrb[0].mxu0
      %v3147 = vadd.f32 %v3051, %v3146
      %v3148 = vpop.f32.mrb[0].mxu0
      %v3149 = vpop.f32.mrb[0].mxu0
      %v3150 = vadd.f32 %v3051, %v3149
      %v3151 = vpop.f32.mrb[0].mxu0
      %3152 = vmatprep.mubr.bf16.mxu0 0
      %3153 = vmatmul.mubr.bf16.gmra.mrb[0].mxu0 %v3077
      %v3154 = vpop.f32.mrb[0].mxu0
      %v3155 = vadd.f32 %v3051, %v3154
      %v3156 = vpop.f32.mrb[0].mxu0
      %v3157 = vpop.f32.mrb[0].mxu0
      %v3158 = vadd.f32 %v3051, %v3157
      %v3159 = vpop.f32.mrb[0].mxu0
      %3160 = vmatprep.mubr.bf16.mxu0 0
      %3161 = vmatmul.mubr.bf16.gmra.mrb[0].mxu0 %v3080
      %v3162 = vpop.f32.mrb[0].mxu0
      %v3163 = vadd.f32 %v3051, %v3162
      %v3164 = vpop.f32.mrb[0].mxu0
      %v3165 = vpop.f32.mrb[0].mxu0
      %v3166 = vadd.f32 %v3051, %v3165
      %v3167 = vpop.f32.mrb[0].mxu0
      %3168 = vmatprep.mubr.bf16.mxu0 0
      %3169 = vmatmul.mubr.bf16.gmra.mrb[0].mxu0 %v3083
      %v3170 = vpop.f32.mrb[0].mxu0
      %v3171 = vadd.f32 %v3051, %v3170
      %v3172 = vpop.f32.mrb[0].mxu0
      %v3173 = vpop.f32.mrb[0].mxu0
      %v3174 = vadd.f32 %v3051, %v3173
      %v3175 = vpop.f32.mrb[0].mxu0
      %3176 = vmatprep.mubr.bf16.mxu0 0
      %3177 = vmatmul.mubr.bf16.gmra.mrb[0].mxu0 %v3086
      %v3178 = vpop.f32.mrb[0].mxu0
      %v3179 = vadd.f32 %v3051, %v3178
      %v3180 = vpop.f32.mrb[0].mxu0
      %v3181 = vpop.f32.mrb[0].mxu0
      %v3182 = vadd.f32 %v3051, %v3181
      %v3183 = vpop.f32.mrb[0].mxu0
      %3184 = vdwg.mxu0
      %v3185 = vmax.f32 %v3123, 0.0
      %v3186 = vmax.f32 %v3126, 0.0
      %v3187 = vmax.f32 %v3131, 0.0
      %v3188 = vmax.f32 %v3134, 0.0
      %v3189 = vmax.f32 %v3139, 0.0
      %v3190 = vmax.f32 %v3142, 0.0
      %v3191 = vmax.f32 %v3147, 0.0
      %v3192 = vmax.f32 %v3150, 0.0
      %v3193 = vmax.f32 %v3155, 0.0
      %v3194 = vmax.f32 %v3158, 0.0
      %v3195 = vmax.f32 %v3163, 0.0
      %v3196 = vmax.f32 %v3166, 0.0
      %v3197 = vmax.f32 %v3171, 0.0
      %v3198 = vmax.f32 %v3174, 0.0
      %v3199 = vmax.f32 %v3179, 0.0
      %v3200 = vmax.f32 %v3182, 0.0
      %v3201 = vpack.c.bf16 %v3186, %v3185
      %v3202 = vpack.c.bf16 %v3188, %v3187
      %v3203 = vpack.c.bf16 %v3190, %v3189
      %v3204 = vpack.c.bf16 %v3192, %v3191
      %v3205 = vpack.c.bf16 %v3194, %v3193
      %v3206 = vpack.c.bf16 %v3196, %v3195
      %v3207 = vpack.c.bf16 %v3198, %v3197
      %v3208 = vpack.c.bf16 %v3200, %v3199
      %v3209 = vlaneseq
      %v3210 = vshrl.u32 %v3209, 7
      %v3211 = vsub.s32 3, %v3210
      %v3212 = vrot.slane %v1978, %v3211
      %v3217 = vunpack.c.l.b16 %v3036
      %v3218 = vunpack.c.l.b16 %v3037
      %v3219 = vunpack.c.l.b16 %v3038
      %v3220 = vunpack.c.l.b16 %v3039
      %v3221 = vpack.c.b16 %v3218, %v3217
      %v3222 = vpack.c.b16 %v3220, %v3219
      %v3226 = vsel %vm349, %v3201, 0
      %v3229 = vsel %vm349, %v3202, 0
      %v3232 = vsel %vm349, %v3203, 0
      %v3235 = vsel %vm349, %v3204, 0
      %v3238 = vsel %vm349, %v3205, 0
      %v3241 = vsel %vm349, %v3206, 0
      %v3244 = vsel %vm349, %v3207, 0
      %v3247 = vsel %vm349, %v3208, 0
      %3249 = vmatprep.subr.bf16.mxu0 0
      %3250 = vmatpush1.bf16.msra.mxu0 %v3221
      %3251 = vmatprep.subr.bf16.mxu0 0
      %3252 = vmatpush1.bf16.msra.mxu0 %v3222
      %3253 = vmatprep.subr.bf16.mxu0 0
      %3254 = vmatpush1.bf16.msra.mxu0 0
      %3255 = vmatprep.subr.bf16.mxu0 0
      %3256 = vmatpush1.bf16.msra.mxu0 0
      %3257 = vmatprep.subr.bf16.mxu0 0
      %3258 = vmatpush1.bf16.msra.mxu0 0
      %3259 = vmatprep.subr.bf16.mxu0 0
      %3260 = vmatpush1.bf16.msra.mxu0 0
      %3261 = vmatprep.subr.bf16.mxu0 0
      %3262 = vmatpush1.bf16.msra.mxu0 0
      %3263 = vmatprep.subr.bf16.mxu0 0
      %3264 = vmatpush1.bf16.msra.mxu0 0
      %3265 = vmatprep.subr.bf16.mxu0 0
      %3266 = vmatpush1.bf16.msra.mxu0 0
      %3267 = vmatprep.subr.bf16.mxu0 0
      %3268 = vmatpush1.bf16.msra.mxu0 0
      %3269 = vmatprep.subr.bf16.mxu0 0
      %3270 = vmatpush1.bf16.msra.mxu0 0
      %3271 = vmatprep.subr.bf16.mxu0 0
      %3272 = vmatpush1.bf16.msra.mxu0 0
      %3273 = vmatprep.subr.bf16.mxu0 0
      %3274 = vmatpush1.bf16.msra.mxu0 0
      %3275 = vmatprep.subr.bf16.mxu0 0
      %3276 = vmatpush1.bf16.msra.mxu0 0
      %3277 = vmatprep.subr.bf16.mxu0 0
      %3278 = vmatpush1.bf16.msra.mxu0 0
      %3279 = vmatprep.subr.bf16.mxu0 0
      %3280 = vmatpush1.bf16.msra.mxu0 0
      %3281 = vmatprep.mubr.bf16.mxu0 0
      %3282 = vmatmul.mubr.bf16.gmra.mrb[0].mxu0 %v3226
      %v3283 = vpop.f32.mrb[0].mxu0
      %v3284 = vadd.f32 %v3212, %v3283
      %v3285 = vpop.f32.mrb[0].mxu0
      %v3286 = vpop.f32.mrb[0].mxu0
      %v3287 = vadd.f32 %v3212, %v3286
      %v3288 = vpop.f32.mrb[0].mxu0
      %3289 = vmatprep.mubr.bf16.mxu0 0
      %3290 = vmatmul.mubr.bf16.gmra.mrb[0].mxu0 %v3229
      %v3291 = vpop.f32.mrb[0].mxu0
      %v3292 = vadd.f32 %v3212, %v3291
      %v3293 = vpop.f32.mrb[0].mxu0
      %v3294 = vpop.f32.mrb[0].mxu0
      %v3295 = vadd.f32 %v3212, %v3294
      %v3296 = vpop.f32.mrb[0].mxu0
      %3297 = vmatprep.mubr.bf16.mxu0 0
      %3298 = vmatmul.mubr.bf16.gmra.mrb[0].mxu0 %v3232
      %v3299 = vpop.f32.mrb[0].mxu0
      %v3300 = vadd.f32 %v3212, %v3299
      %v3301 = vpop.f32.mrb[0].mxu0
      %v3302 = vpop.f32.mrb[0].mxu0
      %v3303 = vadd.f32 %v3212, %v3302
      %v3304 = vpop.f32.mrb[0].mxu0
      %3305 = vmatprep.mubr.bf16.mxu0 0
      %3306 = vmatmul.mubr.bf16.gmra.mrb[0].mxu0 %v3235
      %v3307 = vpop.f32.mrb[0].mxu0
      %v3308 = vadd.f32 %v3212, %v3307
      %v3309 = vpop.f32.mrb[0].mxu0
      %v3310 = vpop.f32.mrb[0].mxu0
      %v3311 = vadd.f32 %v3212, %v3310
      %v3312 = vpop.f32.mrb[0].mxu0
      %3313 = vmatprep.mubr.bf16.mxu0 0
      %3314 = vmatmul.mubr.bf16.gmra.mrb[0].mxu0 %v3238
      %v3315 = vpop.f32.mrb[0].mxu0
      %v3316 = vadd.f32 %v3212, %v3315
      %v3317 = vpop.f32.mrb[0].mxu0
      %v3318 = vpop.f32.mrb[0].mxu0
      %v3319 = vadd.f32 %v3212, %v3318
      %v3320 = vpop.f32.mrb[0].mxu0
      %3321 = vmatprep.mubr.bf16.mxu0 0
      %3322 = vmatmul.mubr.bf16.gmra.mrb[0].mxu0 %v3241
      %v3323 = vpop.f32.mrb[0].mxu0
      %v3324 = vadd.f32 %v3212, %v3323
      %v3325 = vpop.f32.mrb[0].mxu0
      %v3326 = vpop.f32.mrb[0].mxu0
      %v3327 = vadd.f32 %v3212, %v3326
      %v3328 = vpop.f32.mrb[0].mxu0
      %3329 = vmatprep.mubr.bf16.mxu0 0
      %3330 = vmatmul.mubr.bf16.gmra.mrb[0].mxu0 %v3244
      %v3331 = vpop.f32.mrb[0].mxu0
      %v3332 = vadd.f32 %v3212, %v3331
      %v3333 = vpop.f32.mrb[0].mxu0
      %v3334 = vpop.f32.mrb[0].mxu0
      %v3335 = vadd.f32 %v3212, %v3334
      %v3336 = vpop.f32.mrb[0].mxu0
      %3337 = vmatprep.mubr.bf16.mxu0 0
      %3338 = vmatmul.mubr.bf16.gmra.mrb[0].mxu0 %v3247
      %v3339 = vpop.f32.mrb[0].mxu0
      %v3340 = vadd.f32 %v3212, %v3339
      %v3341 = vpop.f32.mrb[0].mxu0
      %v3342 = vpop.f32.mrb[0].mxu0
      %v3343 = vadd.f32 %v3212, %v3342
      %v3344 = vpop.f32.mrb[0].mxu0
      %3345 = vdwg.mxu0
      %v3346 = vadd.f32 %v3016, %v3284
      %v3347 = vadd.f32 %v3017, %v3287
      %v3348 = vadd.f32 %v3018, %v3292
      %v3349 = vadd.f32 %v3019, %v3295
      %v3350 = vadd.f32 %v3020, %v3300
      %v3351 = vadd.f32 %v3021, %v3303
      %v3352 = vadd.f32 %v3022, %v3308
      %v3353 = vadd.f32 %v3023, %v3311
      %v3354 = vadd.f32 %v3024, %v3316
      %v3355 = vadd.f32 %v3025, %v3319
      %v3356 = vadd.f32 %v3026, %v3324
      %v3357 = vadd.f32 %v3027, %v3327
      %v3358 = vadd.f32 %v3028, %v3332
      %v3359 = vadd.f32 %v3029, %v3335
      %v3360 = vadd.f32 %v3030, %v3340
      %v3361 = vadd.f32 %v3031, %v3343
      %v3362 = vsel %vm349, %v3346, 0.0
      %3363 = vadd.xlane.f32.xlu0 %v3362
      %v3364 = vpop.xlane.xlu0 %3363
      %v3365 = vsel %vm349, %v3347, 0.0
      %3366 = vadd.xlane.f32.xlu0 %v3365
      %v3367 = vpop.xlane.xlu0 %3366
      %v3368 = vsel %vm349, %v3348, 0.0
      %3369 = vadd.xlane.f32.xlu0 %v3368
      %v3370 = vpop.xlane.xlu0 %3369
      %v3371 = vsel %vm349, %v3349, 0.0
      %3372 = vadd.xlane.f32.xlu0 %v3371
      %v3373 = vpop.xlane.xlu0 %3372
      %v3374 = vsel %vm349, %v3350, 0.0
      %3375 = vadd.xlane.f32.xlu0 %v3374
      %v3376 = vpop.xlane.xlu0 %3375
      %v3377 = vsel %vm349, %v3351, 0.0
      %3378 = vadd.xlane.f32.xlu0 %v3377
      %v3379 = vpop.xlane.xlu0 %3378
      %v3380 = vsel %vm349, %v3352, 0.0
      %3381 = vadd.xlane.f32.xlu0 %v3380
      %v3382 = vpop.xlane.xlu0 %3381
      %v3383 = vsel %vm349, %v3353, 0.0
      %3384 = vadd.xlane.f32.xlu0 %v3383
      %v3385 = vpop.xlane.xlu0 %3384
      %v3386 = vsel %vm349, %v3354, 0.0
      %3387 = vadd.xlane.f32.xlu0 %v3386
      %v3388 = vpop.xlane.xlu0 %3387
      %v3389 = vsel %vm349, %v3355, 0.0
      %3390 = vadd.xlane.f32.xlu0 %v3389
      %v3391 = vpop.xlane.xlu0 %3390
      %v3392 = vsel %vm349, %v3356, 0.0
      %3393 = vadd.xlane.f32.xlu0 %v3392
      %v3394 = vpop.xlane.xlu0 %3393
      %v3395 = vsel %vm349, %v3357, 0.0
      %3396 = vadd.xlane.f32.xlu0 %v3395
      %v3397 = vpop.xlane.xlu0 %3396
      %v3398 = vsel %vm349, %v3358, 0.0
      %3399 = vadd.xlane.f32.xlu0 %v3398
      %v3400 = vpop.xlane.xlu0 %3399
      %v3401 = vsel %vm349, %v3359, 0.0
      %3402 = vadd.xlane.f32.xlu0 %v3401
      %v3403 = vpop.xlane.xlu0 %3402
      %v3404 = vsel %vm349, %v3360, 0.0
      %3405 = vadd.xlane.f32.xlu0 %v3404
      %v3406 = vpop.xlane.xlu0 %3405
      %v3407 = vsel %vm349, %v3361, 0.0
      %3408 = vadd.xlane.f32.xlu0 %v3407
      %v3409 = vpop.xlane.xlu0 %3408
      %v3410 = vmul.f32 %v3364, %v2799
      %v3411 = vmul.f32 %v3367, %v2799
      %v3412 = vmul.f32 %v3370, %v2799
      %v3413 = vmul.f32 %v3373, %v2799
      %v3414 = vmul.f32 %v3376, %v2799
      %v3415 = vmul.f32 %v3379, %v2799
      %v3416 = vmul.f32 %v3382, %v2799
      %v3417 = vmul.f32 %v3385, %v2799
      %v3418 = vmul.f32 %v3388, %v2799
      %v3419 = vmul.f32 %v3391, %v2799
      %v3420 = vmul.f32 %v3394, %v2799
      %v3421 = vmul.f32 %v3397, %v2799
      %v3422 = vmul.f32 %v3400, %v2799
      %v3423 = vmul.f32 %v3403, %v2799
      %v3424 = vmul.f32 %v3406, %v2799
      %v3425 = vmul.f32 %v3409, %v2799
      %v3426 = vmul.f32 %v3346, %v3346
      %v3427 = vmul.f32 %v3347, %v3347
      %v3428 = vmul.f32 %v3348, %v3348
      %v3429 = vmul.f32 %v3349, %v3349
      %v3430 = vmul.f32 %v3350, %v3350
      %v3431 = vmul.f32 %v3351, %v3351
      %v3432 = vmul.f32 %v3352, %v3352
      %v3433 = vmul.f32 %v3353, %v3353
      %v3434 = vmul.f32 %v3354, %v3354
      %v3435 = vmul.f32 %v3355, %v3355
      %v3436 = vmul.f32 %v3356, %v3356
      %v3437 = vmul.f32 %v3357, %v3357
      %v3438 = vmul.f32 %v3358, %v3358
      %v3439 = vmul.f32 %v3359, %v3359
      %v3440 = vmul.f32 %v3360, %v3360
      %v3441 = vmul.f32 %v3361, %v3361
      %v3442 = vsel %vm349, %v3426, 0.0
      %3443 = vadd.xlane.f32.xlu0 %v3442
      %v3444 = vpop.xlane.xlu0 %3443
      %v3445 = vsel %vm349, %v3427, 0.0
      %3446 = vadd.xlane.f32.xlu0 %v3445
      %v3447 = vpop.xlane.xlu0 %3446
      %v3448 = vsel %vm349, %v3428, 0.0
      %3449 = vadd.xlane.f32.xlu0 %v3448
      %v3450 = vpop.xlane.xlu0 %3449
      %v3451 = vsel %vm349, %v3429, 0.0
      %3452 = vadd.xlane.f32.xlu0 %v3451
      %v3453 = vpop.xlane.xlu0 %3452
      %v3454 = vsel %vm349, %v3430, 0.0
      %3455 = vadd.xlane.f32.xlu0 %v3454
      %v3456 = vpop.xlane.xlu0 %3455
      %v3457 = vsel %vm349, %v3431, 0.0
      %3458 = vadd.xlane.f32.xlu0 %v3457
      %v3459 = vpop.xlane.xlu0 %3458
      %v3460 = vsel %vm349, %v3432, 0.0
      %3461 = vadd.xlane.f32.xlu0 %v3460
      %v3462 = vpop.xlane.xlu0 %3461
      %v3463 = vsel %vm349, %v3433, 0.0
      %3464 = vadd.xlane.f32.xlu0 %v3463
      %v3465 = vpop.xlane.xlu0 %3464
      %v3466 = vsel %vm349, %v3434, 0.0
      %3467 = vadd.xlane.f32.xlu0 %v3466
      %v3468 = vpop.xlane.xlu0 %3467
      %v3469 = vsel %vm349, %v3435, 0.0
      %3470 = vadd.xlane.f32.xlu0 %v3469
      %v3471 = vpop.xlane.xlu0 %3470
      %v3472 = vsel %vm349, %v3436, 0.0
      %3473 = vadd.xlane.f32.xlu0 %v3472
      %v3474 = vpop.xlane.xlu0 %3473
      %v3475 = vsel %vm349, %v3437, 0.0
      %3476 = vadd.xlane.f32.xlu0 %v3475
      %v3477 = vpop.xlane.xlu0 %3476
      %v3478 = vsel %vm349, %v3438, 0.0
      %3479 = vadd.xlane.f32.xlu0 %v3478
      %v3480 = vpop.xlane.xlu0 %3479
      %v3481 = vsel %vm349, %v3439, 0.0
      %3482 = vadd.xlane.f32.xlu0 %v3481
      %v3483 = vpop.xlane.xlu0 %3482
      %v3484 = vsel %vm349, %v3440, 0.0
      %3485 = vadd.xlane.f32.xlu0 %v3484
      %v3486 = vpop.xlane.xlu0 %3485
      %v3487 = vsel %vm349, %v3441, 0.0
      %3488 = vadd.xlane.f32.xlu0 %v3487
      %v3489 = vpop.xlane.xlu0 %3488
      %v3490 = vmul.f32 %v3444, %v2799
      %v3491 = vmul.f32 %v3447, %v2799
      %v3492 = vmul.f32 %v3450, %v2799
      %v3493 = vmul.f32 %v3453, %v2799
      %v3494 = vmul.f32 %v3456, %v2799
      %v3495 = vmul.f32 %v3459, %v2799
      %v3496 = vmul.f32 %v3462, %v2799
      %v3497 = vmul.f32 %v3465, %v2799
      %v3498 = vmul.f32 %v3468, %v2799
      %v3499 = vmul.f32 %v3471, %v2799
      %v3500 = vmul.f32 %v3474, %v2799
      %v3501 = vmul.f32 %v3477, %v2799
      %v3502 = vmul.f32 %v3480, %v2799
      %v3503 = vmul.f32 %v3483, %v2799
      %v3504 = vmul.f32 %v3486, %v2799
      %v3505 = vmul.f32 %v3489, %v2799
      %v3506 = vmul.f32 %v3410, %v3410
      %v3507 = vmul.f32 %v3411, %v3411
      %v3508 = vmul.f32 %v3412, %v3412
      %v3509 = vmul.f32 %v3413, %v3413
      %v3510 = vmul.f32 %v3414, %v3414
      %v3511 = vmul.f32 %v3415, %v3415
      %v3512 = vmul.f32 %v3416, %v3416
      %v3513 = vmul.f32 %v3417, %v3417
      %v3514 = vmul.f32 %v3418, %v3418
      %v3515 = vmul.f32 %v3419, %v3419
      %v3516 = vmul.f32 %v3420, %v3420
      %v3517 = vmul.f32 %v3421, %v3421
      %v3518 = vmul.f32 %v3422, %v3422
      %v3519 = vmul.f32 %v3423, %v3423
      %v3520 = vmul.f32 %v3424, %v3424
      %v3521 = vmul.f32 %v3425, %v3425
      %v3522 = vsub.f32 %v3490, %v3506
      %v3523 = vsub.f32 %v3491, %v3507
      %v3524 = vsub.f32 %v3492, %v3508
      %v3525 = vsub.f32 %v3493, %v3509
      %v3526 = vsub.f32 %v3494, %v3510
      %v3527 = vsub.f32 %v3495, %v3511
      %v3528 = vsub.f32 %v3496, %v3512
      %v3529 = vsub.f32 %v3497, %v3513
      %v3530 = vsub.f32 %v3498, %v3514
      %v3531 = vsub.f32 %v3499, %v3515
      %v3532 = vsub.f32 %v3500, %v3516
      %v3533 = vsub.f32 %v3501, %v3517
      %v3534 = vsub.f32 %v3502, %v3518
      %v3535 = vsub.f32 %v3503, %v3519
      %v3536 = vsub.f32 %v3504, %v3520
      %v3537 = vsub.f32 %v3505, %v3521
      %v3538 = vsub.f32 %v3346, %v3410
      %v3539 = vsub.f32 %v3347, %v3411
      %v3540 = vsub.f32 %v3348, %v3412
      %v3541 = vsub.f32 %v3349, %v3413
      %v3542 = vsub.f32 %v3350, %v3414
      %v3543 = vsub.f32 %v3351, %v3415
      %v3544 = vsub.f32 %v3352, %v3416
      %v3545 = vsub.f32 %v3353, %v3417
      %v3546 = vsub.f32 %v3354, %v3418
      %v3547 = vsub.f32 %v3355, %v3419
      %v3548 = vsub.f32 %v3356, %v3420
      %v3549 = vsub.f32 %v3357, %v3421
      %v3550 = vsub.f32 %v3358, %v3422
      %v3551 = vsub.f32 %v3359, %v3423
      %v3552 = vsub.f32 %v3360, %v3424
      %v3553 = vsub.f32 %v3361, %v3425
      %v3554 = vadd.f32 %v3522, 1e-05
      %v3555 = vadd.f32 %v3523, 1e-05
      %v3556 = vadd.f32 %v3524, 1e-05
      %v3557 = vadd.f32 %v3525, 1e-05
      %v3558 = vadd.f32 %v3526, 1e-05
      %v3559 = vadd.f32 %v3527, 1e-05
      %v3560 = vadd.f32 %v3528, 1e-05
      %v3561 = vadd.f32 %v3529, 1e-05
      %v3562 = vadd.f32 %v3530, 1e-05
      %v3563 = vadd.f32 %v3531, 1e-05
      %v3564 = vadd.f32 %v3532, 1e-05
      %v3565 = vadd.f32 %v3533, 1e-05
      %v3566 = vadd.f32 %v3534, 1e-05
      %v3567 = vadd.f32 %v3535, 1e-05
      %v3568 = vadd.f32 %v3536, 1e-05
      %v3569 = vadd.f32 %v3537, 1e-05
      %v3570 = vrsqrt.pop %v3554
      %v3571 = vrsqrt.pop %v3555
      %v3572 = vrsqrt.pop %v3556
      %v3573 = vrsqrt.pop %v3557
      %v3574 = vrsqrt.pop %v3558
      %v3575 = vrsqrt.pop %v3559
      %v3576 = vrsqrt.pop %v3560
      %v3577 = vrsqrt.pop %v3561
      %v3578 = vrsqrt.pop %v3562
      %v3579 = vrsqrt.pop %v3563
      %v3580 = vrsqrt.pop %v3564
      %v3581 = vrsqrt.pop %v3565
      %v3582 = vrsqrt.pop %v3566
      %v3583 = vrsqrt.pop %v3567
      %v3584 = vrsqrt.pop %v3568
      %v3585 = vrsqrt.pop %v3569
      %v3586 = vmul.f32 %v3538, %v3570
      %v3587 = vmul.f32 %v3539, %v3571
      %v3588 = vmul.f32 %v3540, %v3572
      %v3589 = vmul.f32 %v3541, %v3573
      %v3590 = vmul.f32 %v3542, %v3574
      %v3591 = vmul.f32 %v3543, %v3575
      %v3592 = vmul.f32 %v3544, %v3576
      %v3593 = vmul.f32 %v3545, %v3577
      %v3594 = vmul.f32 %v3546, %v3578
      %v3595 = vmul.f32 %v3547, %v3579
      %v3596 = vmul.f32 %v3548, %v3580
      %v3597 = vmul.f32 %v3549, %v3581
      %v3598 = vmul.f32 %v3550, %v3582
      %v3599 = vmul.f32 %v3551, %v3583
      %v3600 = vmul.f32 %v3552, %v3584
      %v3601 = vmul.f32 %v3553, %v3585
      %v3602 = vlaneseq
      %v3603 = vshrl.u32 %v3602, 7
      %v3604 = vsub.s32 4, %v3603
      %v3605 = vrot.slane %v1978, %v3604
      %v3606 = vmul.f32 %v3586, %v3605
      %v3607 = vmul.f32 %v3587, %v3605
      %v3608 = vmul.f32 %v3588, %v3605
      %v3609 = vmul.f32 %v3589, %v3605
      %v3610 = vmul.f32 %v3590, %v3605
      %v3611 = vmul.f32 %v3591, %v3605
      %v3612 = vmul.f32 %v3592, %v3605
      %v3613 = vmul.f32 %v3593, %v3605
      %v3614 = vmul.f32 %v3594, %v3605
      %v3615 = vmul.f32 %v3595, %v3605
      %v3616 = vmul.f32 %v3596, %v3605
      %v3617 = vmul.f32 %v3597, %v3605
      %v3618 = vmul.f32 %v3598, %v3605
      %v3619 = vmul.f32 %v3599, %v3605
      %v3620 = vmul.f32 %v3600, %v3605
      %v3621 = vmul.f32 %v3601, %v3605
      %v3622 = vlaneseq
      %v3623 = vshrl.u32 %v3622, 7
      %v3624 = vsub.s32 5, %v3623
      %v3625 = vrot.slane %v1978, %v3624
      %v3626 = vadd.f32 %v3606, %v3625
      %v3627 = vadd.f32 %v3607, %v3625
      %v3628 = vadd.f32 %v3608, %v3625
      %v3629 = vadd.f32 %v3609, %v3625
      %v3630 = vadd.f32 %v3610, %v3625
      %v3631 = vadd.f32 %v3611, %v3625
      %v3632 = vadd.f32 %v3612, %v3625
      %v3633 = vadd.f32 %v3613, %v3625
      %v3634 = vadd.f32 %v3614, %v3625
      %v3635 = vadd.f32 %v3615, %v3625
      %v3636 = vadd.f32 %v3616, %v3625
      %v3637 = vadd.f32 %v3617, %v3625
      %v3638 = vadd.f32 %v3618, %v3625
      %v3639 = vadd.f32 %v3619, %v3625
      %v3640 = vadd.f32 %v3620, %v3625
      %v3641 = vadd.f32 %v3621, %v3625
      %3642 = vst.msk [vmem:[%s226] sm:$0xff] %vm349, %v3626
      %3643 = vst.msk [vmem:[%s226 + $0x8] sm:$0xff] %vm349, %v3627
      %3644 = vst.msk [vmem:[%s226 + $0x10] sm:$0xff] %vm349, %v3628
      %3645 = vst.msk [vmem:[%s226 + $0x18] sm:$0xff] %vm349, %v3629
      %3646 = vst.msk [vmem:[%s226 + $0x20] sm:$0xff] %vm349, %v3630
      %3647 = vst.msk [vmem:[%s226 + $0x28] sm:$0xff] %vm349, %v3631
      %3648 = vst.msk [vmem:[%s226 + $0x30] sm:$0xff] %vm349, %v3632
      %3649 = vst.msk [vmem:[%s226 + $0x38] sm:$0xff] %vm349, %v3633
      %3650 = vst.msk [vmem:[%s226 + $0x40] sm:$0xff] %vm349, %v3634
      %3651 = vst.msk [vmem:[%s226 + $0x48] sm:$0xff] %vm349, %v3635
      %3652 = vst.msk [vmem:[%s226 + $0x50] sm:$0xff] %vm349, %v3636
      %3653 = vst.msk [vmem:[%s226 + $0x58] sm:$0xff] %vm349, %v3637
      %3654 = vst.msk [vmem:[%s226 + $0x60] sm:$0xff] %vm349, %v3638
      %3655 = vst.msk [vmem:[%s226 + $0x68] sm:$0xff] %vm349, %v3639
      %3656 = vst.msk [vmem:[%s226 + $0x70] sm:$0xff] %vm349, %v3640
      %3657 = vst.msk [vmem:[%s226 + $0x78] sm:$0xff] %vm349, %v3641
      %s3658 = smul.u32 16, %s16
      %p3659 = scmp.lt.s32.totalorder %s3658, 63
      %s3660 = scalar_select %p3659, %s3658, 63
      %s3661 = smul.addr %s3660, 8
      %s3662 = scalar_lea.vmem %s5, %s3661
      // Predicated region
      $region41: #{encoder_block.1} parent=39 // pred_check
        %p3663 = pneg %p144
      $region42: #{encoder_block.1} parent=39 // pred_check_branch
        %3665 = sbr.rel (%p3663) target = $region44
      $region43: #{encoder_block.1} parent=39 // pred_region
        %s3666 = smul.u32 16, %s16
      $region44: #{encoder_block.1} parent=39 // pred_fallthru
        _
    $region40: #{encoder_block.1} parent=5 // pred_fallthru
      _
    %p3667 = scmp.le.s32.totalorder 2, %s11
    // Predicated region
    $region45: #{encoder_block.1} parent=5 // pred_check
      %p3668 = pneg %p3667
    $region46: #{encoder_block.1} parent=5 // pred_check_branch
      %3670 = sbr.rel (%p3668) target = $region48
    $region47: #{encoder_block.1} parent=5 // pred_region
      %s3671 = ssub.s32 %s11, 2
      // Predicated region
      $region49: #{encoder_block.1} parent=47 // pred_check
        %p3672 = pneg %p150
      $region50: #{encoder_block.1} parent=47 // pred_check_branch
        %3674 = sbr.rel (%p3672) target = $region52
      $region51: #{encoder_block.1} parent=47 // pred_region
        %s3675 = smul.u32 16, %s17
        %p3676 = scmp.lt.s32.totalorder %s3675, 63
        %s3677 = scalar_select %p3676, %s3675, 63
        %s3678 = smul.addr %s3677, 8
        %s3679 = scalar_lea.vmem %s5, %s3678
      $region52: #{encoder_block.1} parent=47 // pred_fallthru
        _
    $region48: #{encoder_block.1} parent=5 // pred_fallthru
      _
  $region6: #{encoder_block.1} parent=0 // loop_footer
    %s15 = sadd.s32 1, %s11
  $region7: #{encoder_block.1} parent=0 // loop_footer_branch
    %10 = sbr.rel target = $region3
  $region8: #{encoder_block.1} parent=0 // loop_exit
    _

</llo_original>
